<compile_context>
chip_gen: v7x
topology: tpu7x:2x2x1
jax: 0.10.0
libtpu: 0.0.40
codegen_flags: <defaults>
</compile_context>

<pallas_src>
import math
import functools

import jax
import jax.numpy as jnp
from jax.experimental import pallas as pl
from jax.experimental.pallas import tpu as pltpu


def _round_up(x, m):
    return (x + m - 1) // m * m


def _layernorm(x, gamma, beta, eps=1e-5):
    mu = jnp.mean(x, axis=-1, keepdims=True)
    var = jnp.mean(jnp.square(x - mu), axis=-1, keepdims=True)
    return (x - mu) * jax.lax.rsqrt(var + eps) * gamma + beta


def _clip_layer_kernel(x_ref, bias_ref,
                       ln1_g_ref, ln1_b_ref,
                       w_qkv_ref, b_qkv_ref,
                       w_out_ref, b_out_ref,
                       ln2_g_ref, ln2_b_ref,
                       w1_ref, b1_ref,
                       w2_ref, b2_ref,
                       o_ref,
                       *, n_head, batched_heads, gelu_dtype):
    S_pad, D = x_ref.shape                    # full (padded) sequence block
    TILE_Q = o_ref.shape[0]                   # query-row tile handled this step
    n_q_tiles = S_pad // TILE_Q               # static
    H = n_head
    dh = D // H
    wdt = w_qkv_ref.dtype                     # matmul operand dtype (bf16)
    f32 = jnp.float32

    ln1_g = ln1_g_ref[...]
    ln1_b = ln1_b_ref[...]

    x_full = x_ref[...]                       # (S_pad, D) f32
    h_full = _layernorm(x_full, ln1_g, ln1_b)

    if n_q_tiles == 1:
        # Single query tile: identical to the fully fused path (one QKV matmul).
        x_tile = x_full
        qkv = jnp.dot(h_full.astype(wdt), w_qkv_ref[...],
                      preferred_element_type=f32) + b_qkv_ref[...]       # (S,3D)
        q = qkv[:, 0 * D:1 * D]
        k = qkv[:, 1 * D:2 * D]
        v = qkv[:, 2 * D:3 * D]
    else:
        # Query-row tiling: Q only for this tile, K/V for the full sequence.
        q_start = pl.multiple_of(pl.program_id(1) * TILE_Q, TILE_Q)
        x_tile = x_ref[pl.ds(q_start, TILE_Q), :]                        # (Tq,D)
        h_tile = _layernorm(x_tile, ln1_g, ln1_b)
        q = jnp.dot(h_tile.astype(wdt), w_qkv_ref[:, :D],
                    preferred_element_type=f32) + b_qkv_ref[:, :D]       # (Tq,D)
        kv = jnp.dot(h_full.astype(wdt), w_qkv_ref[:, D:],
                     preferred_element_type=f32) + b_qkv_ref[:, D:]      # (S,2D)
        k = kv[:, :D]
        v = kv[:, D:]

    # Additive bias (causal + padded-key mask), precomputed on host, block is
    # the (TILE_Q, S_pad) slice for this query tile.
    bias = bias_ref[...]

    if batched_heads:
        qh = jnp.transpose(q.reshape(TILE_Q, H, dh), (1, 0, 2)).astype(wdt)
        kh = jnp.transpose(k.reshape(S_pad, H, dh), (1, 0, 2)).astype(wdt)
        vh = jnp.transpose(v.reshape(S_pad, H, dh), (1, 0, 2)).astype(wdt)
        s = jnp.einsum("hqd,hkd->hqk", qh, kh,
                       preferred_element_type=f32) + bias[None]          # (H,Tq,S)
        s = s - jnp.max(s, axis=-1, keepdims=True)
        p = jnp.exp(s)
        p = p * pl.reciprocal(jnp.sum(p, axis=-1, keepdims=True), approx=True)
        ctx = jnp.einsum("hqk,hkd->hqd", p.astype(wdt), vh,
                         preferred_element_type=f32)                     # (H,Tq,dh)
        attn = jnp.transpose(ctx, (1, 0, 2)).reshape(TILE_Q, D)
    else:
        # Conservative per-head fallback (bf16 MXU operands as well).
        heads = []
        for hd in range(H):
            qh = q[:, hd * dh:(hd + 1) * dh].astype(wdt)
            kh = k[:, hd * dh:(hd + 1) * dh].astype(wdt)
            vh = v[:, hd * dh:(hd + 1) * dh].astype(wdt)
            s = jnp.dot(qh, kh.T, preferred_element_type=f32) + bias
            s = s - jnp.max(s, axis=-1, keepdims=True)
            p = jnp.exp(s)
            p = p * pl.reciprocal(jnp.sum(p, axis=-1, keepdims=True), approx=True)
            heads.append(jnp.dot(p.astype(wdt), vh, preferred_element_type=f32))
        attn = jnp.concatenate(heads, axis=-1)                           # (Tq,D)

    attn = jnp.dot(attn.astype(wdt), w_out_ref[...],
                   preferred_element_type=f32) + b_out_ref[...]
    x1 = attn + x_tile                                                   # residual 1

    # ---- LayerNorm 2 + MLP with quick-GELU ----
    h = _layernorm(x1, ln2_g_ref[...], ln2_b_ref[...])
    h = jnp.dot(h.astype(wdt), w1_ref[...],
                preferred_element_type=f32) + b1_ref[...]                # (Tq,4D)
    hg = h.astype(gelu_dtype)
    hg = hg * jax.nn.sigmoid(jnp.asarray(1.702, gelu_dtype) * hg)
    h = jnp.dot(hg.astype(wdt), w2_ref[...],
                preferred_element_type=f32) + b2_ref[...]

    o_ref[...] = (h + x1).astype(o_ref.dtype)                            # residual 2


_PARAM_ORDER = ("ln1_g", "ln1_b", "w_qkv", "b_qkv", "w_out", "b_out",
                "ln2_g", "ln2_b", "w1", "b1", "w2", "b2")


def _prep_params(params, n_head, compute_dtype):
    """Fold 1/sqrt(d_head) into the Q projection and cast weights for the MXU."""
    D = params["w_qkv"].shape[0]
    dh = D // n_head
    scale = 1.0 / math.sqrt(dh)
    col_scale = jnp.concatenate([jnp.full((D,), scale, jnp.float32),
                                 jnp.ones((2 * D,), jnp.float32)])[None, :]
    p = dict(params)
    p["w_qkv"] = (params["w_qkv"] * col_scale).astype(compute_dtype)
    p["b_qkv"] = (params["b_qkv"] * col_scale).astype(jnp.float32)
    p["w_out"] = params["w_out"].astype(compute_dtype)
    p["w1"] = params["w1"].astype(compute_dtype)
    p["w2"] = params["w2"].astype(compute_dtype)
    return p


def _device_kind():
    try:
        return jax.devices()[0].device_kind.lower()
    except Exception:
        return ""


def _vmem_limit_bytes():
    """~85% of physical VMEM (v7x: ~54 MiB), capped at 100 MiB on 128-MiB parts."""
    cap = None
    try:
        cap = int(pltpu.get_tpu_info().vmem_capacity_bytes)
    except Exception:
        cap = None
    if not cap:
        kind = _device_kind()
        is_v7 = ("v7" in kind) or ("tpu7" in kind) or ("7x" in kind)
        cap = 64 * 1024 * 1024 if is_v7 else 128 * 1024 * 1024
    return min(int(cap * 0.85), 100 * 1024 * 1024)


def _gelu_dtype_for_device():
    """bf16 quick-GELU on v6e/v7x (bf16 VPU/EUP); f32 on v5e and older."""
    kind = _device_kind()
    if any(t in kind for t in ("v2", "v3", "v4", "v5")):
        return jnp.float32
    return jnp.bfloat16


def clip_layer(x, params, n_head, *, batched_heads=True,
               single_buffer_weights=True, compute_dtype=jnp.bfloat16,
               tile_q=128):
    B, S, D = x.shape
    assert D % n_head == 0

    # Host-side sequence padding: sublane-friendly query rows; once query-row
    # tiling kicks in (S > tile_q) pad to a 128-multiple so the key axis is
    # lane-dense and TILE_Q divides S_pad evenly.
    if S <= tile_q:
        TILE_Q = _round_up(S, 8)
        S_pad = TILE_Q
    else:
        TILE_Q = tile_q
        S_pad = _round_up(S, TILE_Q)
    n_q_tiles = S_pad // TILE_Q

    x_p = x if S_pad == S else jnp.pad(x, ((0, 0), (0, S_pad - S), (0, 0)))

    # Causal + padded-key additive bias, built ONCE on the host (hoisted out of
    # the per-grid-step body). Finite negative: no -inf NaN hazard.
    rows = jnp.arange(S_pad)[:, None]
    cols = jnp.arange(S_pad)[None, :]
    bias = jnp.where((cols > rows) | (cols >= S), -1e30, 0.0).astype(jnp.float32)

    prepped = _prep_params(params, n_head, compute_dtype)
    plist = [prepped[k] for k in _PARAM_ORDER]

    weight_kwargs = {}
    if single_buffer_weights:
        # Weights have a constant index_map: a single resident buffer avoids
        # pointless double-buffering (halves weight VMEM; matters on v7x).
        weight_kwargs["pipeline_mode"] = pl.Buffered(buffer_count=1)

    def weight_spec(arr):
        return pl.BlockSpec(arr.shape, lambda b, qi: (0, 0), **weight_kwargs)

    kernel = functools.partial(_clip_layer_kernel, n_head=n_head,
                               batched_heads=batched_heads,
                               gelu_dtype=_gelu_dtype_for_device())

    out = pl.pallas_call(
        kernel,
        out_shape=jax.ShapeDtypeStruct((B, S_pad, D), x.dtype),
        grid=(B, n_q_tiles),
        in_specs=[pl.BlockSpec((None, S_pad, D), lambda b, qi: (b, 0, 0)),
                  pl.BlockSpec((TILE_Q, S_pad), lambda b, qi: (qi, 0))]
                 + [weight_spec(a) for a in plist],
        out_specs=pl.BlockSpec((None, TILE_Q, D), lambda b, qi: (b, qi, 0)),
        compiler_params=pltpu.CompilerParams(
            dimension_semantics=("parallel", "parallel"),
            vmem_limit_bytes=_vmem_limit_bytes()),
    )(x_p, bias, *plist)

    return out if S_pad == S else out[:, :S, :]


def clip_layer_ref(x, p, n_head):
    """Pure-JAX f32 reference mirroring the PyTorch forward exactly."""
    def ln(x, g, b):
        mu = x.mean(-1, keepdims=True)
        var = ((x - mu) ** 2).mean(-1, keepdims=True)
        return (x - mu) / jnp.sqrt(var + 1e-5) * g + b

    B, S, D = x.shape
    dh = D // n_head
    res = x
    h = ln(x, p["ln1_g"], p["ln1_b"])
    qkv = h @ p["w_qkv"] + p["b_qkv"]
    q, k, v = jnp.split(qkv, 3, axis=-1)
    q = q.reshape(B, S, n_head, dh).transpose(0, 2, 1, 3)
    k = k.reshape(B, S, n_head, dh).transpose(0, 2, 1, 3)
    v = v.reshape(B, S, n_head, dh).transpose(0, 2, 1, 3)
    w = jnp.einsum("bhqd,bhkd->bhqk", q, k)
    mask = jnp.triu(jnp.ones((S, S), bool), 1)
    w = jnp.where(mask, -jnp.inf, w) / math.sqrt(dh)
    w = jax.nn.softmax(w, axis=-1)
    o = jnp.einsum("bhqk,bhkd->bhqd", w, v).transpose(0, 2, 1, 3).reshape(B, S, D)
    o = o @ p["w_out"] + p["b_out"]
    x = o + res
    res = x
    h = ln(x, p["ln2_g"], p["ln2_b"])
    h = h @ p["w1"] + p["b1"]
    h = h * jax.nn.sigmoid(1.702 * h)
    h = h @ p["w2"] + p["b2"]
    return h + res


def init_params(key, n_embd):
    D = n_embd
    ks = jax.random.split(key, 8)
    s = 0.02
    return {
        "ln1_g": jnp.ones((1, D), jnp.float32),
        "ln1_b": jnp.zeros((1, D), jnp.float32),
        "w_qkv": s * jax.random.normal(ks[0], (D, 3 * D), jnp.float32),
        "b_qkv": s * jax.random.normal(ks[1], (1, 3 * D), jnp.float32),
        "w_out": s * jax.random.normal(ks[2], (D, D), jnp.float32),
        "b_out": s * jax.random.normal(ks[3], (1, D), jnp.float32),
        "ln2_g": jnp.ones((1, D), jnp.float32),
        "ln2_b": jnp.zeros((1, D), jnp.float32),
        "w1": s * jax.random.normal(ks[4], (D, 4 * D), jnp.float32),
        "b1": s * jax.random.normal(ks[5], (1, 4 * D), jnp.float32),
        "w2": s * jax.random.normal(ks[6], (4 * D, D), jnp.float32),
        "b2": s * jax.random.normal(ks[7], (1, D), jnp.float32),
    }


if __name__ == "__main__":
    def run_layer(x, params, n_head):
        try:
            return jax.block_until_ready(
                clip_layer(x, params, n_head,
                           batched_heads=True, single_buffer_weights=True))
        except Exception:
            # Graceful fallback for jax/Mosaic versions without support for the
            # in-kernel head reshape/transpose or pipeline_mode=Buffered(1).
            return jax.block_until_ready(
                clip_layer(x, params, n_head,
                           batched_heads=False, single_buffer_weights=False))

    key = jax.random.PRNGKey(0)
    kx, kp, kx2 = jax.random.split(key, 3)

    # Case 1: small toy shapes (single query tile, no padding).
    B, S, n_embd, n_head = 2, 8, 32, 4
    x = jax.random.normal(kx, (B, S, n_embd), jnp.float32)
    params = init_params(kp, n_embd)
    out = run_layer(x, params, n_head)
    ref = clip_layer_ref(x, params, n_head)
    assert out.shape == (B, S, n_embd)
    # Loose tolerance: bf16 matmul operands (f32 accumulation), approximate
    # softmax reciprocal, bf16 quick-GELU; reference is pure f32.
    assert jnp.allclose(out, ref, atol=2e-2, rtol=2e-2), "mismatch (case 1)"

    # Case 2: exercises host-side S padding + multi-tile query-row grid axis.
    B2, S2 = 1, 200
    x2 = jax.random.normal(kx2, (B2, S2, n_embd), jnp.float32)
    out2 = run_layer(x2, params, n_head)
    ref2 = clip_layer_ref(x2, params, n_head)
    assert out2.shape == (B2, S2, n_embd)
    assert jnp.allclose(out2, ref2, atol=2e-2, rtol=2e-2), "mismatch (case 2)"

    print("KERNEL_OK")
</pallas_src>

<mosaic_0001>
module attributes {stable_mosaic.version = 11 : i64} {
  func.func @_clip_layer_kernel(%arg0: i32, %arg1: i32, %arg2: memref<1x8x32xf32, #tpu.memory_space<vmem>>, %arg3: memref<8x8xf32, #tpu.memory_space<vmem>>, %arg4: memref<1x32xf32, #tpu.memory_space<vmem>>, %arg5: memref<1x32xf32, #tpu.memory_space<vmem>>, %arg6: memref<32x96xbf16, #tpu.memory_space<vmem>>, %arg7: memref<1x96xf32, #tpu.memory_space<vmem>>, %arg8: memref<32x32xbf16, #tpu.memory_space<vmem>>, %arg9: memref<1x32xf32, #tpu.memory_space<vmem>>, %arg10: memref<1x32xf32, #tpu.memory_space<vmem>>, %arg11: memref<1x32xf32, #tpu.memory_space<vmem>>, %arg12: memref<32x128xbf16, #tpu.memory_space<vmem>>, %arg13: memref<1x128xf32, #tpu.memory_space<vmem>>, %arg14: memref<128x32xbf16, #tpu.memory_space<vmem>>, %arg15: memref<1x32xf32, #tpu.memory_space<vmem>>, %arg16: memref<1x8x32xf32, #tpu.memory_space<vmem>>) attributes {dimension_semantics = [#tpu.dimension_semantics<parallel>, #tpu.dimension_semantics<parallel>], iteration_bounds = array<i64: 2, 1>, scalar_prefetch = 0 : i64, scratch_operands = 0 : i64, tpu.core_type = #tpu.core_type<tc>, window_params = [{transform_indices = @transform_0, window_bounds = array<i64: 1, 8, 32>}, {transform_indices = @transform_1, window_bounds = array<i64: 8, 8>}, {pipeline_mode = #tpu.pipeline_mode<synchronous>, transform_indices = @transform_2, window_bounds = array<i64: 1, 32>}, {pipeline_mode = #tpu.pipeline_mode<synchronous>, transform_indices = @transform_3, window_bounds = array<i64: 1, 32>}, {pipeline_mode = #tpu.pipeline_mode<synchronous>, transform_indices = @transform_4, window_bounds = array<i64: 32, 96>}, {pipeline_mode = #tpu.pipeline_mode<synchronous>, transform_indices = @transform_5, window_bounds = array<i64: 1, 96>}, {pipeline_mode = #tpu.pipeline_mode<synchronous>, transform_indices = @transform_6, window_bounds = array<i64: 32, 32>}, {pipeline_mode = #tpu.pipeline_mode<synchronous>, transform_indices = @transform_7, window_bounds = array<i64: 1, 32>}, {pipeline_mode = #tpu.pipeline_mode<synchronous>, transform_indices = @transform_8, window_bounds = array<i64: 1, 32>}, {pipeline_mode = #tpu.pipeline_mode<synchronous>, transform_indices = @transform_9, window_bounds = array<i64: 1, 32>}, {pipeline_mode = #tpu.pipeline_mode<synchronous>, transform_indices = @transform_10, window_bounds = array<i64: 32, 128>}, {pipeline_mode = #tpu.pipeline_mode<synchronous>, transform_indices = @transform_11, window_bounds = array<i64: 1, 128>}, {pipeline_mode = #tpu.pipeline_mode<synchronous>, transform_indices = @transform_12, window_bounds = array<i64: 128, 32>}, {pipeline_mode = #tpu.pipeline_mode<synchronous>, transform_indices = @transform_13, window_bounds = array<i64: 1, 32>}, {transform_indices = @transform_14, window_bounds = array<i64: 1, 8, 32>}]} {
    %c0 = arith.constant 0 : index
    %c0_0 = arith.constant 0 : index
    %0 = vector.load %arg4[%c0, %c0_0] : memref<1x32xf32, #tpu.memory_space<vmem>>, vector<1x32xf32>
    %c0_1 = arith.constant 0 : index
    %c0_2 = arith.constant 0 : index
    %1 = vector.load %arg5[%c0_1, %c0_2] : memref<1x32xf32, #tpu.memory_space<vmem>>, vector<1x32xf32>
    %c0_3 = arith.constant 0 : index
    %c0_4 = arith.constant 0 : index
    %c0_5 = arith.constant 0 : index
    %2 = vector.load %arg2[%c0_3, %c0_4, %c0_5] : memref<1x8x32xf32, #tpu.memory_space<vmem>>, vector<1x8x32xf32>
    %3 = vector.shape_cast %2 : vector<1x8x32xf32> to vector<8x32xf32>
    %cst = arith.constant dense<0.000000e+00> : vector<8xf32>
    %4 = vector.multi_reduction <add>, %3, %cst [1] : vector<8x32xf32> to vector<8xf32>
    %5 = vector.shape_cast %4 : vector<8xf32> to vector<8x1xf32>
    %cst_6 = arith.constant 3.200000e+01 : f32
    %6 = vector.broadcast %cst_6 : f32 to vector<8x1xf32>
    %7 = arith.divf %5, %6 : vector<8x1xf32>
    %8 = vector.broadcast %7 : vector<8x1xf32> to vector<8x32xf32>
    %9 = arith.subf %3, %8 : vector<8x32xf32>
    %10 = arith.mulf %9, %9 : vector<8x32xf32>
    %cst_7 = arith.constant dense<0.000000e+00> : vector<8xf32>
    %11 = vector.multi_reduction <add>, %10, %cst_7 [1] : vector<8x32xf32> to vector<8xf32>
    %12 = vector.shape_cast %11 : vector<8xf32> to vector<8x1xf32>
    %cst_8 = arith.constant 3.200000e+01 : f32
    %13 = vector.broadcast %cst_8 : f32 to vector<8x1xf32>
    %14 = arith.divf %12, %13 : vector<8x1xf32>
    %15 = vector.broadcast %7 : vector<8x1xf32> to vector<8x32xf32>
    %16 = arith.subf %3, %15 : vector<8x32xf32>
    %cst_9 = arith.constant 9.99999974E-6 : f32
    %17 = vector.broadcast %cst_9 : f32 to vector<8x1xf32>
    %18 = arith.addf %14, %17 : vector<8x1xf32>
    %19 = math.rsqrt %18 : vector<8x1xf32>
    %20 = vector.broadcast %19 : vector<8x1xf32> to vector<8x32xf32>
    %21 = arith.mulf %16, %20 : vector<8x32xf32>
    %22 = vector.broadcast %0 : vector<1x32xf32> to vector<8x32xf32>
    %23 = arith.mulf %21, %22 : vector<8x32xf32>
    %24 = vector.broadcast %1 : vector<1x32xf32> to vector<8x32xf32>
    %25 = arith.addf %23, %24 : vector<8x32xf32>
    %26 = arith.truncf %25 : vector<8x32xf32> to vector<8x32xbf16>
    %c0_10 = arith.constant 0 : index
    %c0_11 = arith.constant 0 : index
    %27 = vector.load %arg6[%c0_10, %c0_11] : memref<32x96xbf16, #tpu.memory_space<vmem>>, vector<32x96xbf16>
    %cst_12 = arith.constant dense<0.000000e+00> : vector<8x96xf32>
    %28 = tpu.matmul %26, %27, %cst_12 {dimension_numbers = #tpu.dot_dimension_numbers<[1], [0], [0], [1], [0, 0, 1, 1], [], []>} : vector<8x32xbf16>, vector<32x96xbf16>, vector<8x96xf32> -> vector<8x96xf32>
    %c0_13 = arith.constant 0 : index
    %c0_14 = arith.constant 0 : index
    %29 = vector.load %arg7[%c0_13, %c0_14] : memref<1x96xf32, #tpu.memory_space<vmem>>, vector<1x96xf32>
    %30 = vector.broadcast %29 : vector<1x96xf32> to vector<8x96xf32>
    %31 = arith.addf %28, %30 : vector<8x96xf32>
    %32 = vector.extract_strided_slice %31 {offsets = [0, 0], sizes = [8, 32], strides = [1, 1]} : vector<8x96xf32> to vector<8x32xf32>
    %33 = vector.extract_strided_slice %31 {offsets = [0, 32], sizes = [8, 32], strides = [1, 1]} : vector<8x96xf32> to vector<8x32xf32>
    %34 = vector.extract_strided_slice %31 {offsets = [0, 64], sizes = [8, 32], strides = [1, 1]} : vector<8x96xf32> to vector<8x32xf32>
    %c0_15 = arith.constant 0 : index
    %c0_16 = arith.constant 0 : index
    %35 = vector.load %arg3[%c0_15, %c0_16] : memref<8x8xf32, #tpu.memory_space<vmem>>, vector<8x8xf32>
    %36 = vector.shape_cast %32 : vector<8x32xf32> to vector<8x4x8xf32>
    %37 = tpu.transpose %36, [1, 0, 2] : vector<8x4x8xf32> -> vector<4x8x8xf32>
    %38 = arith.truncf %37 : vector<4x8x8xf32> to vector<4x8x8xbf16>
    %39 = vector.shape_cast %33 : vector<8x32xf32> to vector<8x4x8xf32>
    %40 = tpu.transpose %39, [1, 0, 2] : vector<8x4x8xf32> -> vector<4x8x8xf32>
    %41 = arith.truncf %40 : vector<4x8x8xf32> to vector<4x8x8xbf16>
    %42 = vector.shape_cast %34 : vector<8x32xf32> to vector<8x4x8xf32>
    %43 = tpu.transpose %42, [1, 0, 2] : vector<8x4x8xf32> -> vector<4x8x8xf32>
    %44 = arith.truncf %43 : vector<4x8x8xf32> to vector<4x8x8xbf16>
    "tpu.trace_start"() <{level = 10 : i32, message = "hqd,hkd->hqk"}> : () -> ()
    %cst_17 = arith.constant dense<0.000000e+00> : vector<4x8x8xf32>
    %45 = tpu.matmul %38, %41, %cst_17 {dimension_numbers = #tpu.dot_dimension_numbers<[2], [2], [1], [1], [0, 0, 0, 1, 1, 1], [0], [0]>} : vector<4x8x8xbf16>, vector<4x8x8xbf16>, vector<4x8x8xf32> -> vector<4x8x8xf32>
    "tpu.trace_stop"() : () -> ()
    %46 = vector.shape_cast %35 : vector<8x8xf32> to vector<1x8x8xf32>
    %47 = vector.broadcast %46 : vector<1x8x8xf32> to vector<4x8x8xf32>
    %48 = arith.addf %45, %47 : vector<4x8x8xf32>
    %cst_18 = arith.constant dense<0xFF800000> : vector<4x8xf32>
    %49 = vector.multi_reduction <maximumf>, %48, %cst_18 [2] : vector<4x8x8xf32> to vector<4x8xf32>
    %50 = vector.shape_cast %49 : vector<4x8xf32> to vector<4x8x1xf32>
    %51 = vector.broadcast %50 : vector<4x8x1xf32> to vector<4x8x8xf32>
    %52 = arith.subf %48, %51 : vector<4x8x8xf32>
    %53 = math.exp %52 : vector<4x8x8xf32>
    %cst_19 = arith.constant dense<0.000000e+00> : vector<4x8xf32>
    %54 = vector.multi_reduction <add>, %53, %cst_19 [2] : vector<4x8x8xf32> to vector<4x8xf32>
    %55 = vector.shape_cast %54 : vector<4x8xf32> to vector<4x8x1xf32>
    %56 = tpu.reciprocal %55 {approx = true} : vector<4x8x1xf32> -> vector<4x8x1xf32>
    %57 = vector.broadcast %56 : vector<4x8x1xf32> to vector<4x8x8xf32>
    %58 = arith.mulf %53, %57 : vector<4x8x8xf32>
    %59 = arith.truncf %58 : vector<4x8x8xf32> to vector<4x8x8xbf16>
    "tpu.trace_start"() <{level = 10 : i32, message = "hqk,hkd->hqd"}> : () -> ()
    %cst_20 = arith.constant dense<0.000000e+00> : vector<4x8x8xf32>
    %60 = tpu.matmul %59, %44, %cst_20 {dimension_numbers = #tpu.dot_dimension_numbers<[2], [1], [1], [2], [0, 0, 0, 1, 1, 2], [0], [0]>} : vector<4x8x8xbf16>, vector<4x8x8xbf16>, vector<4x8x8xf32> -> vector<4x8x8xf32>
    "tpu.trace_stop"() : () -> ()
    %61 = tpu.transpose %60, [1, 0, 2] : vector<4x8x8xf32> -> vector<8x4x8xf32>
    %62 = vector.shape_cast %61 : vector<8x4x8xf32> to vector<8x32xf32>
    %63 = arith.truncf %62 : vector<8x32xf32> to vector<8x32xbf16>
    %c0_21 = arith.constant 0 : index
    %c0_22 = arith.constant 0 : index
    %64 = vector.load %arg8[%c0_21, %c0_22] : memref<32x32xbf16, #tpu.memory_space<vmem>>, vector<32x32xbf16>
    %cst_23 = arith.constant dense<0.000000e+00> : vector<8x32xf32>
    %65 = tpu.matmul %63, %64, %cst_23 {dimension_numbers = #tpu.dot_dimension_numbers<[1], [0], [0], [1], [0, 0, 1, 1], [], []>} : vector<8x32xbf16>, vector<32x32xbf16>, vector<8x32xf32> -> vector<8x32xf32>
    %c0_24 = arith.constant 0 : index
    %c0_25 = arith.constant 0 : index
    %66 = vector.load %arg9[%c0_24, %c0_25] : memref<1x32xf32, #tpu.memory_space<vmem>>, vector<1x32xf32>
    %67 = vector.broadcast %66 : vector<1x32xf32> to vector<8x32xf32>
    %68 = arith.addf %65, %67 : vector<8x32xf32>
    %69 = arith.addf %68, %3 : vector<8x32xf32>
    %c0_26 = arith.constant 0 : index
    %c0_27 = arith.constant 0 : index
    %70 = vector.load %arg10[%c0_26, %c0_27] : memref<1x32xf32, #tpu.memory_space<vmem>>, vector<1x32xf32>
    %c0_28 = arith.constant 0 : index
    %c0_29 = arith.constant 0 : index
    %71 = vector.load %arg11[%c0_28, %c0_29] : memref<1x32xf32, #tpu.memory_space<vmem>>, vector<1x32xf32>
    %cst_30 = arith.constant dense<0.000000e+00> : vector<8xf32>
    %72 = vector.multi_reduction <add>, %69, %cst_30 [1] : vector<8x32xf32> to vector<8xf32>
    %73 = vector.shape_cast %72 : vector<8xf32> to vector<8x1xf32>
    %cst_31 = arith.constant 3.200000e+01 : f32
    %74 = vector.broadcast %cst_31 : f32 to vector<8x1xf32>
    %75 = arith.divf %73, %74 : vector<8x1xf32>
    %76 = vector.broadcast %75 : vector<8x1xf32> to vector<8x32xf32>
    %77 = arith.subf %69, %76 : vector<8x32xf32>
    %78 = arith.mulf %77, %77 : vector<8x32xf32>
    %cst_32 = arith.constant dense<0.000000e+00> : vector<8xf32>
    %79 = vector.multi_reduction <add>, %78, %cst_32 [1] : vector<8x32xf32> to vector<8xf32>
    %80 = vector.shape_cast %79 : vector<8xf32> to vector<8x1xf32>
    %cst_33 = arith.constant 3.200000e+01 : f32
    %81 = vector.broadcast %cst_33 : f32 to vector<8x1xf32>
    %82 = arith.divf %80, %81 : vector<8x1xf32>
    %83 = vector.broadcast %75 : vector<8x1xf32> to vector<8x32xf32>
    %84 = arith.subf %69, %83 : vector<8x32xf32>
    %cst_34 = arith.constant 9.99999974E-6 : f32
    %85 = vector.broadcast %cst_34 : f32 to vector<8x1xf32>
    %86 = arith.addf %82, %85 : vector<8x1xf32>
    %87 = math.rsqrt %86 : vector<8x1xf32>
    %88 = vector.broadcast %87 : vector<8x1xf32> to vector<8x32xf32>
    %89 = arith.mulf %84, %88 : vector<8x32xf32>
    %90 = vector.broadcast %70 : vector<1x32xf32> to vector<8x32xf32>
    %91 = arith.mulf %89, %90 : vector<8x32xf32>
    %92 = vector.broadcast %71 : vector<1x32xf32> to vector<8x32xf32>
    %93 = arith.addf %91, %92 : vector<8x32xf32>
    %94 = arith.truncf %93 : vector<8x32xf32> to vector<8x32xbf16>
    %c0_35 = arith.constant 0 : index
    %c0_36 = arith.constant 0 : index
    %95 = vector.load %arg12[%c0_35, %c0_36] : memref<32x128xbf16, #tpu.memory_space<vmem>>, vector<32x128xbf16>
    %cst_37 = arith.constant dense<0.000000e+00> : vector<8x128xf32>
    %96 = tpu.matmul %94, %95, %cst_37 {dimension_numbers = #tpu.dot_dimension_numbers<[1], [0], [0], [1], [0, 0, 1, 1], [], []>} : vector<8x32xbf16>, vector<32x128xbf16>, vector<8x128xf32> -> vector<8x128xf32>
    %c0_38 = arith.constant 0 : index
    %c0_39 = arith.constant 0 : index
    %97 = vector.load %arg13[%c0_38, %c0_39] : memref<1x128xf32, #tpu.memory_space<vmem>>, vector<1x128xf32>
    %98 = vector.broadcast %97 : vector<1x128xf32> to vector<8x128xf32>
    %99 = arith.addf %96, %98 : vector<8x128xf32>
    %100 = arith.truncf %99 : vector<8x128xf32> to vector<8x128xbf16>
    %cst_40 = arith.constant 1.703130e+00 : bf16
    %101 = vector.broadcast %cst_40 : bf16 to vector<8x128xbf16>
    %102 = arith.mulf %101, %100 : vector<8x128xbf16>
    %103 = arith.negf %102 : vector<8x128xbf16>
    %104 = math.exp %103 : vector<8x128xbf16>
    %cst_41 = arith.constant 1.000000e+00 : bf16
    %105 = vector.broadcast %cst_41 : bf16 to vector<8x128xbf16>
    %106 = arith.addf %105, %104 : vector<8x128xbf16>
    %107 = arith.divf %105, %106 : vector<8x128xbf16>
    %108 = arith.mulf %100, %107 : vector<8x128xbf16>
    %c0_42 = arith.constant 0 : index
    %c0_43 = arith.constant 0 : index
    %109 = vector.load %arg14[%c0_42, %c0_43] : memref<128x32xbf16, #tpu.memory_space<vmem>>, vector<128x32xbf16>
    %cst_44 = arith.constant dense<0.000000e+00> : vector<8x32xf32>
    %110 = tpu.matmul %108, %109, %cst_44 {dimension_numbers = #tpu.dot_dimension_numbers<[1], [0], [0], [1], [0, 0, 1, 1], [], []>} : vector<8x128xbf16>, vector<128x32xbf16>, vector<8x32xf32> -> vector<8x32xf32>
    %c0_45 = arith.constant 0 : index
    %c0_46 = arith.constant 0 : index
    %111 = vector.load %arg15[%c0_45, %c0_46] : memref<1x32xf32, #tpu.memory_space<vmem>>, vector<1x32xf32>
    %112 = vector.broadcast %111 : vector<1x32xf32> to vector<8x32xf32>
    %113 = arith.addf %110, %112 : vector<8x32xf32>
    %114 = arith.addf %113, %69 : vector<8x32xf32>
    %c0_47 = arith.constant 0 : index
    %c0_48 = arith.constant 0 : index
    %c0_49 = arith.constant 0 : index
    %115 = vector.load %arg16[%c0_47, %c0_48, %c0_49] : memref<1x8x32xf32, #tpu.memory_space<vmem>>, vector<1x8x32xf32>
    %116 = vector.shape_cast %115 : vector<1x8x32xf32> to vector<8x32xf32>
    %117 = vector.shape_cast %114 : vector<8x32xf32> to vector<1x8x32xf32>
    tpu.vector_store %arg16[%c0_47, %c0_48, %c0_49], %117 {strides = array<i32>} : memref<1x8x32xf32, #tpu.memory_space<vmem>>, vector<1x8x32xf32>,
    return
  }
  func.func @transform_0(%arg0: i32, %arg1: i32) -> (i32, i32, i32) {
    %c0_i32 = arith.constant 0 : i32
    %c0_i32_0 = arith.constant 0 : i32
    %c0_i32_1 = arith.constant 0 : i32
    return %arg0, %c0_i32, %c0_i32_0 : i32, i32, i32
  }
  func.func @transform_1(%arg0: i32, %arg1: i32) -> (i32, i32) {
    %c0_i32 = arith.constant 0 : i32
    %c0_i32_0 = arith.constant 0 : i32
    return %arg1, %c0_i32 : i32, i32
  }
  func.func @transform_2(%arg0: i32, %arg1: i32) -> (i32, i32) {
    %c0_i32 = arith.constant 0 : i32
    %c0_i32_0 = arith.constant 0 : i32
    %c0_i32_1 = arith.constant 0 : i32
    return %c0_i32, %c0_i32_0 : i32, i32
  }
  func.func @transform_3(%arg0: i32, %arg1: i32) -> (i32, i32) {
    %c0_i32 = arith.constant 0 : i32
    %c0_i32_0 = arith.constant 0 : i32
    %c0_i32_1 = arith.constant 0 : i32
    return %c0_i32, %c0_i32_0 : i32, i32
  }
  func.func @transform_4(%arg0: i32, %arg1: i32) -> (i32, i32) {
    %c0_i32 = arith.constant 0 : i32
    %c0_i32_0 = arith.constant 0 : i32
    %c0_i32_1 = arith.constant 0 : i32
    return %c0_i32, %c0_i32_0 : i32, i32
  }
  func.func @transform_5(%arg0: i32, %arg1: i32) -> (i32, i32) {
    %c0_i32 = arith.constant 0 : i32
    %c0_i32_0 = arith.constant 0 : i32
    %c0_i32_1 = arith.constant 0 : i32
    return %c0_i32, %c0_i32_0 : i32, i32
  }
  func.func @transform_6(%arg0: i32, %arg1: i32) -> (i32, i32) {
    %c0_i32 = arith.constant 0 : i32
    %c0_i32_0 = arith.constant 0 : i32
    %c0_i32_1 = arith.constant 0 : i32
    return %c0_i32, %c0_i32_0 : i32, i32
  }
  func.func @transform_7(%arg0: i32, %arg1: i32) -> (i32, i32) {
    %c0_i32 = arith.constant 0 : i32
    %c0_i32_0 = arith.constant 0 : i32
    %c0_i32_1 = arith.constant 0 : i32
    return %c0_i32, %c0_i32_0 : i32, i32
  }
  func.func @transform_8(%arg0: i32, %arg1: i32) -> (i32, i32) {
    %c0_i32 = arith.constant 0 : i32
    %c0_i32_0 = arith.constant 0 : i32
    %c0_i32_1 = arith.constant 0 : i32
    return %c0_i32, %c0_i32_0 : i32, i32
  }
  func.func @transform_9(%arg0: i32, %arg1: i32) -> (i32, i32) {
    %c0_i32 = arith.constant 0 : i32
    %c0_i32_0 = arith.constant 0 : i32
    %c0_i32_1 = arith.constant 0 : i32
    return %c0_i32, %c0_i32_0 : i32, i32
  }
  func.func @transform_10(%arg0: i32, %arg1: i32) -> (i32, i32) {
    %c0_i32 = arith.constant 0 : i32
    %c0_i32_0 = arith.constant 0 : i32
    %c0_i32_1 = arith.constant 0 : i32
    return %c0_i32, %c0_i32_0 : i32, i32
  }
  func.func @transform_11(%arg0: i32, %arg1: i32) -> (i32, i32) {
    %c0_i32 = arith.constant 0 : i32
    %c0_i32_0 = arith.constant 0 : i32
    %c0_i32_1 = arith.constant 0 : i32
    return %c0_i32, %c0_i32_0 : i32, i32
  }
  func.func @transform_12(%arg0: i32, %arg1: i32) -> (i32, i32) {
    %c0_i32 = arith.constant 0 : i32
    %c0_i32_0 = arith.constant 0 : i32
    %c0_i32_1 = arith.constant 0 : i32
    return %c0_i32, %c0_i32_0 : i32, i32
  }
  func.func @transform_13(%arg0: i32, %arg1: i32) -> (i32, i32) {
    %c0_i32 = arith.constant 0 : i32
    %c0_i32_0 = arith.constant 0 : i32
    %c0_i32_1 = arith.constant 0 : i32
    return %c0_i32, %c0_i32_0 : i32, i32
  }
  func.func @transform_14(%arg0: i32, %arg1: i32) -> (i32, i32, i32) {
    %c0_i32 = arith.constant 0 : i32
    %c0_i32_0 = arith.constant 0 : i32
    return %arg0, %arg1, %c0_i32 : i32, i32, i32
  }
}

module attributes {stable_mosaic.version = 11 : i64} {
  func.func @_clip_layer_kernel(%arg0: i32, %arg1: i32, %arg2: memref<1x8x32xf32, #tpu.memory_space<vmem>>, %arg3: memref<8x8xf32, #tpu.memory_space<vmem>>, %arg4: memref<1x32xf32, #tpu.memory_space<vmem>>, %arg5: memref<1x32xf32, #tpu.memory_space<vmem>>, %arg6: memref<32x96xbf16, #tpu.memory_space<vmem>>, %arg7: memref<1x96xf32, #tpu.memory_space<vmem>>, %arg8: memref<32x32xbf16, #tpu.memory_space<vmem>>, %arg9: memref<1x32xf32, #tpu.memory_space<vmem>>, %arg10: memref<1x32xf32, #tpu.memory_space<vmem>>, %arg11: memref<1x32xf32, #tpu.memory_space<vmem>>, %arg12: memref<32x128xbf16, #tpu.memory_space<vmem>>, %arg13: memref<1x128xf32, #tpu.memory_space<vmem>>, %arg14: memref<128x32xbf16, #tpu.memory_space<vmem>>, %arg15: memref<1x32xf32, #tpu.memory_space<vmem>>, %arg16: memref<1x8x32xf32, #tpu.memory_space<vmem>>) attributes {dimension_semantics = [#tpu.dimension_semantics<parallel>, #tpu.dimension_semantics<parallel>], iteration_bounds = array<i64: 2, 1>, scalar_prefetch = 0 : i64, scratch_operands = 0 : i64, tpu.core_type = #tpu.core_type<tc>, window_params = [{transform_indices = @transform_0, window_bounds = array<i64: 1, 8, 32>}, {transform_indices = @transform_1, window_bounds = array<i64: 8, 8>}, {pipeline_mode = #tpu.pipeline_mode<synchronous>, transform_indices = @transform_2, window_bounds = array<i64: 1, 32>}, {pipeline_mode = #tpu.pipeline_mode<synchronous>, transform_indices = @transform_3, window_bounds = array<i64: 1, 32>}, {pipeline_mode = #tpu.pipeline_mode<synchronous>, transform_indices = @transform_4, window_bounds = array<i64: 32, 96>}, {pipeline_mode = #tpu.pipeline_mode<synchronous>, transform_indices = @transform_5, window_bounds = array<i64: 1, 96>}, {pipeline_mode = #tpu.pipeline_mode<synchronous>, transform_indices = @transform_6, window_bounds = array<i64: 32, 32>}, {pipeline_mode = #tpu.pipeline_mode<synchronous>, transform_indices = @transform_7, window_bounds = array<i64: 1, 32>}, {pipeline_mode = #tpu.pipeline_mode<synchronous>, transform_indices = @transform_8, window_bounds = array<i64: 1, 32>}, {pipeline_mode = #tpu.pipeline_mode<synchronous>, transform_indices = @transform_9, window_bounds = array<i64: 1, 32>}, {pipeline_mode = #tpu.pipeline_mode<synchronous>, transform_indices = @transform_10, window_bounds = array<i64: 32, 128>}, {pipeline_mode = #tpu.pipeline_mode<synchronous>, transform_indices = @transform_11, window_bounds = array<i64: 1, 128>}, {pipeline_mode = #tpu.pipeline_mode<synchronous>, transform_indices = @transform_12, window_bounds = array<i64: 128, 32>}, {pipeline_mode = #tpu.pipeline_mode<synchronous>, transform_indices = @transform_13, window_bounds = array<i64: 1, 32>}, {transform_indices = @transform_14, window_bounds = array<i64: 1, 8, 32>}]} {
    %c0 = arith.constant 0 : index
    %c0_0 = arith.constant 0 : index
    %0 = vector.load %arg4[%c0, %c0_0] : memref<1x32xf32, #tpu.memory_space<vmem>>, vector<1x32xf32>
    %c0_1 = arith.constant 0 : index
    %c0_2 = arith.constant 0 : index
    %1 = vector.load %arg5[%c0_1, %c0_2] : memref<1x32xf32, #tpu.memory_space<vmem>>, vector<1x32xf32>
    %c0_3 = arith.constant 0 : index
    %c0_4 = arith.constant 0 : index
    %c0_5 = arith.constant 0 : index
    %2 = vector.load %arg2[%c0_3, %c0_4, %c0_5] : memref<1x8x32xf32, #tpu.memory_space<vmem>>, vector<1x8x32xf32>
    %3 = vector.shape_cast %2 : vector<1x8x32xf32> to vector<8x32xf32>
    %cst = arith.constant dense<0.000000e+00> : vector<8xf32>
    %4 = vector.multi_reduction <add>, %3, %cst [1] : vector<8x32xf32> to vector<8xf32>
    %5 = vector.shape_cast %4 : vector<8xf32> to vector<8x1xf32>
    %cst_6 = arith.constant 3.200000e+01 : f32
    %6 = vector.broadcast %cst_6 : f32 to vector<8x1xf32>
    %7 = arith.divf %5, %6 : vector<8x1xf32>
    %8 = vector.broadcast %7 : vector<8x1xf32> to vector<8x32xf32>
    %9 = arith.subf %3, %8 : vector<8x32xf32>
    %10 = arith.mulf %9, %9 : vector<8x32xf32>
    %cst_7 = arith.constant dense<0.000000e+00> : vector<8xf32>
    %11 = vector.multi_reduction <add>, %10, %cst_7 [1] : vector<8x32xf32> to vector<8xf32>
    %12 = vector.shape_cast %11 : vector<8xf32> to vector<8x1xf32>
    %cst_8 = arith.constant 3.200000e+01 : f32
    %13 = vector.broadcast %cst_8 : f32 to vector<8x1xf32>
    %14 = arith.divf %12, %13 : vector<8x1xf32>
    %15 = vector.broadcast %7 : vector<8x1xf32> to vector<8x32xf32>
    %16 = arith.subf %3, %15 : vector<8x32xf32>
    %cst_9 = arith.constant 9.99999974E-6 : f32
    %17 = vector.broadcast %cst_9 : f32 to vector<8x1xf32>
    %18 = arith.addf %14, %17 : vector<8x1xf32>
    %19 = math.rsqrt %18 : vector<8x1xf32>
    %20 = vector.broadcast %19 : vector<8x1xf32> to vector<8x32xf32>
    %21 = arith.mulf %16, %20 : vector<8x32xf32>
    %22 = vector.broadcast %0 : vector<1x32xf32> to vector<8x32xf32>
    %23 = arith.mulf %21, %22 : vector<8x32xf32>
    %24 = vector.broadcast %1 : vector<1x32xf32> to vector<8x32xf32>
    %25 = arith.addf %23, %24 : vector<8x32xf32>
    %26 = arith.truncf %25 : vector<8x32xf32> to vector<8x32xbf16>
    %c0_10 = arith.constant 0 : index
    %c0_11 = arith.constant 0 : index
    %27 = vector.load %arg6[%c0_10, %c0_11] : memref<32x96xbf16, #tpu.memory_space<vmem>>, vector<32x96xbf16>
    %cst_12 = arith.constant dense<0.000000e+00> : vector<8x96xf32>
    %28 = tpu.matmul %26, %27, %cst_12 {dimension_numbers = #tpu.dot_dimension_numbers<[1], [0], [0], [1], [0, 0, 1, 1], [], []>} : vector<8x32xbf16>, vector<32x96xbf16>, vector<8x96xf32> -> vector<8x96xf32>
    %c0_13 = arith.constant 0 : index
    %c0_14 = arith.constant 0 : index
    %29 = vector.load %arg7[%c0_13, %c0_14] : memref<1x96xf32, #tpu.memory_space<vmem>>, vector<1x96xf32>
    %30 = vector.broadcast %29 : vector<1x96xf32> to vector<8x96xf32>
    %31 = arith.addf %28, %30 : vector<8x96xf32>
    %32 = vector.extract_strided_slice %31 {offsets = [0, 0], sizes = [8, 32], strides = [1, 1]} : vector<8x96xf32> to vector<8x32xf32>
    %33 = vector.extract_strided_slice %31 {offsets = [0, 32], sizes = [8, 32], strides = [1, 1]} : vector<8x96xf32> to vector<8x32xf32>
    %34 = vector.extract_strided_slice %31 {offsets = [0, 64], sizes = [8, 32], strides = [1, 1]} : vector<8x96xf32> to vector<8x32xf32>
    %c0_15 = arith.constant 0 : index
    %c0_16 = arith.constant 0 : index
    %35 = vector.load %arg3[%c0_15, %c0_16] : memref<8x8xf32, #tpu.memory_space<vmem>>, vector<8x8xf32>
    %36 = vector.extract_strided_slice %32 {offsets = [0, 0], sizes = [8, 8], strides = [1, 1]} : vector<8x32xf32> to vector<8x8xf32>
    %37 = arith.truncf %36 : vector<8x8xf32> to vector<8x8xbf16>
    %38 = vector.extract_strided_slice %33 {offsets = [0, 0], sizes = [8, 8], strides = [1, 1]} : vector<8x32xf32> to vector<8x8xf32>
    %39 = arith.truncf %38 : vector<8x8xf32> to vector<8x8xbf16>
    %40 = vector.extract_strided_slice %34 {offsets = [0, 0], sizes = [8, 8], strides = [1, 1]} : vector<8x32xf32> to vector<8x8xf32>
    %41 = arith.truncf %40 : vector<8x8xf32> to vector<8x8xbf16>
    %42 = tpu.transpose %39, [1, 0] : vector<8x8xbf16> -> vector<8x8xbf16>
    %cst_17 = arith.constant dense<0.000000e+00> : vector<8x8xf32>
    %43 = tpu.matmul %37, %42, %cst_17 {dimension_numbers = #tpu.dot_dimension_numbers<[1], [0], [0], [1], [0, 0, 1, 1], [], []>} : vector<8x8xbf16>, vector<8x8xbf16>, vector<8x8xf32> -> vector<8x8xf32>
    %44 = arith.addf %43, %35 : vector<8x8xf32>
    %cst_18 = arith.constant dense<0xFF800000> : vector<8xf32>
    %45 = vector.multi_reduction <maximumf>, %44, %cst_18 [1] : vector<8x8xf32> to vector<8xf32>
    %46 = vector.shape_cast %45 : vector<8xf32> to vector<8x1xf32>
    %47 = vector.broadcast %46 : vector<8x1xf32> to vector<8x8xf32>
    %48 = arith.subf %44, %47 : vector<8x8xf32>
    %49 = math.exp %48 : vector<8x8xf32>
    %cst_19 = arith.constant dense<0.000000e+00> : vector<8xf32>
    %50 = vector.multi_reduction <add>, %49, %cst_19 [1] : vector<8x8xf32> to vector<8xf32>
    %51 = vector.shape_cast %50 : vector<8xf32> to vector<8x1xf32>
    %52 = tpu.reciprocal %51 {approx = true} : vector<8x1xf32> -> vector<8x1xf32>
    %53 = vector.broadcast %52 : vector<8x1xf32> to vector<8x8xf32>
    %54 = arith.mulf %49, %53 : vector<8x8xf32>
    %55 = arith.truncf %54 : vector<8x8xf32> to vector<8x8xbf16>
    %cst_20 = arith.constant dense<0.000000e+00> : vector<8x8xf32>
    %56 = tpu.matmul %55, %41, %cst_20 {dimension_numbers = #tpu.dot_dimension_numbers<[1], [0], [0], [1], [0, 0, 1, 1], [], []>} : vector<8x8xbf16>, vector<8x8xbf16>, vector<8x8xf32> -> vector<8x8xf32>
    %57 = vector.extract_strided_slice %32 {offsets = [0, 8], sizes = [8, 8], strides = [1, 1]} : vector<8x32xf32> to vector<8x8xf32>
    %58 = arith.truncf %57 : vector<8x8xf32> to vector<8x8xbf16>
    %59 = vector.extract_strided_slice %33 {offsets = [0, 8], sizes = [8, 8], strides = [1, 1]} : vector<8x32xf32> to vector<8x8xf32>
    %60 = arith.truncf %59 : vector<8x8xf32> to vector<8x8xbf16>
    %61 = vector.extract_strided_slice %34 {offsets = [0, 8], sizes = [8, 8], strides = [1, 1]} : vector<8x32xf32> to vector<8x8xf32>
    %62 = arith.truncf %61 : vector<8x8xf32> to vector<8x8xbf16>
    %63 = tpu.transpose %60, [1, 0] : vector<8x8xbf16> -> vector<8x8xbf16>
    %cst_21 = arith.constant dense<0.000000e+00> : vector<8x8xf32>
    %64 = tpu.matmul %58, %63, %cst_21 {dimension_numbers = #tpu.dot_dimension_numbers<[1], [0], [0], [1], [0, 0, 1, 1], [], []>} : vector<8x8xbf16>, vector<8x8xbf16>, vector<8x8xf32> -> vector<8x8xf32>
    %65 = arith.addf %64, %35 : vector<8x8xf32>
    %cst_22 = arith.constant dense<0xFF800000> : vector<8xf32>
    %66 = vector.multi_reduction <maximumf>, %65, %cst_22 [1] : vector<8x8xf32> to vector<8xf32>
    %67 = vector.shape_cast %66 : vector<8xf32> to vector<8x1xf32>
    %68 = vector.broadcast %67 : vector<8x1xf32> to vector<8x8xf32>
    %69 = arith.subf %65, %68 : vector<8x8xf32>
    %70 = math.exp %69 : vector<8x8xf32>
    %cst_23 = arith.constant dense<0.000000e+00> : vector<8xf32>
    %71 = vector.multi_reduction <add>, %70, %cst_23 [1] : vector<8x8xf32> to vector<8xf32>
    %72 = vector.shape_cast %71 : vector<8xf32> to vector<8x1xf32>
    %73 = tpu.reciprocal %72 {approx = true} : vector<8x1xf32> -> vector<8x1xf32>
    %74 = vector.broadcast %73 : vector<8x1xf32> to vector<8x8xf32>
    %75 = arith.mulf %70, %74 : vector<8x8xf32>
    %76 = arith.truncf %75 : vector<8x8xf32> to vector<8x8xbf16>
    %cst_24 = arith.constant dense<0.000000e+00> : vector<8x8xf32>
    %77 = tpu.matmul %76, %62, %cst_24 {dimension_numbers = #tpu.dot_dimension_numbers<[1], [0], [0], [1], [0, 0, 1, 1], [], []>} : vector<8x8xbf16>, vector<8x8xbf16>, vector<8x8xf32> -> vector<8x8xf32>
    %78 = vector.extract_strided_slice %32 {offsets = [0, 16], sizes = [8, 8], strides = [1, 1]} : vector<8x32xf32> to vector<8x8xf32>
    %79 = arith.truncf %78 : vector<8x8xf32> to vector<8x8xbf16>
    %80 = vector.extract_strided_slice %33 {offsets = [0, 16], sizes = [8, 8], strides = [1, 1]} : vector<8x32xf32> to vector<8x8xf32>
    %81 = arith.truncf %80 : vector<8x8xf32> to vector<8x8xbf16>
    %82 = vector.extract_strided_slice %34 {offsets = [0, 16], sizes = [8, 8], strides = [1, 1]} : vector<8x32xf32> to vector<8x8xf32>
    %83 = arith.truncf %82 : vector<8x8xf32> to vector<8x8xbf16>
    %84 = tpu.transpose %81, [1, 0] : vector<8x8xbf16> -> vector<8x8xbf16>
    %cst_25 = arith.constant dense<0.000000e+00> : vector<8x8xf32>
    %85 = tpu.matmul %79, %84, %cst_25 {dimension_numbers = #tpu.dot_dimension_numbers<[1], [0], [0], [1], [0, 0, 1, 1], [], []>} : vector<8x8xbf16>, vector<8x8xbf16>, vector<8x8xf32> -> vector<8x8xf32>
    %86 = arith.addf %85, %35 : vector<8x8xf32>
    %cst_26 = arith.constant dense<0xFF800000> : vector<8xf32>
    %87 = vector.multi_reduction <maximumf>, %86, %cst_26 [1] : vector<8x8xf32> to vector<8xf32>
    %88 = vector.shape_cast %87 : vector<8xf32> to vector<8x1xf32>
    %89 = vector.broadcast %88 : vector<8x1xf32> to vector<8x8xf32>
    %90 = arith.subf %86, %89 : vector<8x8xf32>
    %91 = math.exp %90 : vector<8x8xf32>
    %cst_27 = arith.constant dense<0.000000e+00> : vector<8xf32>
    %92 = vector.multi_reduction <add>, %91, %cst_27 [1] : vector<8x8xf32> to vector<8xf32>
    %93 = vector.shape_cast %92 : vector<8xf32> to vector<8x1xf32>
    %94 = tpu.reciprocal %93 {approx = true} : vector<8x1xf32> -> vector<8x1xf32>
    %95 = vector.broadcast %94 : vector<8x1xf32> to vector<8x8xf32>
    %96 = arith.mulf %91, %95 : vector<8x8xf32>
    %97 = arith.truncf %96 : vector<8x8xf32> to vector<8x8xbf16>
    %cst_28 = arith.constant dense<0.000000e+00> : vector<8x8xf32>
    %98 = tpu.matmul %97, %83, %cst_28 {dimension_numbers = #tpu.dot_dimension_numbers<[1], [0], [0], [1], [0, 0, 1, 1], [], []>} : vector<8x8xbf16>, vector<8x8xbf16>, vector<8x8xf32> -> vector<8x8xf32>
    %99 = vector.extract_strided_slice %32 {offsets = [0, 24], sizes = [8, 8], strides = [1, 1]} : vector<8x32xf32> to vector<8x8xf32>
    %100 = arith.truncf %99 : vector<8x8xf32> to vector<8x8xbf16>
    %101 = vector.extract_strided_slice %33 {offsets = [0, 24], sizes = [8, 8], strides = [1, 1]} : vector<8x32xf32> to vector<8x8xf32>
    %102 = arith.truncf %101 : vector<8x8xf32> to vector<8x8xbf16>
    %103 = vector.extract_strided_slice %34 {offsets = [0, 24], sizes = [8, 8], strides = [1, 1]} : vector<8x32xf32> to vector<8x8xf32>
    %104 = arith.truncf %103 : vector<8x8xf32> to vector<8x8xbf16>
    %105 = tpu.transpose %102, [1, 0] : vector<8x8xbf16> -> vector<8x8xbf16>
    %cst_29 = arith.constant dense<0.000000e+00> : vector<8x8xf32>
    %106 = tpu.matmul %100, %105, %cst_29 {dimension_numbers = #tpu.dot_dimension_numbers<[1], [0], [0], [1], [0, 0, 1, 1], [], []>} : vector<8x8xbf16>, vector<8x8xbf16>, vector<8x8xf32> -> vector<8x8xf32>
    %107 = arith.addf %106, %35 : vector<8x8xf32>
    %cst_30 = arith.constant dense<0xFF800000> : vector<8xf32>
    %108 = vector.multi_reduction <maximumf>, %107, %cst_30 [1] : vector<8x8xf32> to vector<8xf32>
    %109 = vector.shape_cast %108 : vector<8xf32> to vector<8x1xf32>
    %110 = vector.broadcast %109 : vector<8x1xf32> to vector<8x8xf32>
    %111 = arith.subf %107, %110 : vector<8x8xf32>
    %112 = math.exp %111 : vector<8x8xf32>
    %cst_31 = arith.constant dense<0.000000e+00> : vector<8xf32>
    %113 = vector.multi_reduction <add>, %112, %cst_31 [1] : vector<8x8xf32> to vector<8xf32>
    %114 = vector.shape_cast %113 : vector<8xf32> to vector<8x1xf32>
    %115 = tpu.reciprocal %114 {approx = true} : vector<8x1xf32> -> vector<8x1xf32>
    %116 = vector.broadcast %115 : vector<8x1xf32> to vector<8x8xf32>
    %117 = arith.mulf %112, %116 : vector<8x8xf32>
    %118 = arith.truncf %117 : vector<8x8xf32> to vector<8x8xbf16>
    %cst_32 = arith.constant dense<0.000000e+00> : vector<8x8xf32>
    %119 = tpu.matmul %118, %104, %cst_32 {dimension_numbers = #tpu.dot_dimension_numbers<[1], [0], [0], [1], [0, 0, 1, 1], [], []>} : vector<8x8xbf16>, vector<8x8xbf16>, vector<8x8xf32> -> vector<8x8xf32>
    %120 = tpu.concatenate %56, %77, %98, %119 in 1 : vector<8x8xf32>, vector<8x8xf32>, vector<8x8xf32>, vector<8x8xf32> -> vector<8x32xf32>
    %121 = arith.truncf %120 : vector<8x32xf32> to vector<8x32xbf16>
    %c0_33 = arith.constant 0 : index
    %c0_34 = arith.constant 0 : index
    %122 = vector.load %arg8[%c0_33, %c0_34] : memref<32x32xbf16, #tpu.memory_space<vmem>>, vector<32x32xbf16>
    %cst_35 = arith.constant dense<0.000000e+00> : vector<8x32xf32>
    %123 = tpu.matmul %121, %122, %cst_35 {dimension_numbers = #tpu.dot_dimension_numbers<[1], [0], [0], [1], [0, 0, 1, 1], [], []>} : vector<8x32xbf16>, vector<32x32xbf16>, vector<8x32xf32> -> vector<8x32xf32>
    %c0_36 = arith.constant 0 : index
    %c0_37 = arith.constant 0 : index
    %124 = vector.load %arg9[%c0_36, %c0_37] : memref<1x32xf32, #tpu.memory_space<vmem>>, vector<1x32xf32>
    %125 = vector.broadcast %124 : vector<1x32xf32> to vector<8x32xf32>
    %126 = arith.addf %123, %125 : vector<8x32xf32>
    %127 = arith.addf %126, %3 : vector<8x32xf32>
    %c0_38 = arith.constant 0 : index
    %c0_39 = arith.constant 0 : index
    %128 = vector.load %arg10[%c0_38, %c0_39] : memref<1x32xf32, #tpu.memory_space<vmem>>, vector<1x32xf32>
    %c0_40 = arith.constant 0 : index
    %c0_41 = arith.constant 0 : index
    %129 = vector.load %arg11[%c0_40, %c0_41] : memref<1x32xf32, #tpu.memory_space<vmem>>, vector<1x32xf32>
    %cst_42 = arith.constant dense<0.000000e+00> : vector<8xf32>
    %130 = vector.multi_reduction <add>, %127, %cst_42 [1] : vector<8x32xf32> to vector<8xf32>
    %131 = vector.shape_cast %130 : vector<8xf32> to vector<8x1xf32>
    %cst_43 = arith.constant 3.200000e+01 : f32
    %132 = vector.broadcast %cst_43 : f32 to vector<8x1xf32>
    %133 = arith.divf %131, %132 : vector<8x1xf32>
    %134 = vector.broadcast %133 : vector<8x1xf32> to vector<8x32xf32>
    %135 = arith.subf %127, %134 : vector<8x32xf32>
    %136 = arith.mulf %135, %135 : vector<8x32xf32>
    %cst_44 = arith.constant dense<0.000000e+00> : vector<8xf32>
    %137 = vector.multi_reduction <add>, %136, %cst_44 [1] : vector<8x32xf32> to vector<8xf32>
    %138 = vector.shape_cast %137 : vector<8xf32> to vector<8x1xf32>
    %cst_45 = arith.constant 3.200000e+01 : f32
    %139 = vector.broadcast %cst_45 : f32 to vector<8x1xf32>
    %140 = arith.divf %138, %139 : vector<8x1xf32>
    %141 = vector.broadcast %133 : vector<8x1xf32> to vector<8x32xf32>
    %142 = arith.subf %127, %141 : vector<8x32xf32>
    %cst_46 = arith.constant 9.99999974E-6 : f32
    %143 = vector.broadcast %cst_46 : f32 to vector<8x1xf32>
    %144 = arith.addf %140, %143 : vector<8x1xf32>
    %145 = math.rsqrt %144 : vector<8x1xf32>
    %146 = vector.broadcast %145 : vector<8x1xf32> to vector<8x32xf32>
    %147 = arith.mulf %142, %146 : vector<8x32xf32>
    %148 = vector.broadcast %128 : vector<1x32xf32> to vector<8x32xf32>
    %149 = arith.mulf %147, %148 : vector<8x32xf32>
    %150 = vector.broadcast %129 : vector<1x32xf32> to vector<8x32xf32>
    %151 = arith.addf %149, %150 : vector<8x32xf32>
    %152 = arith.truncf %151 : vector<8x32xf32> to vector<8x32xbf16>
    %c0_47 = arith.constant 0 : index
    %c0_48 = arith.constant 0 : index
    %153 = vector.load %arg12[%c0_47, %c0_48] : memref<32x128xbf16, #tpu.memory_space<vmem>>, vector<32x128xbf16>
    %cst_49 = arith.constant dense<0.000000e+00> : vector<8x128xf32>
    %154 = tpu.matmul %152, %153, %cst_49 {dimension_numbers = #tpu.dot_dimension_numbers<[1], [0], [0], [1], [0, 0, 1, 1], [], []>} : vector<8x32xbf16>, vector<32x128xbf16>, vector<8x128xf32> -> vector<8x128xf32>
    %c0_50 = arith.constant 0 : index
    %c0_51 = arith.constant 0 : index
    %155 = vector.load %arg13[%c0_50, %c0_51] : memref<1x128xf32, #tpu.memory_space<vmem>>, vector<1x128xf32>
    %156 = vector.broadcast %155 : vector<1x128xf32> to vector<8x128xf32>
    %157 = arith.addf %154, %156 : vector<8x128xf32>
    %158 = arith.truncf %157 : vector<8x128xf32> to vector<8x128xbf16>
    %cst_52 = arith.constant 1.703130e+00 : bf16
    %159 = vector.broadcast %cst_52 : bf16 to vector<8x128xbf16>
    %160 = arith.mulf %159, %158 : vector<8x128xbf16>
    %161 = arith.negf %160 : vector<8x128xbf16>
    %162 = math.exp %161 : vector<8x128xbf16>
    %cst_53 = arith.constant 1.000000e+00 : bf16
    %163 = vector.broadcast %cst_53 : bf16 to vector<8x128xbf16>
    %164 = arith.addf %163, %162 : vector<8x128xbf16>
    %165 = arith.divf %163, %164 : vector<8x128xbf16>
    %166 = arith.mulf %158, %165 : vector<8x128xbf16>
    %c0_54 = arith.constant 0 : index
    %c0_55 = arith.constant 0 : index
    %167 = vector.load %arg14[%c0_54, %c0_55] : memref<128x32xbf16, #tpu.memory_space<vmem>>, vector<128x32xbf16>
    %cst_56 = arith.constant dense<0.000000e+00> : vector<8x32xf32>
    %168 = tpu.matmul %166, %167, %cst_56 {dimension_numbers = #tpu.dot_dimension_numbers<[1], [0], [0], [1], [0, 0, 1, 1], [], []>} : vector<8x128xbf16>, vector<128x32xbf16>, vector<8x32xf32> -> vector<8x32xf32>
    %c0_57 = arith.constant 0 : index
    %c0_58 = arith.constant 0 : index
    %169 = vector.load %arg15[%c0_57, %c0_58] : memref<1x32xf32, #tpu.memory_space<vmem>>, vector<1x32xf32>
    %170 = vector.broadcast %169 : vector<1x32xf32> to vector<8x32xf32>
    %171 = arith.addf %168, %170 : vector<8x32xf32>
    %172 = arith.addf %171, %127 : vector<8x32xf32>
    %c0_59 = arith.constant 0 : index
    %c0_60 = arith.constant 0 : index
    %c0_61 = arith.constant 0 : index
    %173 = vector.load %arg16[%c0_59, %c0_60, %c0_61] : memref<1x8x32xf32, #tpu.memory_space<vmem>>, vector<1x8x32xf32>
    %174 = vector.shape_cast %173 : vector<1x8x32xf32> to vector<8x32xf32>
    %175 = vector.shape_cast %172 : vector<8x32xf32> to vector<1x8x32xf32>
    tpu.vector_store %arg16[%c0_59, %c0_60, %c0_61], %175 {strides = array<i32>} : memref<1x8x32xf32, #tpu.memory_space<vmem>>, vector<1x8x32xf32>,
    return
  }
  func.func @transform_0(%arg0: i32, %arg1: i32) -> (i32, i32, i32) {
    %c0_i32 = arith.constant 0 : i32
    %c0_i32_0 = arith.constant 0 : i32
    %c0_i32_1 = arith.constant 0 : i32
    return %arg0, %c0_i32, %c0_i32_0 : i32, i32, i32
  }
  func.func @transform_1(%arg0: i32, %arg1: i32) -> (i32, i32) {
    %c0_i32 = arith.constant 0 : i32
    %c0_i32_0 = arith.constant 0 : i32
    return %arg1, %c0_i32 : i32, i32
  }
  func.func @transform_2(%arg0: i32, %arg1: i32) -> (i32, i32) {
    %c0_i32 = arith.constant 0 : i32
    %c0_i32_0 = arith.constant 0 : i32
    %c0_i32_1 = arith.constant 0 : i32
    return %c0_i32, %c0_i32_0 : i32, i32
  }
  func.func @transform_3(%arg0: i32, %arg1: i32) -> (i32, i32) {
    %c0_i32 = arith.constant 0 : i32
    %c0_i32_0 = arith.constant 0 : i32
    %c0_i32_1 = arith.constant 0 : i32
    return %c0_i32, %c0_i32_0 : i32, i32
  }
  func.func @transform_4(%arg0: i32, %arg1: i32) -> (i32, i32) {
    %c0_i32 = arith.constant 0 : i32
    %c0_i32_0 = arith.constant 0 : i32
    %c0_i32_1 = arith.constant 0 : i32
    return %c0_i32, %c0_i32_0 : i32, i32
  }
  func.func @transform_5(%arg0: i32, %arg1: i32) -> (i32, i32) {
    %c0_i32 = arith.constant 0 : i32
    %c0_i32_0 = arith.constant 0 : i32
    %c0_i32_1 = arith.constant 0 : i32
    return %c0_i32, %c0_i32_0 : i32, i32
  }
  func.func @transform_6(%arg0: i32, %arg1: i32) -> (i32, i32) {
    %c0_i32 = arith.constant 0 : i32
    %c0_i32_0 = arith.constant 0 : i32
    %c0_i32_1 = arith.constant 0 : i32
    return %c0_i32, %c0_i32_0 : i32, i32
  }
  func.func @transform_7(%arg0: i32, %arg1: i32) -> (i32, i32) {
    %c0_i32 = arith.constant 0 : i32
    %c0_i32_0 = arith.constant 0 : i32
    %c0_i32_1 = arith.constant 0 : i32
    return %c0_i32, %c0_i32_0 : i32, i32
  }
  func.func @transform_8(%arg0: i32, %arg1: i32) -> (i32, i32) {
    %c0_i32 = arith.constant 0 : i32
    %c0_i32_0 = arith.constant 0 : i32
    %c0_i32_1 = arith.constant 0 : i32
    return %c0_i32, %c0_i32_0 : i32, i32
  }
  func.func @transform_9(%arg0: i32, %arg1: i32) -> (i32, i32) {
    %c0_i32 = arith.constant 0 : i32
    %c0_i32_0 = arith.constant 0 : i32
    %c0_i32_1 = arith.constant 0 : i32
    return %c0_i32, %c0_i32_0 : i32, i32
  }
  func.func @transform_10(%arg0: i32, %arg1: i32) -> (i32, i32) {
    %c0_i32 = arith.constant 0 : i32
    %c0_i32_0 = arith.constant 0 : i32
    %c0_i32_1 = arith.constant 0 : i32
    return %c0_i32, %c0_i32_0 : i32, i32
  }
  func.func @transform_11(%arg0: i32, %arg1: i32) -> (i32, i32) {
    %c0_i32 = arith.constant 0 : i32
    %c0_i32_0 = arith.constant 0 : i32
    %c0_i32_1 = arith.constant 0 : i32
    return %c0_i32, %c0_i32_0 : i32, i32
  }
  func.func @transform_12(%arg0: i32, %arg1: i32) -> (i32, i32) {
    %c0_i32 = arith.constant 0 : i32
    %c0_i32_0 = arith.constant 0 : i32
    %c0_i32_1 = arith.constant 0 : i32
    return %c0_i32, %c0_i32_0 : i32, i32
  }
  func.func @transform_13(%arg0: i32, %arg1: i32) -> (i32, i32) {
    %c0_i32 = arith.constant 0 : i32
    %c0_i32_0 = arith.constant 0 : i32
    %c0_i32_1 = arith.constant 0 : i32
    return %c0_i32, %c0_i32_0 : i32, i32
  }
  func.func @transform_14(%arg0: i32, %arg1: i32) -> (i32, i32, i32) {
    %c0_i32 = arith.constant 0 : i32
    %c0_i32_0 = arith.constant 0 : i32
    return %arg0, %arg1, %c0_i32 : i32, i32, i32
  }
}

</mosaic_0001>

<llo_original>
// kernel: tpu_custom_call.1
$region0: #{tpu_custom_call.1}
  #allocation0 [shape = 'u32[]', space=smem, size = 0x4, offset = 0x4, fixed_abs, tag = 'smem constant byte address 0x4 - core index']
  #allocation1 [shape = 'u32[144,128]{1,0:T(1,128)}', space=vmem, size = 0x12000, scoped, tag = 'internal scratch']
  %s0 = inlined_call_operand.hbm [shape: f32[2,8,32], index: 0, kind: input, shape index: {}]
  %s1 = inlined_call_operand.hbm [shape: f32[8,8], index: 1, kind: input, shape index: {}]
  %s2 = inlined_call_operand.hbm [shape: f32[1,32], index: 2, kind: input, shape index: {}]
  %s3 = inlined_call_operand.hbm [shape: f32[1,32], index: 3, kind: input, shape index: {}]
  %s4 = inlined_call_operand.hbm [shape: bf16[32,96], index: 4, kind: input, shape index: {}]
  %s5 = inlined_call_operand.hbm [shape: f32[1,96], index: 5, kind: input, shape index: {}]
  %s6 = inlined_call_operand.hbm [shape: bf16[32,32], index: 6, kind: input, shape index: {}]
  %s7 = inlined_call_operand.hbm [shape: f32[1,32], index: 7, kind: input, shape index: {}]
  %s8 = inlined_call_operand.hbm [shape: f32[1,32], index: 8, kind: input, shape index: {}]
  %s9 = inlined_call_operand.hbm [shape: f32[1,32], index: 9, kind: input, shape index: {}]
  %s10 = inlined_call_operand.hbm [shape: bf16[32,128], index: 10, kind: input, shape index: {}]
  %s11 = inlined_call_operand.hbm [shape: f32[1,128], index: 11, kind: input, shape index: {}]
  %s12 = inlined_call_operand.hbm [shape: bf16[128,32], index: 12, kind: input, shape index: {}]
  %s13 = inlined_call_operand.hbm [shape: f32[1,32], index: 13, kind: input, shape index: {}]
  %s14 = inlined_call_operand.hbm [shape: f32[2,8,32], index: 14, kind: output, shape index: {}]
  %s15 = sld [smem:[#allocation0]]
  $region145: #{tpu_custom_call.1} parent=0
    _
  %s17 = ssub.s32 1, %s15
  %s18 = scalar_select 0, %s17, %s15
  $region1: #{tpu_custom_call.1} parent=0
    #allocation2 [shape = 'u8[8192]{0}', space=vmem, size = 0x2000, scoped, tag = 'input window, operand 0']
    #allocation3 [shape = 's32[2]{0}', space=sflag, size = 0x8, scoped, tag = 'scoped memory for tpu_custom_call.1']
    #allocation4 [shape = 's32[2]{0}', space=sflag, size = 0x8, scoped, tag = 'scoped memory for tpu_custom_call.1']
    #allocation5 [shape = 'u8[4096]{0}', space=vmem, size = 0x1000, scoped, tag = 'input window, operand 1, single buffered']
    #allocation6 [shape = 's32[1]{0}', space=sflag, size = 0x4, scoped, tag = 'scoped memory for tpu_custom_call.1']
    #allocation7 [shape = 'u8[512]{0}', space=vmem, size = 0x400, scoped, tag = 'input window, operand 2, single buffered']
    #allocation8 [shape = 'u8[512]{0}', space=vmem, size = 0x400, scoped, tag = 'input window, operand 3, single buffered']
    #allocation9 [shape = 's32[1]{0}', space=sflag, size = 0x4, scoped, tag = 'scoped memory for tpu_custom_call.1']
    #allocation10 [shape = 'u8[8192]{0}', space=vmem, size = 0x2000, scoped, tag = 'input window, operand 4, single buffered']
    #allocation11 [shape = 'u8[512]{0}', space=vmem, size = 0x400, scoped, tag = 'input window, operand 5, single buffered']
    #allocation12 [shape = 's32[1]{0}', space=sflag, size = 0x4, scoped, tag = 'scoped memory for tpu_custom_call.1']
    #allocation13 [shape = 'u8[8192]{0}', space=vmem, size = 0x2000, scoped, tag = 'input window, operand 6, single buffered']
    #allocation14 [shape = 'u8[512]{0}', space=vmem, size = 0x400, scoped, tag = 'input window, operand 7, single buffered']
    #allocation15 [shape = 's32[1]{0}', space=sflag, size = 0x4, scoped, tag = 'scoped memory for tpu_custom_call.1']
    #allocation16 [shape = 'u8[512]{0}', space=vmem, size = 0x400, scoped, tag = 'input window, operand 8, single buffered']
    #allocation17 [shape = 'u8[512]{0}', space=vmem, size = 0x400, scoped, tag = 'input window, operand 9, single buffered']
    #allocation18 [shape = 's32[1]{0}', space=sflag, size = 0x4, scoped, tag = 'scoped memory for tpu_custom_call.1']
    #allocation19 [shape = 'u8[8192]{0}', space=vmem, size = 0x2000, scoped, tag = 'input window, operand 10, single buffered']
    #allocation20 [shape = 'u8[512]{0}', space=vmem, size = 0x400, scoped, tag = 'input window, operand 11, single buffered']
    #allocation21 [shape = 's32[1]{0}', space=sflag, size = 0x4, scoped, tag = 'scoped memory for tpu_custom_call.1']
    #allocation22 [shape = 'u8[32768]{0}', space=vmem, size = 0x8000, scoped, tag = 'input window, operand 12, single buffered']
    #allocation23 [shape = 'u8[512]{0}', space=vmem, size = 0x400, scoped, tag = 'input window, operand 13, single buffered']
    #allocation24 [shape = 's32[1]{0}', space=sflag, size = 0x4, scoped, tag = 'scoped memory for tpu_custom_call.1']
    #allocation25 [shape = 'u8[8192]{0}', space=vmem, size = 0x2000, scoped, tag = 'output window, operand 0']
    %19 = vsyncpa [#allocation3], 0
    %s20 = scalar_lea.sflag [#allocation3], 1
    %21 = vsyncpa %s20, 0
    %22 = vsyncpa [#allocation6], 0
    %23 = vsyncpa [#allocation9], 0
    %24 = vsyncpa [#allocation12], 0
    %25 = vsyncpa [#allocation15], 0
    %26 = vsyncpa [#allocation18], 0
    %27 = vsyncpa [#allocation21], 0
    %28 = vsyncpa [#allocation24], 0
    %29 = vsyncpa [#allocation4], 0
    %s30 = scalar_lea.sflag [#allocation4], 1
    %31 = vsyncpa %s30, 0
    loop: start=0, step=1, limit=4
    $region2: #{tpu_custom_call.1} parent=1 // loop_pre_header
      _
    $region3: #{tpu_custom_call.1} parent=1 // loop_header
      %s33 = sphi 0, %s37
      %p34 = scmp.ge.s32.totalorder %s33, 4
      %s40 = sphi 0, %s52
      %s41 = sphi 0, %s48
      %s42 = sphi 0, %s40
      %s43 = sphi 0, %s41
      %s44 = sphi 0, %s42
      %s45 = sphi 0, %s43
      %s55 = sphi 0, %s57
      %s58 = sphi 0, %s55
      %s59 = sphi 0, %s58
      %s75 = sphi 0, %s59
      %s81 = sphi 0, %s83
      %s84 = sphi 0, %s81
      %s85 = sphi 0, %s84
      %s101 = sphi 0, %s85
      %s105 = sphi 0, %s105
      %s107 = sphi 0, %s105
      %s108 = sphi 0, %s107
      %s122 = sphi 0, %s108
      %s126 = sphi 0, %s126
      %s128 = sphi 0, %s126
      %s129 = sphi 0, %s128
      %s143 = sphi 0, %s129
      %s147 = sphi 0, %s147
      %s149 = sphi 0, %s147
      %s150 = sphi 0, %s149
      %s164 = sphi 0, %s150
      %s168 = sphi 0, %s168
      %s170 = sphi 0, %s168
      %s171 = sphi 0, %s170
      %s185 = sphi 0, %s171
      %s189 = sphi 0, %s189
      %s191 = sphi 0, %s189
      %s192 = sphi 0, %s191
      %s206 = sphi 0, %s192
      %s210 = sphi 0, %s210
      %s212 = sphi 0, %s210
      %s213 = sphi 0, %s212
      %s227 = sphi 0, %s213
      %s231 = sphi 0, %s231
      %s233 = sphi 0, %s231
      %s234 = sphi 0, %s233
      %s248 = sphi 0, %s234
      %s252 = sphi 0, %s252
      %s254 = sphi 0, %s252
      %s255 = sphi 0, %s254
      %s269 = sphi 0, %s255
      %s273 = sphi 0, %s273
      %s275 = sphi 0, %s273
      %s276 = sphi 0, %s275
      %s290 = sphi 0, %s276
      %s294 = sphi 0, %s294
      %s296 = sphi 0, %s294
      %s297 = sphi 0, %s296
      %s311 = sphi 0, %s297
      %s315 = sphi 0, %s315
      %s317 = sphi 0, %s315
      %s318 = sphi 0, %s317
      %s332 = sphi 0, %s318
      %s336 = sphi 0, %s336
      %s338 = sphi 0, %s336
      %s339 = sphi 0, %s338
      %s353 = sphi 0, %s339
      %s361 = sphi 0, %s363
      %s364 = sphi 0, %s361
      %s365 = sphi 0, %s364
      %s381 = sphi 0, %s365
    $region4: #{tpu_custom_call.1} parent=1 // loop_header_branch
      %36 = sbr.rel (%p34) target = $region8
    $region5: #{tpu_custom_call.1} parent=1 // loop_body
      %s38 = ssub.s32 %s33, 1
      %s39 = ssub.s32 %s33, 2
      %s46 = sadd.s32 1, %s41
      %p47 = scmp.ge.s32.totalorder %s46, 1
      %s48 = scalar_select %p47, 0, %s46
      %s49 = sadd.s32 1, %s40
      %s50 = scalar_select %p47, %s49, %s40
      %p51 = scmp.ge.s32.totalorder %s50, 2
      %s52 = scalar_select %p51, 0, %s50
      %s53 = ssub.s32 %s40, %s52
      %p54 = scmp.eq.s32.totalorder %s53, 0
      %s56 = sadd.s32 %s55, 1
      %s57 = scalar_select %p54, %s55, %s56
      %p60 = pneg %p54
      %p61 = scmp.eq.s32.totalorder %s33, 1
      %p62 = por %p60, %p61
      %p63 = scmp.ne.s32.totalorder %s55, %s58
      %p64 = scmp.eq.s32.totalorder %s33, 0
      %p65 = por %p63, %p64
      %p66 = scmp.ne.s32.totalorder %s55, %s58
      %p67 = scmp.eq.s32.totalorder %s38, 1
      %p68 = por %p66, %p67
      %p69 = scmp.ne.s32.totalorder %s58, %s59
      %p70 = scmp.eq.s32.totalorder %s38, 0
      %p71 = por %p69, %p70
      %p72 = scmp.ne.s32.totalorder %s58, %s59
      %p73 = scmp.eq.s32.totalorder %s39, 1
      %p74 = por %p72, %p73
      %p76 = scmp.ne.s32.totalorder %s59, %s75
      %p77 = scmp.eq.s32.totalorder %s39, 0
      %p78 = por %p76, %p77
      %s79 = ssub.s32 %s41, %s48
      %p80 = scmp.eq.s32.totalorder %s79, 0
      %s82 = sadd.s32 %s81, 1
      %s83 = scalar_select %p80, %s81, %s82
      %p86 = pneg %p80
      %p87 = scmp.eq.s32.totalorder %s33, 1
      %p88 = por %p86, %p87
      %p89 = scmp.ne.s32.totalorder %s81, %s84
      %p90 = scmp.eq.s32.totalorder %s33, 0
      %p91 = por %p89, %p90
      %p92 = scmp.ne.s32.totalorder %s81, %s84
      %p93 = scmp.eq.s32.totalorder %s38, 1
      %p94 = por %p92, %p93
      %p95 = scmp.ne.s32.totalorder %s84, %s85
      %p96 = scmp.eq.s32.totalorder %s38, 0
      %p97 = por %p95, %p96
      %p98 = scmp.ne.s32.totalorder %s84, %s85
      %p99 = scmp.eq.s32.totalorder %s39, 1
      %p100 = por %p98, %p99
      %p102 = scmp.ne.s32.totalorder %s85, %s101
      %p103 = scmp.eq.s32.totalorder %s39, 0
      %p104 = por %p102, %p103
      %s106 = sadd.s32 %s105, 1
      %p109 = scmp.eq.s32.totalorder %s33, 1
      %p110 = scmp.ne.s32.totalorder %s105, %s107
      %p111 = scmp.eq.s32.totalorder %s33, 0
      %p112 = por %p110, %p111
      %p113 = scmp.ne.s32.totalorder %s105, %s107
      %p114 = scmp.eq.s32.totalorder %s38, 1
      %p115 = por %p113, %p114
      %p116 = scmp.ne.s32.totalorder %s107, %s108
      %p117 = scmp.eq.s32.totalorder %s38, 0
      %p118 = por %p116, %p117
      %p119 = scmp.ne.s32.totalorder %s107, %s108
      %p120 = scmp.eq.s32.totalorder %s39, 1
      %p121 = por %p119, %p120
      %p123 = scmp.ne.s32.totalorder %s108, %s122
      %p124 = scmp.eq.s32.totalorder %s39, 0
      %p125 = por %p123, %p124
      %s127 = sadd.s32 %s126, 1
      %p130 = scmp.eq.s32.totalorder %s33, 1
      %p131 = scmp.ne.s32.totalorder %s126, %s128
      %p132 = scmp.eq.s32.totalorder %s33, 0
      %p133 = por %p131, %p132
      %p134 = scmp.ne.s32.totalorder %s126, %s128
      %p135 = scmp.eq.s32.totalorder %s38, 1
      %p136 = por %p134, %p135
      %p137 = scmp.ne.s32.totalorder %s128, %s129
      %p138 = scmp.eq.s32.totalorder %s38, 0
      %p139 = por %p137, %p138
      %p140 = scmp.ne.s32.totalorder %s128, %s129
      %p141 = scmp.eq.s32.totalorder %s39, 1
      %p142 = por %p140, %p141
      %p144 = scmp.ne.s32.totalorder %s129, %s143
      %p145 = scmp.eq.s32.totalorder %s39, 0
      %p146 = por %p144, %p145
      %s148 = sadd.s32 %s147, 1
      %p151 = scmp.eq.s32.totalorder %s33, 1
      %p152 = scmp.ne.s32.totalorder %s147, %s149
      %p153 = scmp.eq.s32.totalorder %s33, 0
      %p154 = por %p152, %p153
      %p155 = scmp.ne.s32.totalorder %s147, %s149
      %p156 = scmp.eq.s32.totalorder %s38, 1
      %p157 = por %p155, %p156
      %p158 = scmp.ne.s32.totalorder %s149, %s150
      %p159 = scmp.eq.s32.totalorder %s38, 0
      %p160 = por %p158, %p159
      %p161 = scmp.ne.s32.totalorder %s149, %s150
      %p162 = scmp.eq.s32.totalorder %s39, 1
      %p163 = por %p161, %p162
      %p165 = scmp.ne.s32.totalorder %s150, %s164
      %p166 = scmp.eq.s32.totalorder %s39, 0
      %p167 = por %p165, %p166
      %s169 = sadd.s32 %s168, 1
      %p172 = scmp.eq.s32.totalorder %s33, 1
      %p173 = scmp.ne.s32.totalorder %s168, %s170
      %p174 = scmp.eq.s32.totalorder %s33, 0
      %p175 = por %p173, %p174
      %p176 = scmp.ne.s32.totalorder %s168, %s170
      %p177 = scmp.eq.s32.totalorder %s38, 1
      %p178 = por %p176, %p177
      %p179 = scmp.ne.s32.totalorder %s170, %s171
      %p180 = scmp.eq.s32.totalorder %s38, 0
      %p181 = por %p179, %p180
      %p182 = scmp.ne.s32.totalorder %s170, %s171
      %p183 = scmp.eq.s32.totalorder %s39, 1
      %p184 = por %p182, %p183
      %p186 = scmp.ne.s32.totalorder %s171, %s185
      %p187 = scmp.eq.s32.totalorder %s39, 0
      %p188 = por %p186, %p187
      %s190 = sadd.s32 %s189, 1
      %p193 = scmp.eq.s32.totalorder %s33, 1
      %p194 = scmp.ne.s32.totalorder %s189, %s191
      %p195 = scmp.eq.s32.totalorder %s33, 0
      %p196 = por %p194, %p195
      %p197 = scmp.ne.s32.totalorder %s189, %s191
      %p198 = scmp.eq.s32.totalorder %s38, 1
      %p199 = por %p197, %p198
      %p200 = scmp.ne.s32.totalorder %s191, %s192
      %p201 = scmp.eq.s32.totalorder %s38, 0
      %p202 = por %p200, %p201
      %p203 = scmp.ne.s32.totalorder %s191, %s192
      %p204 = scmp.eq.s32.totalorder %s39, 1
      %p205 = por %p203, %p204
      %p207 = scmp.ne.s32.totalorder %s192, %s206
      %p208 = scmp.eq.s32.totalorder %s39, 0
      %p209 = por %p207, %p208
      %s211 = sadd.s32 %s210, 1
      %p214 = scmp.eq.s32.totalorder %s33, 1
      %p215 = scmp.ne.s32.totalorder %s210, %s212
      %p216 = scmp.eq.s32.totalorder %s33, 0
      %p217 = por %p215, %p216
      %p218 = scmp.ne.s32.totalorder %s210, %s212
      %p219 = scmp.eq.s32.totalorder %s38, 1
      %p220 = por %p218, %p219
      %p221 = scmp.ne.s32.totalorder %s212, %s213
      %p222 = scmp.eq.s32.totalorder %s38, 0
      %p223 = por %p221, %p222
      %p224 = scmp.ne.s32.totalorder %s212, %s213
      %p225 = scmp.eq.s32.totalorder %s39, 1
      %p226 = por %p224, %p225
      %p228 = scmp.ne.s32.totalorder %s213, %s227
      %p229 = scmp.eq.s32.totalorder %s39, 0
      %p230 = por %p228, %p229
      %s232 = sadd.s32 %s231, 1
      %p235 = scmp.eq.s32.totalorder %s33, 1
      %p236 = scmp.ne.s32.totalorder %s231, %s233
      %p237 = scmp.eq.s32.totalorder %s33, 0
      %p238 = por %p236, %p237
      %p239 = scmp.ne.s32.totalorder %s231, %s233
      %p240 = scmp.eq.s32.totalorder %s38, 1
      %p241 = por %p239, %p240
      %p242 = scmp.ne.s32.totalorder %s233, %s234
      %p243 = scmp.eq.s32.totalorder %s38, 0
      %p244 = por %p242, %p243
      %p245 = scmp.ne.s32.totalorder %s233, %s234
      %p246 = scmp.eq.s32.totalorder %s39, 1
      %p247 = por %p245, %p246
      %p249 = scmp.ne.s32.totalorder %s234, %s248
      %p250 = scmp.eq.s32.totalorder %s39, 0
      %p251 = por %p249, %p250
      %s253 = sadd.s32 %s252, 1
      %p256 = scmp.eq.s32.totalorder %s33, 1
      %p257 = scmp.ne.s32.totalorder %s252, %s254
      %p258 = scmp.eq.s32.totalorder %s33, 0
      %p259 = por %p257, %p258
      %p260 = scmp.ne.s32.totalorder %s252, %s254
      %p261 = scmp.eq.s32.totalorder %s38, 1
      %p262 = por %p260, %p261
      %p263 = scmp.ne.s32.totalorder %s254, %s255
      %p264 = scmp.eq.s32.totalorder %s38, 0
      %p265 = por %p263, %p264
      %p266 = scmp.ne.s32.totalorder %s254, %s255
      %p267 = scmp.eq.s32.totalorder %s39, 1
      %p268 = por %p266, %p267
      %p270 = scmp.ne.s32.totalorder %s255, %s269
      %p271 = scmp.eq.s32.totalorder %s39, 0
      %p272 = por %p270, %p271
      %s274 = sadd.s32 %s273, 1
      %p277 = scmp.eq.s32.totalorder %s33, 1
      %p278 = scmp.ne.s32.totalorder %s273, %s275
      %p279 = scmp.eq.s32.totalorder %s33, 0
      %p280 = por %p278, %p279
      %p281 = scmp.ne.s32.totalorder %s273, %s275
      %p282 = scmp.eq.s32.totalorder %s38, 1
      %p283 = por %p281, %p282
      %p284 = scmp.ne.s32.totalorder %s275, %s276
      %p285 = scmp.eq.s32.totalorder %s38, 0
      %p286 = por %p284, %p285
      %p287 = scmp.ne.s32.totalorder %s275, %s276
      %p288 = scmp.eq.s32.totalorder %s39, 1
      %p289 = por %p287, %p288
      %p291 = scmp.ne.s32.totalorder %s276, %s290
      %p292 = scmp.eq.s32.totalorder %s39, 0
      %p293 = por %p291, %p292
      %s295 = sadd.s32 %s294, 1
      %p298 = scmp.eq.s32.totalorder %s33, 1
      %p299 = scmp.ne.s32.totalorder %s294, %s296
      %p300 = scmp.eq.s32.totalorder %s33, 0
      %p301 = por %p299, %p300
      %p302 = scmp.ne.s32.totalorder %s294, %s296
      %p303 = scmp.eq.s32.totalorder %s38, 1
      %p304 = por %p302, %p303
      %p305 = scmp.ne.s32.totalorder %s296, %s297
      %p306 = scmp.eq.s32.totalorder %s38, 0
      %p307 = por %p305, %p306
      %p308 = scmp.ne.s32.totalorder %s296, %s297
      %p309 = scmp.eq.s32.totalorder %s39, 1
      %p310 = por %p308, %p309
      %p312 = scmp.ne.s32.totalorder %s297, %s311
      %p313 = scmp.eq.s32.totalorder %s39, 0
      %p314 = por %p312, %p313
      %s316 = sadd.s32 %s315, 1
      %p319 = scmp.eq.s32.totalorder %s33, 1
      %p320 = scmp.ne.s32.totalorder %s315, %s317
      %p321 = scmp.eq.s32.totalorder %s33, 0
      %p322 = por %p320, %p321
      %p323 = scmp.ne.s32.totalorder %s315, %s317
      %p324 = scmp.eq.s32.totalorder %s38, 1
      %p325 = por %p323, %p324
      %p326 = scmp.ne.s32.totalorder %s317, %s318
      %p327 = scmp.eq.s32.totalorder %s38, 0
      %p328 = por %p326, %p327
      %p329 = scmp.ne.s32.totalorder %s317, %s318
      %p330 = scmp.eq.s32.totalorder %s39, 1
      %p331 = por %p329, %p330
      %p333 = scmp.ne.s32.totalorder %s318, %s332
      %p334 = scmp.eq.s32.totalorder %s39, 0
      %p335 = por %p333, %p334
      %s337 = sadd.s32 %s336, 1
      %p340 = scmp.eq.s32.totalorder %s33, 1
      %p341 = scmp.ne.s32.totalorder %s336, %s338
      %p342 = scmp.eq.s32.totalorder %s33, 0
      %p343 = por %p341, %p342
      %p344 = scmp.ne.s32.totalorder %s336, %s338
      %p345 = scmp.eq.s32.totalorder %s38, 1
      %p346 = por %p344, %p345
      %p347 = scmp.ne.s32.totalorder %s338, %s339
      %p348 = scmp.eq.s32.totalorder %s38, 0
      %p349 = por %p347, %p348
      %p350 = scmp.ne.s32.totalorder %s338, %s339
      %p351 = scmp.eq.s32.totalorder %s39, 1
      %p352 = por %p350, %p351
      %p354 = scmp.ne.s32.totalorder %s339, %s353
      %p355 = scmp.eq.s32.totalorder %s39, 0
      %p356 = por %p354, %p355
      %s357 = ssub.s32 %s40, %s52
      %s358 = ssub.s32 %s41, %s48
      %s359 = sor.u32 %s357, %s358
      %p360 = scmp.eq.s32.totalorder %s359, 0
      %s362 = sadd.s32 %s361, 1
      %s363 = scalar_select %p360, %s361, %s362
      %p366 = pneg %p360
      %p367 = scmp.eq.s32.totalorder %s33, 1
      %p368 = por %p366, %p367
      %p369 = scmp.ne.s32.totalorder %s361, %s364
      %p370 = scmp.eq.s32.totalorder %s33, 0
      %p371 = por %p369, %p370
      %p372 = scmp.ne.s32.totalorder %s361, %s364
      %p373 = scmp.eq.s32.totalorder %s38, 1
      %p374 = por %p372, %p373
      %p375 = scmp.ne.s32.totalorder %s364, %s365
      %p376 = scmp.eq.s32.totalorder %s38, 0
      %p377 = por %p375, %p376
      %p378 = scmp.ne.s32.totalorder %s364, %s365
      %p379 = scmp.eq.s32.totalorder %s39, 1
      %p380 = por %p378, %p379
      %p382 = scmp.ne.s32.totalorder %s365, %s381
      %p383 = scmp.eq.s32.totalorder %s39, 0
      %p384 = por %p382, %p383
      %p385 = scmp.le.s32.totalorder 1, %s33
      %p386 = scmp.lt.s32.totalorder %s33, 3
      %p387 = pnand %p385, %p386
      %p388 = pneg %p387
      // Predicated region
      $region9: #{tpu_custom_call.1} parent=5 // pred_check
        _
      $region10: #{tpu_custom_call.1} parent=5 // pred_check_branch
        %390 = sbr.rel (%p387) target = $region12
      $region11: #{tpu_custom_call.1} parent=5 // pred_region
        %s391 = ssub.s32 %s33, 1
        // Predicated region
        $region13: #{tpu_custom_call.1} parent=11 // pred_check
          %p392 = pneg %p97
        $region14: #{tpu_custom_call.1} parent=11 // pred_check_branch
          %394 = sbr.rel (%p392) target = $region16
        $region15: #{tpu_custom_call.1} parent=11 // pred_region
          %s396 = ssub.s32 128, 128
          %397 = vsyncadd [#allocation6], %s396
          %s398 = smul.addr %s43, 128
          %s399 = scalar_lea.hbm %s1, %s398
          %s401 = sshll.u32 [#allocation5], 4
          %s402 = int_to_ptr.vmem [resolvable:$true] %s401
          %404 = dma.hbm_to_vmem [thread:$0]  %s399, 128, %s402, [#allocation6]
        $region16: #{tpu_custom_call.1} parent=11 // pred_fallthru
          _
        // Predicated region
        $region17: #{tpu_custom_call.1} parent=11 // pred_check
          %p405 = pneg %p118
        $region18: #{tpu_custom_call.1} parent=11 // pred_check_branch
          %407 = sbr.rel (%p405) target = $region20
        $region19: #{tpu_custom_call.1} parent=11 // pred_region
          %s409 = ssub.s32 16, 16
          %410 = vsyncadd [#allocation6], %s409
          %s412 = sshll.u32 [#allocation7], 4
          %s413 = int_to_ptr.vmem [resolvable:$true] %s412
          %415 = dma.hbm_to_vmem [thread:$0]  %s2, 16, %s413, [#allocation6]
        $region20: #{tpu_custom_call.1} parent=11 // pred_fallthru
          _
        // Predicated region
        $region21: #{tpu_custom_call.1} parent=11 // pred_check
          %p416 = pneg %p139
        $region22: #{tpu_custom_call.1} parent=11 // pred_check_branch
          %418 = sbr.rel (%p416) target = $region24
        $region23: #{tpu_custom_call.1} parent=11 // pred_region
          %s420 = ssub.s32 16, 16
          %421 = vsyncadd [#allocation9], %s420
          %s423 = sshll.u32 [#allocation8], 4
          %s424 = int_to_ptr.vmem [resolvable:$true] %s423
          %426 = dma.hbm_to_vmem [thread:$0]  %s3, 16, %s424, [#allocation9]
        $region24: #{tpu_custom_call.1} parent=11 // pred_fallthru
          _
        // Predicated region
        $region25: #{tpu_custom_call.1} parent=11 // pred_check
          %p427 = pneg %p160
        $region26: #{tpu_custom_call.1} parent=11 // pred_check_branch
          %429 = sbr.rel (%p427) target = $region28
        $region27: #{tpu_custom_call.1} parent=11 // pred_region
          %s431 = ssub.s32 256, 256
          %432 = vsyncadd [#allocation9], %s431
          %s433 = sshll.u32 [#allocation10], 4
          %s434 = int_to_ptr.vmem [resolvable:$true] %s433
          %439 = dma.hbm_to_vmem [thread:$0]  %s4, 256, %s434, [#allocation9], 64, 64, 4
        $region28: #{tpu_custom_call.1} parent=11 // pred_fallthru
          _
        // Predicated region
        $region29: #{tpu_custom_call.1} parent=11 // pred_check
          %p440 = pneg %p181
        $region30: #{tpu_custom_call.1} parent=11 // pred_check_branch
          %442 = sbr.rel (%p440) target = $region32
        $region31: #{tpu_custom_call.1} parent=11 // pred_region
          %s444 = ssub.s32 16, 16
          %445 = vsyncadd [#allocation12], %s444
          %s447 = sshll.u32 [#allocation11], 4
          %s448 = int_to_ptr.vmem [resolvable:$true] %s447
          %450 = dma.hbm_to_vmem [thread:$0]  %s5, 16, %s448, [#allocation12]
        $region32: #{tpu_custom_call.1} parent=11 // pred_fallthru
          _
        // Predicated region
        $region33: #{tpu_custom_call.1} parent=11 // pred_check
          %p451 = pneg %p202
        $region34: #{tpu_custom_call.1} parent=11 // pred_check_branch
          %453 = sbr.rel (%p451) target = $region36
        $region35: #{tpu_custom_call.1} parent=11 // pred_region
          %s455 = ssub.s32 256, 256
          %456 = vsyncadd [#allocation12], %s455
          %s457 = sshll.u32 [#allocation13], 4
          %s458 = int_to_ptr.vmem [resolvable:$true] %s457
          %463 = dma.hbm_to_vmem [thread:$0]  %s6, 256, %s458, [#allocation12], 64, 64, 4
        $region36: #{tpu_custom_call.1} parent=11 // pred_fallthru
          _
        // Predicated region
        $region37: #{tpu_custom_call.1} parent=11 // pred_check
          %p464 = pneg %p223
        $region38: #{tpu_custom_call.1} parent=11 // pred_check_branch
          %466 = sbr.rel (%p464) target = $region40
        $region39: #{tpu_custom_call.1} parent=11 // pred_region
          %s468 = ssub.s32 16, 16
          %469 = vsyncadd [#allocation15], %s468
          %s471 = sshll.u32 [#allocation14], 4
          %s472 = int_to_ptr.vmem [resolvable:$true] %s471
          %474 = dma.hbm_to_vmem [thread:$0]  %s7, 16, %s472, [#allocation15]
        $region40: #{tpu_custom_call.1} parent=11 // pred_fallthru
          _
        // Predicated region
        $region41: #{tpu_custom_call.1} parent=11 // pred_check
          %p475 = pneg %p244
        $region42: #{tpu_custom_call.1} parent=11 // pred_check_branch
          %477 = sbr.rel (%p475) target = $region44
        $region43: #{tpu_custom_call.1} parent=11 // pred_region
          %s479 = ssub.s32 16, 16
          %480 = vsyncadd [#allocation15], %s479
          %s482 = sshll.u32 [#allocation16], 4
          %s483 = int_to_ptr.vmem [resolvable:$true] %s482
          %485 = dma.hbm_to_vmem [thread:$0]  %s8, 16, %s483, [#allocation15]
        $region44: #{tpu_custom_call.1} parent=11 // pred_fallthru
          _
        // Predicated region
        $region45: #{tpu_custom_call.1} parent=11 // pred_check
          %p486 = pneg %p265
        $region46: #{tpu_custom_call.1} parent=11 // pred_check_branch
          %488 = sbr.rel (%p486) target = $region48
        $region47: #{tpu_custom_call.1} parent=11 // pred_region
          %s490 = ssub.s32 16, 16
          %491 = vsyncadd [#allocation18], %s490
          %s493 = sshll.u32 [#allocation17], 4
          %s494 = int_to_ptr.vmem [resolvable:$true] %s493
          %496 = dma.hbm_to_vmem [thread:$0]  %s9, 16, %s494, [#allocation18]
        $region48: #{tpu_custom_call.1} parent=11 // pred_fallthru
          _
        // Predicated region
        $region49: #{tpu_custom_call.1} parent=11 // pred_check
          %p497 = pneg %p286
        $region50: #{tpu_custom_call.1} parent=11 // pred_check_branch
          %499 = sbr.rel (%p497) target = $region52
        $region51: #{tpu_custom_call.1} parent=11 // pred_region
          %s501 = ssub.s32 256, 256
          %502 = vsyncadd [#allocation18], %s501
          %s503 = sshll.u32 [#allocation19], 4
          %s504 = int_to_ptr.vmem [resolvable:$true] %s503
          %509 = dma.hbm_to_vmem [thread:$0]  %s10, 256, %s504, [#allocation18], 64, 64, 4
        $region52: #{tpu_custom_call.1} parent=11 // pred_fallthru
          _
        // Predicated region
        $region53: #{tpu_custom_call.1} parent=11 // pred_check
          %p510 = pneg %p307
        $region54: #{tpu_custom_call.1} parent=11 // pred_check_branch
          %512 = sbr.rel (%p510) target = $region56
        $region55: #{tpu_custom_call.1} parent=11 // pred_region
          %s514 = ssub.s32 16, 16
          %515 = vsyncadd [#allocation21], %s514
          %s517 = sshll.u32 [#allocation20], 4
          %s518 = int_to_ptr.vmem [resolvable:$true] %s517
          %520 = dma.hbm_to_vmem [thread:$0]  %s11, 16, %s518, [#allocation21]
        $region56: #{tpu_custom_call.1} parent=11 // pred_fallthru
          _
        // Predicated region
        $region57: #{tpu_custom_call.1} parent=11 // pred_check
          %p521 = pneg %p328
        $region58: #{tpu_custom_call.1} parent=11 // pred_check_branch
          %523 = sbr.rel (%p521) target = $region60
        $region59: #{tpu_custom_call.1} parent=11 // pred_region
          %s525 = ssub.s32 1024, 1024
          %526 = vsyncadd [#allocation21], %s525
          %s527 = sshll.u32 [#allocation22], 4
          %s528 = int_to_ptr.vmem [resolvable:$true] %s527
          %533 = dma.hbm_to_vmem [thread:$0]  %s12, 1024, %s528, [#allocation21], 64, 64, 4
        $region60: #{tpu_custom_call.1} parent=11 // pred_fallthru
          _
        // Predicated region
        $region61: #{tpu_custom_call.1} parent=11 // pred_check
          %p534 = pneg %p349
        $region62: #{tpu_custom_call.1} parent=11 // pred_check_branch
          %536 = sbr.rel (%p534) target = $region64
        $region63: #{tpu_custom_call.1} parent=11 // pred_region
          %s538 = ssub.s32 16, 16
          %539 = vsyncadd [#allocation24], %s538
          %s541 = sshll.u32 [#allocation23], 4
          %s542 = int_to_ptr.vmem [resolvable:$true] %s541
          %544 = dma.hbm_to_vmem [thread:$0]  %s13, 16, %s542, [#allocation24]
        $region64: #{tpu_custom_call.1} parent=11 // pred_fallthru
          _
      $region12: #{tpu_custom_call.1} parent=5 // pred_fallthru
        _
      %p545 = scmp.lt.s32.totalorder %s33, 2
      // Predicated region
      $region65: #{tpu_custom_call.1} parent=5 // pred_check
        %p546 = pneg %p545
      $region66: #{tpu_custom_call.1} parent=5 // pred_check_branch
        %548 = sbr.rel (%p546) target = $region68
      $region67: #{tpu_custom_call.1} parent=5 // pred_region
        // Predicated region
        $region69: #{tpu_custom_call.1} parent=67 // pred_check
          %p549 = pneg %p65
        $region70: #{tpu_custom_call.1} parent=67 // pred_check_branch
          %551 = sbr.rel (%p549) target = $region72
        $region71: #{tpu_custom_call.1} parent=67 // pred_region
          %s552 = sand.u32 %s55, 1
          %s553 = scalar_lea.sflag [#allocation3], %s552
          %s554 = sand.u32 %s55, 1
          %s555 = smul.addr %s554, 8
          %s556 = scalar_lea.vmem [#allocation2], %s555
          %s558 = ssub.s32 128, 128
          %559 = vsyncadd %s553, %s558
          %s560 = smul.addr %s40, 128
          %s561 = scalar_lea.hbm %s0, %s560
          %s563 = sshll.u32 %s556, 4
          %s564 = int_to_ptr.vmem [resolvable:$true] %s563
          %566 = dma.hbm_to_vmem [thread:$0]  %s561, 128, %s564, %s553
        $region72: #{tpu_custom_call.1} parent=67 // pred_fallthru
          _
      $region68: #{tpu_custom_call.1} parent=5 // pred_fallthru
        _
      %p567 = scmp.le.s32.totalorder 1, %s33
      %p568 = scmp.lt.s32.totalorder %s33, 3
      %p569 = pnand %p567, %p568
      %p570 = pneg %p569
      // Predicated region
      $region73: #{tpu_custom_call.1} parent=5 // pred_check
        _
      $region74: #{tpu_custom_call.1} parent=5 // pred_check_branch
        %572 = sbr.rel (%p569) target = $region76
      $region75: #{tpu_custom_call.1} parent=5 // pred_region
        %s573 = ssub.s32 %s33, 1
        %s574 = sand.u32 %s58, 1
        %s575 = scalar_lea.sflag [#allocation3], %s574
        %s576 = sand.u32 %s58, 1
        %s577 = smul.addr %s576, 8
        %s578 = scalar_lea.vmem [#allocation2], %s577
        // Predicated region
        $region77: #{tpu_custom_call.1} parent=75 // pred_check
          %p579 = pneg %p71
        $region78: #{tpu_custom_call.1} parent=75 // pred_check_branch
          %581 = sbr.rel (%p579) target = $region80
        $region79: #{tpu_custom_call.1} parent=75 // pred_region
          %582 = dma.done %s575, 128
        $region80: #{tpu_custom_call.1} parent=75 // pred_fallthru
          _
        // Predicated region
        $region81: #{tpu_custom_call.1} parent=75 // pred_check
          %p583 = pneg %p97
        $region82: #{tpu_custom_call.1} parent=75 // pred_check_branch
          %585 = sbr.rel (%p583) target = $region84
        $region83: #{tpu_custom_call.1} parent=75 // pred_region
          %586 = dma.done [#allocation6], 128
        $region84: #{tpu_custom_call.1} parent=75 // pred_fallthru
          _
        // Predicated region
        $region85: #{tpu_custom_call.1} parent=75 // pred_check
          %p587 = pneg %p118
        $region86: #{tpu_custom_call.1} parent=75 // pred_check_branch
          %589 = sbr.rel (%p587) target = $region88
        $region87: #{tpu_custom_call.1} parent=75 // pred_region
          %590 = dma.done [#allocation6], 16
        $region88: #{tpu_custom_call.1} parent=75 // pred_fallthru
          _
        // Predicated region
        $region89: #{tpu_custom_call.1} parent=75 // pred_check
          %p591 = pneg %p139
        $region90: #{tpu_custom_call.1} parent=75 // pred_check_branch
          %593 = sbr.rel (%p591) target = $region92
        $region91: #{tpu_custom_call.1} parent=75 // pred_region
          %594 = dma.done [#allocation9], 16
        $region92: #{tpu_custom_call.1} parent=75 // pred_fallthru
          _
        // Predicated region
        $region93: #{tpu_custom_call.1} parent=75 // pred_check
          %p595 = pneg %p160
        $region94: #{tpu_custom_call.1} parent=75 // pred_check_branch
          %597 = sbr.rel (%p595) target = $region96
        $region95: #{tpu_custom_call.1} parent=75 // pred_region
          %598 = dma.done [#allocation9], 256
        $region96: #{tpu_custom_call.1} parent=75 // pred_fallthru
          _
        // Predicated region
        $region97: #{tpu_custom_call.1} parent=75 // pred_check
          %p599 = pneg %p181
        $region98: #{tpu_custom_call.1} parent=75 // pred_check_branch
          %601 = sbr.rel (%p599) target = $region100
        $region99: #{tpu_custom_call.1} parent=75 // pred_region
          %602 = dma.done [#allocation12], 16
        $region100: #{tpu_custom_call.1} parent=75 // pred_fallthru
          _
        // Predicated region
        $region101: #{tpu_custom_call.1} parent=75 // pred_check
          %p603 = pneg %p202
        $region102: #{tpu_custom_call.1} parent=75 // pred_check_branch
          %605 = sbr.rel (%p603) target = $region104
        $region103: #{tpu_custom_call.1} parent=75 // pred_region
          %606 = dma.done [#allocation12], 256
        $region104: #{tpu_custom_call.1} parent=75 // pred_fallthru
          _
        // Predicated region
        $region105: #{tpu_custom_call.1} parent=75 // pred_check
          %p607 = pneg %p223
        $region106: #{tpu_custom_call.1} parent=75 // pred_check_branch
          %609 = sbr.rel (%p607) target = $region108
        $region107: #{tpu_custom_call.1} parent=75 // pred_region
          %610 = dma.done [#allocation15], 16
        $region108: #{tpu_custom_call.1} parent=75 // pred_fallthru
          _
        // Predicated region
        $region109: #{tpu_custom_call.1} parent=75 // pred_check
          %p611 = pneg %p244
        $region110: #{tpu_custom_call.1} parent=75 // pred_check_branch
          %613 = sbr.rel (%p611) target = $region112
        $region111: #{tpu_custom_call.1} parent=75 // pred_region
          %614 = dma.done [#allocation15], 16
        $region112: #{tpu_custom_call.1} parent=75 // pred_fallthru
          _
        // Predicated region
        $region113: #{tpu_custom_call.1} parent=75 // pred_check
          %p615 = pneg %p265
        $region114: #{tpu_custom_call.1} parent=75 // pred_check_branch
          %617 = sbr.rel (%p615) target = $region116
        $region115: #{tpu_custom_call.1} parent=75 // pred_region
          %618 = dma.done [#allocation18], 16
        $region116: #{tpu_custom_call.1} parent=75 // pred_fallthru
          _
        // Predicated region
        $region117: #{tpu_custom_call.1} parent=75 // pred_check
          %p619 = pneg %p286
        $region118: #{tpu_custom_call.1} parent=75 // pred_check_branch
          %621 = sbr.rel (%p619) target = $region120
        $region119: #{tpu_custom_call.1} parent=75 // pred_region
          %622 = dma.done [#allocation18], 256
        $region120: #{tpu_custom_call.1} parent=75 // pred_fallthru
          _
        // Predicated region
        $region121: #{tpu_custom_call.1} parent=75 // pred_check
          %p623 = pneg %p307
        $region122: #{tpu_custom_call.1} parent=75 // pred_check_branch
          %625 = sbr.rel (%p623) target = $region124
        $region123: #{tpu_custom_call.1} parent=75 // pred_region
          %626 = dma.done [#allocation21], 16
        $region124: #{tpu_custom_call.1} parent=75 // pred_fallthru
          _
        // Predicated region
        $region125: #{tpu_custom_call.1} parent=75 // pred_check
          %p627 = pneg %p328
        $region126: #{tpu_custom_call.1} parent=75 // pred_check_branch
          %629 = sbr.rel (%p627) target = $region128
        $region127: #{tpu_custom_call.1} parent=75 // pred_region
          %630 = dma.done [#allocation21], 1024
        $region128: #{tpu_custom_call.1} parent=75 // pred_fallthru
          _
        // Predicated region
        $region129: #{tpu_custom_call.1} parent=75 // pred_check
          %p631 = pneg %p349
        $region130: #{tpu_custom_call.1} parent=75 // pred_check_branch
          %633 = sbr.rel (%p631) target = $region132
        $region131: #{tpu_custom_call.1} parent=75 // pred_region
          %634 = dma.done [#allocation24], 16
        $region132: #{tpu_custom_call.1} parent=75 // pred_fallthru
          _
        %s635 = sand.u32 %s58, 1
        %s636 = scalar_lea.sflag [#allocation3], %s635
        %s637 = sand.u32 %s58, 1
        %s638 = smul.addr %s637, 8
        %s639 = scalar_lea.vmem [#allocation2], %s638
        %p640 = pneg %p71
        %p641 = pneg %p68
        %p642 = pneg %p97
        %p643 = pneg %p94
        %p644 = pneg %p118
        %p645 = pneg %p115
        %p646 = pneg %p139
        %p647 = pneg %p136
        %p648 = pneg %p160
        %p649 = pneg %p157
        %p650 = pneg %p181
        %p651 = pneg %p178
        %p652 = pneg %p202
        %p653 = pneg %p199
        %p654 = pneg %p223
        %p655 = pneg %p220
        %p656 = pneg %p244
        %p657 = pneg %p241
        %p658 = pneg %p265
        %p659 = pneg %p262
        %p660 = pneg %p286
        %p661 = pneg %p283
        %p662 = pneg %p307
        %p663 = pneg %p304
        %p664 = pneg %p328
        %p665 = pneg %p325
        %p666 = pneg %p349
        %p667 = pneg %p346
        %p668 = pneg %p377
        %p669 = pneg %p374
        %s670 = sand.u32 %s364, 1
        %s671 = scalar_lea.sflag [#allocation4], %s670
        %s672 = sand.u32 %s364, 1
        %s673 = smul.addr %s672, 8
        %s674 = scalar_lea.vmem [#allocation25], %s673
        %v678 = vld [vmem:[#allocation7] sm:$0x1]
        %v679 = vld [vmem:[#allocation8] sm:$0x1]
        %v680 = vld [vmem:[%s578] sm:$0xff]
        %vm681 = vcmask 261120
        %v682 = vsel %vm681, %v680, 0.0
        %683 = vadd.xlane.f32.xlu0 %v682
        %v684 = vpop.xlane.xlu0 %683
        %v685 = vrcp.pop 32.0
        %v686 = vmul.f32 %v684, %v685
        %v687 = vsub.f32 %v680, %v686
        %v688 = vmul.f32 %v687, %v687
        %v689 = vsel %vm681, %v688, 0.0
        %690 = vadd.xlane.f32.xlu0 %v689
        %v691 = vpop.xlane.xlu0 %690
        %v692 = vmul.f32 %v691, %v685
        %v693 = vadd.f32 %v692, 1e-05
        %v694 = vrsqrt.pop %v693
        %v695 = vmul.f32 %v687, %v694
        %v697 = vlaneseq
        %v698 = vshrl.u32 %v697, 7
        %v699 = vsub.s32 0, %v698
        %v700 = vrot.slane %v678, %v699
        %v702 = vmul.f32 %v695, %v700
        %v704 = vlaneseq
        %v705 = vshrl.u32 %v704, 7
        %v706 = vsub.s32 0, %v705
        %v707 = vrot.slane %v679, %v706
        %v709 = vadd.f32 %v702, %v707
        %v710 = vpack.c.bf16 %v709, %v709
        %v711 = vld [vmem:[#allocation10] sm:$0xf]
        %v712 = vld [vmem:[#allocation10 + $0x4] sm:$0xf]
        %v713 = vld [vmem:[#allocation10 + $0x8] sm:$0xf]
        %v714 = vld [vmem:[#allocation10 + $0xc] sm:$0xf]
        %v715 = vld [vmem:[#allocation11] sm:$0x1]
        %v717 = vlaneseq
        %v718 = vshrl.u32 %v717, 7
        %v719 = vsub.s32 0, %v718
        %v720 = vrot.slane %v715, %v719
        %v726 = vunpack.c.l.b16 %v711
        %v727 = vunpack.c.l.b16 %v712
        %v728 = vunpack.c.l.b16 %v713
        %v729 = vunpack.c.l.b16 %v714
        %v730 = vpack.c.b16 %v727, %v726
        %v731 = vpack.c.b16 %v729, %v728
        %v735 = vsel %vm681, %v710, 0
        %737 = vmatprep.subr.bf16.mxu0 0
        %738 = vmatpush1.bf16.msra.mxu0 %v730
        %739 = vmatprep.subr.bf16.mxu0 0
        %740 = vmatpush1.bf16.msra.mxu0 %v731
        %741 = vmatprep.subr.bf16.mxu0 0
        %742 = vmatpush1.bf16.msra.mxu0 0
        %743 = vmatprep.subr.bf16.mxu0 0
        %744 = vmatpush1.bf16.msra.mxu0 0
        %745 = vmatprep.subr.bf16.mxu0 0
        %746 = vmatpush1.bf16.msra.mxu0 0
        %747 = vmatprep.subr.bf16.mxu0 0
        %748 = vmatpush1.bf16.msra.mxu0 0
        %749 = vmatprep.subr.bf16.mxu0 0
        %750 = vmatpush1.bf16.msra.mxu0 0
        %751 = vmatprep.subr.bf16.mxu0 0
        %752 = vmatpush1.bf16.msra.mxu0 0
        %753 = vmatprep.subr.bf16.mxu0 0
        %754 = vmatpush1.bf16.msra.mxu0 0
        %755 = vmatprep.subr.bf16.mxu0 0
        %756 = vmatpush1.bf16.msra.mxu0 0
        %757 = vmatprep.subr.bf16.mxu0 0
        %758 = vmatpush1.bf16.msra.mxu0 0
        %759 = vmatprep.subr.bf16.mxu0 0
        %760 = vmatpush1.bf16.msra.mxu0 0
        %761 = vmatprep.subr.bf16.mxu0 0
        %762 = vmatpush1.bf16.msra.mxu0 0
        %763 = vmatprep.subr.bf16.mxu0 0
        %764 = vmatpush1.bf16.msra.mxu0 0
        %765 = vmatprep.subr.bf16.mxu0 0
        %766 = vmatpush1.bf16.msra.mxu0 0
        %767 = vmatprep.subr.bf16.mxu0 0
        %768 = vmatpush1.bf16.msra.mxu0 0
        %769 = vmatprep.mubr.bf16.mxu0 0
        %770 = vmatmul.mubr.bf16.gmra.mrb[0].mxu0 %v735
        %v771 = vpop.f32.mrb[0].mxu0
        %v772 = vadd.f32 %v720, %v771
        %v773 = vpop.f32.mrb[0].mxu0
        %v774 = vpop.f32.mrb[0].mxu0
        %v775 = vpop.f32.mrb[0].mxu0
        %776 = vdwg.mxu0
        %v777 = vld [vmem:[#allocation5] sm:$0xff]
        %779 = vrot.lane.b32.xlu0 %v772, 120
        %v780 = vpop.permute.xlu0 %779
        %782 = vrot.lane.b32.xlu0 %v772, 112
        %v783 = vpop.permute.xlu0 %782
        %785 = vrot.lane.b32.xlu0 %v772, 104
        %v786 = vpop.permute.xlu0 %785
        %v788 = vcombine.low %v772, %v783
        %v789 = vcombine.high %v772, %v783
        %v791 = vunpack.c.l.s4 1983009808
        %v792 = vunpack.c.0.s8 %v791
        %v793 = vlaneseq
        %v794 = vshrl.u32 %v793, 7
        %v795 = vsub.s32 %v792, %v794
        %v796 = vrot.slane %v788, %v795
        %v798 = vunpack.c.l.s4 1983009808
        %v799 = vunpack.c.0.s8 %v798
        %v800 = vlaneseq
        %v801 = vshrl.u32 %v800, 7
        %v802 = vsub.s32 %v799, %v801
        %v803 = vrot.slane %v789, %v802
        %v804 = vcombine.low %v780, %v786
        %v805 = vcombine.high %v780, %v786
        %v807 = vunpack.c.l.s4 1983009808
        %v808 = vunpack.c.0.s8 %v807
        %v809 = vlaneseq
        %v810 = vshrl.u32 %v809, 7
        %v811 = vsub.s32 %v808, %v810
        %v812 = vrot.slane %v804, %v811
        %v814 = vunpack.c.l.s4 1983009808
        %v815 = vunpack.c.0.s8 %v814
        %v816 = vlaneseq
        %v817 = vshrl.u32 %v816, 7
        %v818 = vsub.s32 %v815, %v817
        %v819 = vrot.slane %v805, %v818
        %v820 = vcombine.low %v796, %v812
        %v821 = vcombine.high %v796, %v812
        %v823 = vunpack.c.l.s4 1934713408
        %v824 = vunpack.c.0.s8 %v823
        %v825 = vlaneseq
        %v826 = vshrl.u32 %v825, 7
        %v827 = vsub.s32 %v824, %v826
        %v828 = vrot.slane %v820, %v827
        %v830 = vunpack.c.l.s4 1934713408
        %v831 = vunpack.c.0.s8 %v830
        %v832 = vlaneseq
        %v833 = vshrl.u32 %v832, 7
        %v834 = vsub.s32 %v831, %v833
        %v835 = vrot.slane %v821, %v834
        %v836 = vcombine.low %v803, %v819
        %v837 = vcombine.high %v803, %v819
        %v839 = vunpack.c.l.s4 1934713408
        %v840 = vunpack.c.0.s8 %v839
        %v841 = vlaneseq
        %v842 = vshrl.u32 %v841, 7
        %v843 = vsub.s32 %v840, %v842
        %v844 = vrot.slane %v836, %v843
        %v846 = vunpack.c.l.s4 1934713408
        %v847 = vunpack.c.0.s8 %v846
        %v848 = vlaneseq
        %v849 = vshrl.u32 %v848, 7
        %v850 = vsub.s32 %v847, %v849
        %v851 = vrot.slane %v837, %v850
        %v852 = vcombine.high %v828, 0.0
        %v853 = vcombine.high %v835, 0.0
        %v854 = vcombine.high %v844, 0.0
        %v855 = vcombine.high %v851, 0.0
        %v856 = vcombine.low %v828, %v835
        %v858 = vunpack.c.l.s4 1983009808
        %v859 = vunpack.c.0.s8 %v858
        %v860 = vlaneseq
        %v861 = vshrl.u32 %v860, 7
        %v862 = vsub.s32 %v859, %v861
        %v863 = vrot.slane %v856, %v862
        %v864 = vcombine.low %v852, %v853
        %v866 = vunpack.c.l.s4 1983009808
        %v867 = vunpack.c.0.s8 %v866
        %v868 = vlaneseq
        %v869 = vshrl.u32 %v868, 7
        %v870 = vsub.s32 %v867, %v869
        %v871 = vrot.slane %v864, %v870
        %v872 = vcombine.low %v844, %v851
        %v874 = vunpack.c.l.s4 1983009808
        %v875 = vunpack.c.0.s8 %v874
        %v876 = vlaneseq
        %v877 = vshrl.u32 %v876, 7
        %v878 = vsub.s32 %v875, %v877
        %v879 = vrot.slane %v872, %v878
        %v880 = vcombine.low %v854, %v855
        %v882 = vunpack.c.l.s4 1983009808
        %v883 = vunpack.c.0.s8 %v882
        %v884 = vlaneseq
        %v885 = vshrl.u32 %v884, 7
        %v886 = vsub.s32 %v883, %v885
        %v887 = vrot.slane %v880, %v886
        %v888 = vcombine.low %v863, %v871
        %v889 = vcombine.high %v863, %v871
        %v891 = vunpack.c.l.s4 1934713408
        %v892 = vunpack.c.0.s8 %v891
        %v893 = vlaneseq
        %v894 = vshrl.u32 %v893, 7
        %v895 = vsub.s32 %v892, %v894
        %v896 = vrot.slane %v888, %v895
        %v898 = vunpack.c.l.s4 1934713408
        %v899 = vunpack.c.0.s8 %v898
        %v900 = vlaneseq
        %v901 = vshrl.u32 %v900, 7
        %v902 = vsub.s32 %v899, %v901
        %v903 = vrot.slane %v889, %v902
        %v904 = vcombine.low %v879, %v887
        %v905 = vcombine.high %v879, %v887
        %v907 = vunpack.c.l.s4 1934713408
        %v908 = vunpack.c.0.s8 %v907
        %v909 = vlaneseq
        %v910 = vshrl.u32 %v909, 7
        %v911 = vsub.s32 %v908, %v910
        %v912 = vrot.slane %v904, %v911
        %v914 = vunpack.c.l.s4 1934713408
        %v915 = vunpack.c.0.s8 %v914
        %v916 = vlaneseq
        %v917 = vshrl.u32 %v916, 7
        %v918 = vsub.s32 %v915, %v917
        %v919 = vrot.slane %v905, %v918
        %v920 = vcombine.low %v896, %v912
        %v921 = vcombine.high %v896, %v912
        %v922 = vcombine.low %v903, %v919
        %v923 = vcombine.high %v903, %v919
        %v924 = vpack.c.bf16 %v920, %v920
        %v925 = vpack.c.bf16 %v921, %v921
        %v926 = vpack.c.bf16 %v922, %v922
        %v927 = vpack.c.bf16 %v923, %v923
        %928 = vrot.lane.b32.xlu0 %v772, 96
        %v929 = vpop.permute.xlu0 %928
        %930 = vrot.lane.b32.xlu0 %v780, 96
        %v931 = vpop.permute.xlu0 %930
        %932 = vrot.lane.b32.xlu0 %v783, 96
        %v933 = vpop.permute.xlu0 %932
        %934 = vrot.lane.b32.xlu0 %v786, 96
        %v935 = vpop.permute.xlu0 %934
        %v940 = vcombine.low %v929, %v933
        %v941 = vcombine.high %v929, %v933
        %v943 = vunpack.c.l.s4 1983009808
        %v944 = vunpack.c.0.s8 %v943
        %v945 = vlaneseq
        %v946 = vshrl.u32 %v945, 7
        %v947 = vsub.s32 %v944, %v946
        %v948 = vrot.slane %v940, %v947
        %v950 = vunpack.c.l.s4 1983009808
        %v951 = vunpack.c.0.s8 %v950
        %v952 = vlaneseq
        %v953 = vshrl.u32 %v952, 7
        %v954 = vsub.s32 %v951, %v953
        %v955 = vrot.slane %v941, %v954
        %v956 = vcombine.low %v931, %v935
        %v957 = vcombine.high %v931, %v935
        %v959 = vunpack.c.l.s4 1983009808
        %v960 = vunpack.c.0.s8 %v959
        %v961 = vlaneseq
        %v962 = vshrl.u32 %v961, 7
        %v963 = vsub.s32 %v960, %v962
        %v964 = vrot.slane %v956, %v963
        %v966 = vunpack.c.l.s4 1983009808
        %v967 = vunpack.c.0.s8 %v966
        %v968 = vlaneseq
        %v969 = vshrl.u32 %v968, 7
        %v970 = vsub.s32 %v967, %v969
        %v971 = vrot.slane %v957, %v970
        %v972 = vcombine.low %v948, %v964
        %v973 = vcombine.high %v948, %v964
        %v975 = vunpack.c.l.s4 1934713408
        %v976 = vunpack.c.0.s8 %v975
        %v977 = vlaneseq
        %v978 = vshrl.u32 %v977, 7
        %v979 = vsub.s32 %v976, %v978
        %v980 = vrot.slane %v972, %v979
        %v982 = vunpack.c.l.s4 1934713408
        %v983 = vunpack.c.0.s8 %v982
        %v984 = vlaneseq
        %v985 = vshrl.u32 %v984, 7
        %v986 = vsub.s32 %v983, %v985
        %v987 = vrot.slane %v973, %v986
        %v988 = vcombine.low %v955, %v971
        %v989 = vcombine.high %v955, %v971
        %v991 = vunpack.c.l.s4 1934713408
        %v992 = vunpack.c.0.s8 %v991
        %v993 = vlaneseq
        %v994 = vshrl.u32 %v993, 7
        %v995 = vsub.s32 %v992, %v994
        %v996 = vrot.slane %v988, %v995
        %v998 = vunpack.c.l.s4 1934713408
        %v999 = vunpack.c.0.s8 %v998
        %v1000 = vlaneseq
        %v1001 = vshrl.u32 %v1000, 7
        %v1002 = vsub.s32 %v999, %v1001
        %v1003 = vrot.slane %v989, %v1002
        %v1004 = vcombine.high %v980, 0.0
        %v1005 = vcombine.high %v987, 0.0
        %v1006 = vcombine.high %v996, 0.0
        %v1007 = vcombine.high %v1003, 0.0
        %v1008 = vcombine.low %v980, %v987
        %v1010 = vunpack.c.l.s4 1983009808
        %v1011 = vunpack.c.0.s8 %v1010
        %v1012 = vlaneseq
        %v1013 = vshrl.u32 %v1012, 7
        %v1014 = vsub.s32 %v1011, %v1013
        %v1015 = vrot.slane %v1008, %v1014
        %v1016 = vcombine.low %v1004, %v1005
        %v1018 = vunpack.c.l.s4 1983009808
        %v1019 = vunpack.c.0.s8 %v1018
        %v1020 = vlaneseq
        %v1021 = vshrl.u32 %v1020, 7
        %v1022 = vsub.s32 %v1019, %v1021
        %v1023 = vrot.slane %v1016, %v1022
        %v1024 = vcombine.low %v996, %v1003
        %v1026 = vunpack.c.l.s4 1983009808
        %v1027 = vunpack.c.0.s8 %v1026
        %v1028 = vlaneseq
        %v1029 = vshrl.u32 %v1028, 7
        %v1030 = vsub.s32 %v1027, %v1029
        %v1031 = vrot.slane %v1024, %v1030
        %v1032 = vcombine.low %v1006, %v1007
        %v1034 = vunpack.c.l.s4 1983009808
        %v1035 = vunpack.c.0.s8 %v1034
        %v1036 = vlaneseq
        %v1037 = vshrl.u32 %v1036, 7
        %v1038 = vsub.s32 %v1035, %v1037
        %v1039 = vrot.slane %v1032, %v1038
        %v1040 = vcombine.low %v1015, %v1023
        %v1041 = vcombine.high %v1015, %v1023
        %v1043 = vunpack.c.l.s4 1934713408
        %v1044 = vunpack.c.0.s8 %v1043
        %v1045 = vlaneseq
        %v1046 = vshrl.u32 %v1045, 7
        %v1047 = vsub.s32 %v1044, %v1046
        %v1048 = vrot.slane %v1040, %v1047
        %v1050 = vunpack.c.l.s4 1934713408
        %v1051 = vunpack.c.0.s8 %v1050
        %v1052 = vlaneseq
        %v1053 = vshrl.u32 %v1052, 7
        %v1054 = vsub.s32 %v1051, %v1053
        %v1055 = vrot.slane %v1041, %v1054
        %v1056 = vcombine.low %v1031, %v1039
        %v1057 = vcombine.high %v1031, %v1039
        %v1059 = vunpack.c.l.s4 1934713408
        %v1060 = vunpack.c.0.s8 %v1059
        %v1061 = vlaneseq
        %v1062 = vshrl.u32 %v1061, 7
        %v1063 = vsub.s32 %v1060, %v1062
        %v1064 = vrot.slane %v1056, %v1063
        %v1066 = vunpack.c.l.s4 1934713408
        %v1067 = vunpack.c.0.s8 %v1066
        %v1068 = vlaneseq
        %v1069 = vshrl.u32 %v1068, 7
        %v1070 = vsub.s32 %v1067, %v1069
        %v1071 = vrot.slane %v1057, %v1070
        %v1072 = vcombine.low %v1048, %v1064
        %v1073 = vcombine.high %v1048, %v1064
        %v1074 = vcombine.low %v1055, %v1071
        %v1075 = vcombine.high %v1055, %v1071
        %v1076 = vpack.c.bf16 %v1072, %v1072
        %v1077 = vpack.c.bf16 %v1073, %v1073
        %v1078 = vpack.c.bf16 %v1074, %v1074
        %v1079 = vpack.c.bf16 %v1075, %v1075
        %1080 = vrot.lane.b32.xlu0 %v772, 64
        %v1081 = vpop.permute.xlu0 %1080
        %1082 = vrot.lane.b32.xlu0 %v780, 64
        %v1083 = vpop.permute.xlu0 %1082
        %1084 = vrot.lane.b32.xlu0 %v783, 64
        %v1085 = vpop.permute.xlu0 %1084
        %1086 = vrot.lane.b32.xlu0 %v786, 64
        %v1087 = vpop.permute.xlu0 %1086
        %v1092 = vcombine.low %v1081, %v1085
        %v1093 = vcombine.high %v1081, %v1085
        %v1095 = vunpack.c.l.s4 1983009808
        %v1096 = vunpack.c.0.s8 %v1095
        %v1097 = vlaneseq
        %v1098 = vshrl.u32 %v1097, 7
        %v1099 = vsub.s32 %v1096, %v1098
        %v1100 = vrot.slane %v1092, %v1099
        %v1102 = vunpack.c.l.s4 1983009808
        %v1103 = vunpack.c.0.s8 %v1102
        %v1104 = vlaneseq
        %v1105 = vshrl.u32 %v1104, 7
        %v1106 = vsub.s32 %v1103, %v1105
        %v1107 = vrot.slane %v1093, %v1106
        %v1108 = vcombine.low %v1083, %v1087
        %v1109 = vcombine.high %v1083, %v1087
        %v1111 = vunpack.c.l.s4 1983009808
        %v1112 = vunpack.c.0.s8 %v1111
        %v1113 = vlaneseq
        %v1114 = vshrl.u32 %v1113, 7
        %v1115 = vsub.s32 %v1112, %v1114
        %v1116 = vrot.slane %v1108, %v1115
        %v1118 = vunpack.c.l.s4 1983009808
        %v1119 = vunpack.c.0.s8 %v1118
        %v1120 = vlaneseq
        %v1121 = vshrl.u32 %v1120, 7
        %v1122 = vsub.s32 %v1119, %v1121
        %v1123 = vrot.slane %v1109, %v1122
        %v1124 = vcombine.low %v1100, %v1116
        %v1125 = vcombine.high %v1100, %v1116
        %v1127 = vunpack.c.l.s4 1934713408
        %v1128 = vunpack.c.0.s8 %v1127
        %v1129 = vlaneseq
        %v1130 = vshrl.u32 %v1129, 7
        %v1131 = vsub.s32 %v1128, %v1130
        %v1132 = vrot.slane %v1124, %v1131
        %v1134 = vunpack.c.l.s4 1934713408
        %v1135 = vunpack.c.0.s8 %v1134
        %v1136 = vlaneseq
        %v1137 = vshrl.u32 %v1136, 7
        %v1138 = vsub.s32 %v1135, %v1137
        %v1139 = vrot.slane %v1125, %v1138
        %v1140 = vcombine.low %v1107, %v1123
        %v1141 = vcombine.high %v1107, %v1123
        %v1143 = vunpack.c.l.s4 1934713408
        %v1144 = vunpack.c.0.s8 %v1143
        %v1145 = vlaneseq
        %v1146 = vshrl.u32 %v1145, 7
        %v1147 = vsub.s32 %v1144, %v1146
        %v1148 = vrot.slane %v1140, %v1147
        %v1150 = vunpack.c.l.s4 1934713408
        %v1151 = vunpack.c.0.s8 %v1150
        %v1152 = vlaneseq
        %v1153 = vshrl.u32 %v1152, 7
        %v1154 = vsub.s32 %v1151, %v1153
        %v1155 = vrot.slane %v1141, %v1154
        %v1156 = vcombine.high %v1132, 0.0
        %v1157 = vcombine.high %v1139, 0.0
        %v1158 = vcombine.high %v1148, 0.0
        %v1159 = vcombine.high %v1155, 0.0
        %v1160 = vcombine.low %v1132, %v1139
        %v1162 = vunpack.c.l.s4 1983009808
        %v1163 = vunpack.c.0.s8 %v1162
        %v1164 = vlaneseq
        %v1165 = vshrl.u32 %v1164, 7
        %v1166 = vsub.s32 %v1163, %v1165
        %v1167 = vrot.slane %v1160, %v1166
        %v1168 = vcombine.low %v1156, %v1157
        %v1170 = vunpack.c.l.s4 1983009808
        %v1171 = vunpack.c.0.s8 %v1170
        %v1172 = vlaneseq
        %v1173 = vshrl.u32 %v1172, 7
        %v1174 = vsub.s32 %v1171, %v1173
        %v1175 = vrot.slane %v1168, %v1174
        %v1176 = vcombine.low %v1148, %v1155
        %v1178 = vunpack.c.l.s4 1983009808
        %v1179 = vunpack.c.0.s8 %v1178
        %v1180 = vlaneseq
        %v1181 = vshrl.u32 %v1180, 7
        %v1182 = vsub.s32 %v1179, %v1181
        %v1183 = vrot.slane %v1176, %v1182
        %v1184 = vcombine.low %v1158, %v1159
        %v1186 = vunpack.c.l.s4 1983009808
        %v1187 = vunpack.c.0.s8 %v1186
        %v1188 = vlaneseq
        %v1189 = vshrl.u32 %v1188, 7
        %v1190 = vsub.s32 %v1187, %v1189
        %v1191 = vrot.slane %v1184, %v1190
        %v1192 = vcombine.low %v1167, %v1175
        %v1193 = vcombine.high %v1167, %v1175
        %v1195 = vunpack.c.l.s4 1934713408
        %v1196 = vunpack.c.0.s8 %v1195
        %v1197 = vlaneseq
        %v1198 = vshrl.u32 %v1197, 7
        %v1199 = vsub.s32 %v1196, %v1198
        %v1200 = vrot.slane %v1192, %v1199
        %v1202 = vunpack.c.l.s4 1934713408
        %v1203 = vunpack.c.0.s8 %v1202
        %v1204 = vlaneseq
        %v1205 = vshrl.u32 %v1204, 7
        %v1206 = vsub.s32 %v1203, %v1205
        %v1207 = vrot.slane %v1193, %v1206
        %v1208 = vcombine.low %v1183, %v1191
        %v1209 = vcombine.high %v1183, %v1191
        %v1211 = vunpack.c.l.s4 1934713408
        %v1212 = vunpack.c.0.s8 %v1211
        %v1213 = vlaneseq
        %v1214 = vshrl.u32 %v1213, 7
        %v1215 = vsub.s32 %v1212, %v1214
        %v1216 = vrot.slane %v1208, %v1215
        %v1218 = vunpack.c.l.s4 1934713408
        %v1219 = vunpack.c.0.s8 %v1218
        %v1220 = vlaneseq
        %v1221 = vshrl.u32 %v1220, 7
        %v1222 = vsub.s32 %v1219, %v1221
        %v1223 = vrot.slane %v1209, %v1222
        %v1224 = vcombine.low %v1200, %v1216
        %v1225 = vcombine.high %v1200, %v1216
        %v1226 = vcombine.low %v1207, %v1223
        %v1227 = vcombine.high %v1207, %v1223
        %v1228 = vpack.c.bf16 %v1224, %v1224
        %v1229 = vpack.c.bf16 %v1225, %v1225
        %v1230 = vpack.c.bf16 %v1226, %v1226
        %v1231 = vpack.c.bf16 %v1227, %v1227
        %vm1232 = vcmask 64512
        %v1234 = vsel %vm1232, %v924, 0
        %v1237 = vsel %vm1232, %v1076, 0
        %1239 = vmatprep.subr.bf16.mxu0 0
        %1240 = vmatpush1.bf16.xpose.msra.mxu0 %v1237
        %1241 = vmatprep.subr.bf16.mxu0 0
        %1242 = vmatpush1.bf16.xpose.msra.mxu0 0
        %1243 = vmatprep.subr.bf16.mxu0 0
        %1244 = vmatpush1.bf16.xpose.msra.mxu0 0
        %1245 = vmatprep.subr.bf16.mxu0 0
        %1246 = vmatpush1.bf16.xpose.msra.mxu0 0
        %1247 = vmatprep.subr.bf16.mxu0 0
        %1248 = vmatpush1.bf16.xpose.msra.mxu0 0
        %1249 = vmatprep.subr.bf16.mxu0 0
        %1250 = vmatpush1.bf16.xpose.msra.mxu0 0
        %1251 = vmatprep.subr.bf16.mxu0 0
        %1252 = vmatpush1.bf16.xpose.msra.mxu0 0
        %1253 = vmatprep.subr.bf16.mxu0 0
        %1254 = vmatpush1.bf16.xpose.msra.mxu0 0
        %1255 = vmatprep.subr.bf16.mxu0 0
        %1256 = vmatpush1.bf16.xpose.msra.mxu0 0
        %1257 = vmatprep.subr.bf16.mxu0 0
        %1258 = vmatpush1.bf16.xpose.msra.mxu0 0
        %1259 = vmatprep.subr.bf16.mxu0 0
        %1260 = vmatpush1.bf16.xpose.msra.mxu0 0
        %1261 = vmatprep.subr.bf16.mxu0 0
        %1262 = vmatpush1.bf16.xpose.msra.mxu0 0
        %1263 = vmatprep.subr.bf16.mxu0 0
        %1264 = vmatpush1.bf16.xpose.msra.mxu0 0
        %1265 = vmatprep.subr.bf16.mxu0 0
        %1266 = vmatpush1.bf16.xpose.msra.mxu0 0
        %1267 = vmatprep.subr.bf16.mxu0 0
        %1268 = vmatpush1.bf16.xpose.msra.mxu0 0
        %1269 = vmatprep.subr.bf16.mxu0 0
        %1270 = vmatpush1.bf16.xpose.msra.mxu0 0
        %1271 = vmatprep.mubr.bf16.mxu0 0
        %1272 = vmatmul.mubr.bf16.gmra.mrb[0].mxu0 %v1234
        %v1273 = vpop.f32.mrb[0].mxu0
        %v1274 = vadd.f32 %v777, %v1273
        %v1275 = vpop.f32.mrb[0].mxu0
        %v1276 = vpop.f32.mrb[0].mxu0
        %v1277 = vpop.f32.mrb[0].mxu0
        %1278 = vdwg.mxu0
        %v1280 = vsel %vm1232, %v925, 0
        %v1283 = vsel %vm1232, %v1077, 0
        %1285 = vmatprep.subr.bf16.mxu0 0
        %1286 = vmatpush1.bf16.xpose.msra.mxu0 %v1283
        %1287 = vmatprep.subr.bf16.mxu0 0
        %1288 = vmatpush1.bf16.xpose.msra.mxu0 0
        %1289 = vmatprep.subr.bf16.mxu0 0
        %1290 = vmatpush1.bf16.xpose.msra.mxu0 0
        %1291 = vmatprep.subr.bf16.mxu0 0
        %1292 = vmatpush1.bf16.xpose.msra.mxu0 0
        %1293 = vmatprep.subr.bf16.mxu0 0
        %1294 = vmatpush1.bf16.xpose.msra.mxu0 0
        %1295 = vmatprep.subr.bf16.mxu0 0
        %1296 = vmatpush1.bf16.xpose.msra.mxu0 0
        %1297 = vmatprep.subr.bf16.mxu0 0
        %1298 = vmatpush1.bf16.xpose.msra.mxu0 0
        %1299 = vmatprep.subr.bf16.mxu0 0
        %1300 = vmatpush1.bf16.xpose.msra.mxu0 0
        %1301 = vmatprep.subr.bf16.mxu0 0
        %1302 = vmatpush1.bf16.xpose.msra.mxu0 0
        %1303 = vmatprep.subr.bf16.mxu0 0
        %1304 = vmatpush1.bf16.xpose.msra.mxu0 0
        %1305 = vmatprep.subr.bf16.mxu0 0
        %1306 = vmatpush1.bf16.xpose.msra.mxu0 0
        %1307 = vmatprep.subr.bf16.mxu0 0
        %1308 = vmatpush1.bf16.xpose.msra.mxu0 0
        %1309 = vmatprep.subr.bf16.mxu0 0
        %1310 = vmatpush1.bf16.xpose.msra.mxu0 0
        %1311 = vmatprep.subr.bf16.mxu0 0
        %1312 = vmatpush1.bf16.xpose.msra.mxu0 0
        %1313 = vmatprep.subr.bf16.mxu0 0
        %1314 = vmatpush1.bf16.xpose.msra.mxu0 0
        %1315 = vmatprep.subr.bf16.mxu0 0
        %1316 = vmatpush1.bf16.xpose.msra.mxu0 0
        %1317 = vmatprep.mubr.bf16.mxu0 0
        %1318 = vmatmul.mubr.bf16.gmra.mrb[0].mxu0 %v1280
        %v1319 = vpop.f32.mrb[0].mxu0
        %v1320 = vadd.f32 %v777, %v1319
        %v1321 = vpop.f32.mrb[0].mxu0
        %v1322 = vpop.f32.mrb[0].mxu0
        %v1323 = vpop.f32.mrb[0].mxu0
        %1324 = vdwg.mxu0
        %v1326 = vsel %vm1232, %v926, 0
        %v1329 = vsel %vm1232, %v1078, 0
        %1331 = vmatprep.subr.bf16.mxu0 0
        %1332 = vmatpush1.bf16.xpose.msra.mxu0 %v1329
        %1333 = vmatprep.subr.bf16.mxu0 0
        %1334 = vmatpush1.bf16.xpose.msra.mxu0 0
        %1335 = vmatprep.subr.bf16.mxu0 0
        %1336 = vmatpush1.bf16.xpose.msra.mxu0 0
        %1337 = vmatprep.subr.bf16.mxu0 0
        %1338 = vmatpush1.bf16.xpose.msra.mxu0 0
        %1339 = vmatprep.subr.bf16.mxu0 0
        %1340 = vmatpush1.bf16.xpose.msra.mxu0 0
        %1341 = vmatprep.subr.bf16.mxu0 0
        %1342 = vmatpush1.bf16.xpose.msra.mxu0 0
        %1343 = vmatprep.subr.bf16.mxu0 0
        %1344 = vmatpush1.bf16.xpose.msra.mxu0 0
        %1345 = vmatprep.subr.bf16.mxu0 0
        %1346 = vmatpush1.bf16.xpose.msra.mxu0 0
        %1347 = vmatprep.subr.bf16.mxu0 0
        %1348 = vmatpush1.bf16.xpose.msra.mxu0 0
        %1349 = vmatprep.subr.bf16.mxu0 0
        %1350 = vmatpush1.bf16.xpose.msra.mxu0 0
        %1351 = vmatprep.subr.bf16.mxu0 0
        %1352 = vmatpush1.bf16.xpose.msra.mxu0 0
        %1353 = vmatprep.subr.bf16.mxu0 0
        %1354 = vmatpush1.bf16.xpose.msra.mxu0 0
        %1355 = vmatprep.subr.bf16.mxu0 0
        %1356 = vmatpush1.bf16.xpose.msra.mxu0 0
        %1357 = vmatprep.subr.bf16.mxu0 0
        %1358 = vmatpush1.bf16.xpose.msra.mxu0 0
        %1359 = vmatprep.subr.bf16.mxu0 0
        %1360 = vmatpush1.bf16.xpose.msra.mxu0 0
        %1361 = vmatprep.subr.bf16.mxu0 0
        %1362 = vmatpush1.bf16.xpose.msra.mxu0 0
        %1363 = vmatprep.mubr.bf16.mxu0 0
        %1364 = vmatmul.mubr.bf16.gmra.mrb[0].mxu0 %v1326
        %v1365 = vpop.f32.mrb[0].mxu0
        %v1366 = vadd.f32 %v777, %v1365
        %v1367 = vpop.f32.mrb[0].mxu0
        %v1368 = vpop.f32.mrb[0].mxu0
        %v1369 = vpop.f32.mrb[0].mxu0
        %1370 = vdwg.mxu0
        %v1372 = vsel %vm1232, %v927, 0
        %v1375 = vsel %vm1232, %v1079, 0
        %1377 = vmatprep.subr.bf16.mxu0 0
        %1378 = vmatpush1.bf16.xpose.msra.mxu0 %v1375
        %1379 = vmatprep.subr.bf16.mxu0 0
        %1380 = vmatpush1.bf16.xpose.msra.mxu0 0
        %1381 = vmatprep.subr.bf16.mxu0 0
        %1382 = vmatpush1.bf16.xpose.msra.mxu0 0
        %1383 = vmatprep.subr.bf16.mxu0 0
        %1384 = vmatpush1.bf16.xpose.msra.mxu0 0
        %1385 = vmatprep.subr.bf16.mxu0 0
        %1386 = vmatpush1.bf16.xpose.msra.mxu0 0
        %1387 = vmatprep.subr.bf16.mxu0 0
        %1388 = vmatpush1.bf16.xpose.msra.mxu0 0
        %1389 = vmatprep.subr.bf16.mxu0 0
        %1390 = vmatpush1.bf16.xpose.msra.mxu0 0
        %1391 = vmatprep.subr.bf16.mxu0 0
        %1392 = vmatpush1.bf16.xpose.msra.mxu0 0
        %1393 = vmatprep.subr.bf16.mxu0 0
        %1394 = vmatpush1.bf16.xpose.msra.mxu0 0
        %1395 = vmatprep.subr.bf16.mxu0 0
        %1396 = vmatpush1.bf16.xpose.msra.mxu0 0
        %1397 = vmatprep.subr.bf16.mxu0 0
        %1398 = vmatpush1.bf16.xpose.msra.mxu0 0
        %1399 = vmatprep.subr.bf16.mxu0 0
        %1400 = vmatpush1.bf16.xpose.msra.mxu0 0
        %1401 = vmatprep.subr.bf16.mxu0 0
        %1402 = vmatpush1.bf16.xpose.msra.mxu0 0
        %1403 = vmatprep.subr.bf16.mxu0 0
        %1404 = vmatpush1.bf16.xpose.msra.mxu0 0
        %1405 = vmatprep.subr.bf16.mxu0 0
        %1406 = vmatpush1.bf16.xpose.msra.mxu0 0
        %1407 = vmatprep.subr.bf16.mxu0 0
        %1408 = vmatpush1.bf16.xpose.msra.mxu0 0
        %1409 = vmatprep.mubr.bf16.mxu0 0
        %1410 = vmatmul.mubr.bf16.gmra.mrb[0].mxu0 %v1372
        %v1411 = vpop.f32.mrb[0].mxu0
        %v1412 = vadd.f32 %v777, %v1411
        %v1413 = vpop.f32.mrb[0].mxu0
        %v1414 = vpop.f32.mrb[0].mxu0
        %v1415 = vpop.f32.mrb[0].mxu0
        %1416 = vdwg.mxu0
        %v1417 = vsel %vm1232, %v1274, -inf
        %1418 = vmax.xlane.f32.xlu0 %v1417
        %v1419 = vpop.xlane.xlu0 %1418
        %v1420 = vsel %vm1232, %v1320, -inf
        %1421 = vmax.xlane.f32.xlu0 %v1420
        %v1422 = vpop.xlane.xlu0 %1421
        %v1423 = vsel %vm1232, %v1366, -inf
        %1424 = vmax.xlane.f32.xlu0 %v1423
        %v1425 = vpop.xlane.xlu0 %1424
        %v1426 = vsel %vm1232, %v1412, -inf
        %1427 = vmax.xlane.f32.xlu0 %v1426
        %v1428 = vpop.xlane.xlu0 %1427
        %v1429 = vsub.f32 %v1274, %v1419
        %v1430 = vsub.f32 %v1320, %v1422
        %v1431 = vsub.f32 %v1366, %v1425
        %v1432 = vsub.f32 %v1412, %v1428
        %v1433 = vmul.f32 %v1429, 1.442695
        %v1434 = vpow.pop %v1433
        %v1435 = vmul.f32 %v1430, 1.442695
        %v1436 = vpow.pop %v1435
        %v1437 = vmul.f32 %v1431, 1.442695
        %v1438 = vpow.pop %v1437
        %v1439 = vmul.f32 %v1432, 1.442695
        %v1440 = vpow.pop %v1439
        %v1441 = vsel %vm1232, %v1434, 0.0
        %1442 = vadd.xlane.f32.xlu0 %v1441
        %v1443 = vpop.xlane.xlu0 %1442
        %v1444 = vsel %vm1232, %v1436, 0.0
        %1445 = vadd.xlane.f32.xlu0 %v1444
        %v1446 = vpop.xlane.xlu0 %1445
        %v1447 = vsel %vm1232, %v1438, 0.0
        %1448 = vadd.xlane.f32.xlu0 %v1447
        %v1449 = vpop.xlane.xlu0 %1448
        %v1450 = vsel %vm1232, %v1440, 0.0
        %1451 = vadd.xlane.f32.xlu0 %v1450
        %v1452 = vpop.xlane.xlu0 %1451
        %v1453 = vrcp.pop %v1443
        %v1454 = vrcp.pop %v1446
        %v1455 = vrcp.pop %v1449
        %v1456 = vrcp.pop %v1452
        %v1457 = vmul.f32 %v1434, %v1453
        %v1458 = vmul.f32 %v1436, %v1454
        %v1459 = vmul.f32 %v1438, %v1455
        %v1460 = vmul.f32 %v1440, %v1456
        %v1461 = vpack.c.bf16 %v1457, %v1457
        %v1462 = vpack.c.bf16 %v1458, %v1458
        %v1463 = vpack.c.bf16 %v1459, %v1459
        %v1464 = vpack.c.bf16 %v1460, %v1460
        %v1466 = vsel %vm1232, %v1461, 0
        %vm1468 = vcmask 1043456
        %v1470 = vsel %vm1468, %v1228, 0
        %1472 = vmatprep.subr.bf16.mxu0 0
        %1473 = vmatpush1.bf16.msra.mxu0 %v1470
        %1474 = vmatprep.subr.bf16.mxu0 0
        %1475 = vmatpush1.bf16.msra.mxu0 0
        %1476 = vmatprep.subr.bf16.mxu0 0
        %1477 = vmatpush1.bf16.msra.mxu0 0
        %1478 = vmatprep.subr.bf16.mxu0 0
        %1479 = vmatpush1.bf16.msra.mxu0 0
        %1480 = vmatprep.subr.bf16.mxu0 0
        %1481 = vmatpush1.bf16.msra.mxu0 0
        %1482 = vmatprep.subr.bf16.mxu0 0
        %1483 = vmatpush1.bf16.msra.mxu0 0
        %1484 = vmatprep.subr.bf16.mxu0 0
        %1485 = vmatpush1.bf16.msra.mxu0 0
        %1486 = vmatprep.subr.bf16.mxu0 0
        %1487 = vmatpush1.bf16.msra.mxu0 0
        %1488 = vmatprep.subr.bf16.mxu0 0
        %1489 = vmatpush1.bf16.msra.mxu0 0
        %1490 = vmatprep.subr.bf16.mxu0 0
        %1491 = vmatpush1.bf16.msra.mxu0 0
        %1492 = vmatprep.subr.bf16.mxu0 0
        %1493 = vmatpush1.bf16.msra.mxu0 0
        %1494 = vmatprep.subr.bf16.mxu0 0
        %1495 = vmatpush1.bf16.msra.mxu0 0
        %1496 = vmatprep.subr.bf16.mxu0 0
        %1497 = vmatpush1.bf16.msra.mxu0 0
        %1498 = vmatprep.subr.bf16.mxu0 0
        %1499 = vmatpush1.bf16.msra.mxu0 0
        %1500 = vmatprep.subr.bf16.mxu0 0
        %1501 = vmatpush1.bf16.msra.mxu0 0
        %1502 = vmatprep.subr.bf16.mxu0 0
        %1503 = vmatpush1.bf16.msra.mxu0 0
        %1504 = vmatprep.mubr.bf16.mxu0 0
        %1505 = vmatmul.mubr.bf16.gmra.mrb[0].mxu0 %v1466
        %v1506 = vpop.f32.mrb[0].mxu0
        %v1507 = vadd.f32 0.0, %v1506
        %v1508 = vpop.f32.mrb[0].mxu0
        %v1509 = vpop.f32.mrb[0].mxu0
        %v1510 = vpop.f32.mrb[0].mxu0
        %1511 = vdwg.mxu0
        %v1513 = vsel %vm1232, %v1462, 0
        %v1516 = vsel %vm1468, %v1229, 0
        %1518 = vmatprep.subr.bf16.mxu0 0
        %1519 = vmatpush1.bf16.msra.mxu0 %v1516
        %1520 = vmatprep.subr.bf16.mxu0 0
        %1521 = vmatpush1.bf16.msra.mxu0 0
        %1522 = vmatprep.subr.bf16.mxu0 0
        %1523 = vmatpush1.bf16.msra.mxu0 0
        %1524 = vmatprep.subr.bf16.mxu0 0
        %1525 = vmatpush1.bf16.msra.mxu0 0
        %1526 = vmatprep.subr.bf16.mxu0 0
        %1527 = vmatpush1.bf16.msra.mxu0 0
        %1528 = vmatprep.subr.bf16.mxu0 0
        %1529 = vmatpush1.bf16.msra.mxu0 0
        %1530 = vmatprep.subr.bf16.mxu0 0
        %1531 = vmatpush1.bf16.msra.mxu0 0
        %1532 = vmatprep.subr.bf16.mxu0 0
        %1533 = vmatpush1.bf16.msra.mxu0 0
        %1534 = vmatprep.subr.bf16.mxu0 0
        %1535 = vmatpush1.bf16.msra.mxu0 0
        %1536 = vmatprep.subr.bf16.mxu0 0
        %1537 = vmatpush1.bf16.msra.mxu0 0
        %1538 = vmatprep.subr.bf16.mxu0 0
        %1539 = vmatpush1.bf16.msra.mxu0 0
        %1540 = vmatprep.subr.bf16.mxu0 0
        %1541 = vmatpush1.bf16.msra.mxu0 0
        %1542 = vmatprep.subr.bf16.mxu0 0
        %1543 = vmatpush1.bf16.msra.mxu0 0
        %1544 = vmatprep.subr.bf16.mxu0 0
        %1545 = vmatpush1.bf16.msra.mxu0 0
        %1546 = vmatprep.subr.bf16.mxu0 0
        %1547 = vmatpush1.bf16.msra.mxu0 0
        %1548 = vmatprep.subr.bf16.mxu0 0
        %1549 = vmatpush1.bf16.msra.mxu0 0
        %1550 = vmatprep.mubr.bf16.mxu0 0
        %1551 = vmatmul.mubr.bf16.gmra.mrb[0].mxu0 %v1513
        %v1552 = vpop.f32.mrb[0].mxu0
        %v1553 = vadd.f32 0.0, %v1552
        %v1554 = vpop.f32.mrb[0].mxu0
        %v1555 = vpop.f32.mrb[0].mxu0
        %v1556 = vpop.f32.mrb[0].mxu0
        %1557 = vdwg.mxu0
        %v1559 = vsel %vm1232, %v1463, 0
        %v1562 = vsel %vm1468, %v1230, 0
        %1564 = vmatprep.subr.bf16.mxu0 0
        %1565 = vmatpush1.bf16.msra.mxu0 %v1562
        %1566 = vmatprep.subr.bf16.mxu0 0
        %1567 = vmatpush1.bf16.msra.mxu0 0
        %1568 = vmatprep.subr.bf16.mxu0 0
        %1569 = vmatpush1.bf16.msra.mxu0 0
        %1570 = vmatprep.subr.bf16.mxu0 0
        %1571 = vmatpush1.bf16.msra.mxu0 0
        %1572 = vmatprep.subr.bf16.mxu0 0
        %1573 = vmatpush1.bf16.msra.mxu0 0
        %1574 = vmatprep.subr.bf16.mxu0 0
        %1575 = vmatpush1.bf16.msra.mxu0 0
        %1576 = vmatprep.subr.bf16.mxu0 0
        %1577 = vmatpush1.bf16.msra.mxu0 0
        %1578 = vmatprep.subr.bf16.mxu0 0
        %1579 = vmatpush1.bf16.msra.mxu0 0
        %1580 = vmatprep.subr.bf16.mxu0 0
        %1581 = vmatpush1.bf16.msra.mxu0 0
        %1582 = vmatprep.subr.bf16.mxu0 0
        %1583 = vmatpush1.bf16.msra.mxu0 0
        %1584 = vmatprep.subr.bf16.mxu0 0
        %1585 = vmatpush1.bf16.msra.mxu0 0
        %1586 = vmatprep.subr.bf16.mxu0 0
        %1587 = vmatpush1.bf16.msra.mxu0 0
        %1588 = vmatprep.subr.bf16.mxu0 0
        %1589 = vmatpush1.bf16.msra.mxu0 0
        %1590 = vmatprep.subr.bf16.mxu0 0
        %1591 = vmatpush1.bf16.msra.mxu0 0
        %1592 = vmatprep.subr.bf16.mxu0 0
        %1593 = vmatpush1.bf16.msra.mxu0 0
        %1594 = vmatprep.subr.bf16.mxu0 0
        %1595 = vmatpush1.bf16.msra.mxu0 0
        %1596 = vmatprep.mubr.bf16.mxu0 0
        %1597 = vmatmul.mubr.bf16.gmra.mrb[0].mxu0 %v1559
        %v1598 = vpop.f32.mrb[0].mxu0
        %v1599 = vadd.f32 0.0, %v1598
        %v1600 = vpop.f32.mrb[0].mxu0
        %v1601 = vpop.f32.mrb[0].mxu0
        %v1602 = vpop.f32.mrb[0].mxu0
        %1603 = vdwg.mxu0
        %v1605 = vsel %vm1232, %v1464, 0
        %v1608 = vsel %vm1468, %v1231, 0
        %1610 = vmatprep.subr.bf16.mxu0 0
        %1611 = vmatpush1.bf16.msra.mxu0 %v1608
        %1612 = vmatprep.subr.bf16.mxu0 0
        %1613 = vmatpush1.bf16.msra.mxu0 0
        %1614 = vmatprep.subr.bf16.mxu0 0
        %1615 = vmatpush1.bf16.msra.mxu0 0
        %1616 = vmatprep.subr.bf16.mxu0 0
        %1617 = vmatpush1.bf16.msra.mxu0 0
        %1618 = vmatprep.subr.bf16.mxu0 0
        %1619 = vmatpush1.bf16.msra.mxu0 0
        %1620 = vmatprep.subr.bf16.mxu0 0
        %1621 = vmatpush1.bf16.msra.mxu0 0
        %1622 = vmatprep.subr.bf16.mxu0 0
        %1623 = vmatpush1.bf16.msra.mxu0 0
        %1624 = vmatprep.subr.bf16.mxu0 0
        %1625 = vmatpush1.bf16.msra.mxu0 0
        %1626 = vmatprep.subr.bf16.mxu0 0
        %1627 = vmatpush1.bf16.msra.mxu0 0
        %1628 = vmatprep.subr.bf16.mxu0 0
        %1629 = vmatpush1.bf16.msra.mxu0 0
        %1630 = vmatprep.subr.bf16.mxu0 0
        %1631 = vmatpush1.bf16.msra.mxu0 0
        %1632 = vmatprep.subr.bf16.mxu0 0
        %1633 = vmatpush1.bf16.msra.mxu0 0
        %1634 = vmatprep.subr.bf16.mxu0 0
        %1635 = vmatpush1.bf16.msra.mxu0 0
        %1636 = vmatprep.subr.bf16.mxu0 0
        %1637 = vmatpush1.bf16.msra.mxu0 0
        %1638 = vmatprep.subr.bf16.mxu0 0
        %1639 = vmatpush1.bf16.msra.mxu0 0
        %1640 = vmatprep.subr.bf16.mxu0 0
        %1641 = vmatpush1.bf16.msra.mxu0 0
        %1642 = vmatprep.mubr.bf16.mxu0 0
        %1643 = vmatmul.mubr.bf16.gmra.mrb[0].mxu0 %v1605
        %v1644 = vpop.f32.mrb[0].mxu0
        %v1645 = vadd.f32 0.0, %v1644
        %v1646 = vpop.f32.mrb[0].mxu0
        %v1647 = vpop.f32.mrb[0].mxu0
        %v1648 = vpop.f32.mrb[0].mxu0
        %1649 = vdwg.mxu0
        %v1650 = vcombine.low %v1507, %v1599
        %v1651 = vcombine.high %v1507, %v1599
        %v1653 = vunpack.c.l.s4 1983009808
        %v1654 = vunpack.c.0.s8 %v1653
        %v1655 = vlaneseq
        %v1656 = vshrl.u32 %v1655, 7
        %v1657 = vsub.s32 %v1654, %v1656
        %v1658 = vrot.slane %v1650, %v1657
        %v1660 = vunpack.c.l.s4 1983009808
        %v1661 = vunpack.c.0.s8 %v1660
        %v1662 = vlaneseq
        %v1663 = vshrl.u32 %v1662, 7
        %v1664 = vsub.s32 %v1661, %v1663
        %v1665 = vrot.slane %v1651, %v1664
        %v1666 = vcombine.low %v1553, %v1645
        %v1667 = vcombine.high %v1553, %v1645
        %v1669 = vunpack.c.l.s4 1983009808
        %v1670 = vunpack.c.0.s8 %v1669
        %v1671 = vlaneseq
        %v1672 = vshrl.u32 %v1671, 7
        %v1673 = vsub.s32 %v1670, %v1672
        %v1674 = vrot.slane %v1666, %v1673
        %v1676 = vunpack.c.l.s4 1983009808
        %v1677 = vunpack.c.0.s8 %v1676
        %v1678 = vlaneseq
        %v1679 = vshrl.u32 %v1678, 7
        %v1680 = vsub.s32 %v1677, %v1679
        %v1681 = vrot.slane %v1667, %v1680
        %v1682 = vcombine.low %v1658, %v1674
        %v1683 = vcombine.high %v1658, %v1674
        %v1685 = vunpack.c.l.s4 1934713408
        %v1686 = vunpack.c.0.s8 %v1685
        %v1687 = vlaneseq
        %v1688 = vshrl.u32 %v1687, 7
        %v1689 = vsub.s32 %v1686, %v1688
        %v1690 = vrot.slane %v1682, %v1689
        %v1692 = vunpack.c.l.s4 1934713408
        %v1693 = vunpack.c.0.s8 %v1692
        %v1694 = vlaneseq
        %v1695 = vshrl.u32 %v1694, 7
        %v1696 = vsub.s32 %v1693, %v1695
        %v1697 = vrot.slane %v1683, %v1696
        %v1698 = vcombine.low %v1665, %v1681
        %v1699 = vcombine.high %v1665, %v1681
        %v1701 = vunpack.c.l.s4 1934713408
        %v1702 = vunpack.c.0.s8 %v1701
        %v1703 = vlaneseq
        %v1704 = vshrl.u32 %v1703, 7
        %v1705 = vsub.s32 %v1702, %v1704
        %v1706 = vrot.slane %v1698, %v1705
        %v1708 = vunpack.c.l.s4 1934713408
        %v1709 = vunpack.c.0.s8 %v1708
        %v1710 = vlaneseq
        %v1711 = vshrl.u32 %v1710, 7
        %v1712 = vsub.s32 %v1709, %v1711
        %v1713 = vrot.slane %v1699, %v1712
        %v1714 = vcombine.high %v1690, 0.0
        %v1715 = vcombine.high %v1697, 0.0
        %v1716 = vcombine.high %v1706, 0.0
        %v1717 = vcombine.high %v1713, 0.0
        %v1718 = vcombine.low %v1690, %v1697
        %v1720 = vunpack.c.l.s4 1983009808
        %v1721 = vunpack.c.0.s8 %v1720
        %v1722 = vlaneseq
        %v1723 = vshrl.u32 %v1722, 7
        %v1724 = vsub.s32 %v1721, %v1723
        %v1725 = vrot.slane %v1718, %v1724
        %v1726 = vcombine.low %v1714, %v1715
        %v1728 = vunpack.c.l.s4 1983009808
        %v1729 = vunpack.c.0.s8 %v1728
        %v1730 = vlaneseq
        %v1731 = vshrl.u32 %v1730, 7
        %v1732 = vsub.s32 %v1729, %v1731
        %v1733 = vrot.slane %v1726, %v1732
        %v1734 = vcombine.low %v1706, %v1713
        %v1736 = vunpack.c.l.s4 1983009808
        %v1737 = vunpack.c.0.s8 %v1736
        %v1738 = vlaneseq
        %v1739 = vshrl.u32 %v1738, 7
        %v1740 = vsub.s32 %v1737, %v1739
        %v1741 = vrot.slane %v1734, %v1740
        %v1742 = vcombine.low %v1716, %v1717
        %v1744 = vunpack.c.l.s4 1983009808
        %v1745 = vunpack.c.0.s8 %v1744
        %v1746 = vlaneseq
        %v1747 = vshrl.u32 %v1746, 7
        %v1748 = vsub.s32 %v1745, %v1747
        %v1749 = vrot.slane %v1742, %v1748
        %v1750 = vcombine.low %v1725, %v1733
        %v1751 = vcombine.high %v1725, %v1733
        %v1753 = vunpack.c.l.s4 1934713408
        %v1754 = vunpack.c.0.s8 %v1753
        %v1755 = vlaneseq
        %v1756 = vshrl.u32 %v1755, 7
        %v1757 = vsub.s32 %v1754, %v1756
        %v1758 = vrot.slane %v1750, %v1757
        %v1760 = vunpack.c.l.s4 1934713408
        %v1761 = vunpack.c.0.s8 %v1760
        %v1762 = vlaneseq
        %v1763 = vshrl.u32 %v1762, 7
        %v1764 = vsub.s32 %v1761, %v1763
        %v1765 = vrot.slane %v1751, %v1764
        %v1766 = vcombine.low %v1741, %v1749
        %v1767 = vcombine.high %v1741, %v1749
        %v1769 = vunpack.c.l.s4 1934713408
        %v1770 = vunpack.c.0.s8 %v1769
        %v1771 = vlaneseq
        %v1772 = vshrl.u32 %v1771, 7
        %v1773 = vsub.s32 %v1770, %v1772
        %v1774 = vrot.slane %v1766, %v1773
        %v1776 = vunpack.c.l.s4 1934713408
        %v1777 = vunpack.c.0.s8 %v1776
        %v1778 = vlaneseq
        %v1779 = vshrl.u32 %v1778, 7
        %v1780 = vsub.s32 %v1777, %v1779
        %v1781 = vrot.slane %v1767, %v1780
        %v1782 = vcombine.low %v1758, %v1774
        %v1783 = vcombine.high %v1758, %v1774
        %v1784 = vcombine.low %v1765, %v1781
        %v1785 = vcombine.high %v1765, %v1781
        %1787 = vrot.lane.b32.xlu0 %v1783, 8
        %v1788 = vpop.permute.xlu0 %1787
        %1791 = vrot.lane.b32.xlu0 %v1784, 16
        %v1792 = vpop.permute.xlu0 %1791
        %1795 = vrot.lane.b32.xlu0 %v1785, 24
        %v1796 = vpop.permute.xlu0 %1795
        %v1798 = vsel %vm1232, %v1782, %v1788
        %vm1799 = vcmask 130048
        %v1800 = vsel %vm1799, %v1798, %v1792
        %vm1801 = vcmask 195584
        %v1802 = vsel %vm1801, %v1800, %v1796
        %v1803 = vpack.c.bf16 %v1802, %v1802
        %v1804 = vld [vmem:[#allocation13] sm:$0xf]
        %v1805 = vld [vmem:[#allocation13 + $0x4] sm:$0xf]
        %v1806 = vld [vmem:[#allocation13 + $0x8] sm:$0xf]
        %v1807 = vld [vmem:[#allocation13 + $0xc] sm:$0xf]
        %v1808 = vld [vmem:[#allocation14] sm:$0x1]
        %v1810 = vlaneseq
        %v1811 = vshrl.u32 %v1810, 7
        %v1812 = vsub.s32 0, %v1811
        %v1813 = vrot.slane %v1808, %v1812
        %v1819 = vunpack.c.l.b16 %v1804
        %v1820 = vunpack.c.l.b16 %v1805
        %v1821 = vunpack.c.l.b16 %v1806
        %v1822 = vunpack.c.l.b16 %v1807
        %v1823 = vpack.c.b16 %v1820, %v1819
        %v1824 = vpack.c.b16 %v1822, %v1821
        %v1828 = vsel %vm681, %v1803, 0
        %1830 = vmatprep.subr.bf16.mxu0 0
        %1831 = vmatpush1.bf16.msra.mxu0 %v1823
        %1832 = vmatprep.subr.bf16.mxu0 0
        %1833 = vmatpush1.bf16.msra.mxu0 %v1824
        %1834 = vmatprep.subr.bf16.mxu0 0
        %1835 = vmatpush1.bf16.msra.mxu0 0
        %1836 = vmatprep.subr.bf16.mxu0 0
        %1837 = vmatpush1.bf16.msra.mxu0 0
        %1838 = vmatprep.subr.bf16.mxu0 0
        %1839 = vmatpush1.bf16.msra.mxu0 0
        %1840 = vmatprep.subr.bf16.mxu0 0
        %1841 = vmatpush1.bf16.msra.mxu0 0
        %1842 = vmatprep.subr.bf16.mxu0 0
        %1843 = vmatpush1.bf16.msra.mxu0 0
        %1844 = vmatprep.subr.bf16.mxu0 0
        %1845 = vmatpush1.bf16.msra.mxu0 0
        %1846 = vmatprep.subr.bf16.mxu0 0
        %1847 = vmatpush1.bf16.msra.mxu0 0
        %1848 = vmatprep.subr.bf16.mxu0 0
        %1849 = vmatpush1.bf16.msra.mxu0 0
        %1850 = vmatprep.subr.bf16.mxu0 0
        %1851 = vmatpush1.bf16.msra.mxu0 0
        %1852 = vmatprep.subr.bf16.mxu0 0
        %1853 = vmatpush1.bf16.msra.mxu0 0
        %1854 = vmatprep.subr.bf16.mxu0 0
        %1855 = vmatpush1.bf16.msra.mxu0 0
        %1856 = vmatprep.subr.bf16.mxu0 0
        %1857 = vmatpush1.bf16.msra.mxu0 0
        %1858 = vmatprep.subr.bf16.mxu0 0
        %1859 = vmatpush1.bf16.msra.mxu0 0
        %1860 = vmatprep.subr.bf16.mxu0 0
        %1861 = vmatpush1.bf16.msra.mxu0 0
        %1862 = vmatprep.mubr.bf16.mxu0 0
        %1863 = vmatmul.mubr.bf16.gmra.mrb[0].mxu0 %v1828
        %v1864 = vpop.f32.mrb[0].mxu0
        %v1865 = vadd.f32 %v1813, %v1864
        %v1866 = vpop.f32.mrb[0].mxu0
        %v1867 = vpop.f32.mrb[0].mxu0
        %v1868 = vpop.f32.mrb[0].mxu0
        %1869 = vdwg.mxu0
        %v1870 = vadd.f32 %v1865, %v680
        %v1871 = vld [vmem:[#allocation16] sm:$0x1]
        %v1872 = vld [vmem:[#allocation17] sm:$0x1]
        %v1873 = vsel %vm681, %v1870, 0.0
        %1874 = vadd.xlane.f32.xlu0 %v1873
        %v1875 = vpop.xlane.xlu0 %1874
        %v1876 = vmul.f32 %v1875, %v685
        %v1877 = vsub.f32 %v1870, %v1876
        %v1878 = vmul.f32 %v1877, %v1877
        %v1879 = vsel %vm681, %v1878, 0.0
        %1880 = vadd.xlane.f32.xlu0 %v1879
        %v1881 = vpop.xlane.xlu0 %1880
        %v1882 = vmul.f32 %v1881, %v685
        %v1883 = vadd.f32 %v1882, 1e-05
        %v1884 = vrsqrt.pop %v1883
        %v1885 = vmul.f32 %v1877, %v1884
        %v1887 = vlaneseq
        %v1888 = vshrl.u32 %v1887, 7
        %v1889 = vsub.s32 0, %v1888
        %v1890 = vrot.slane %v1871, %v1889
        %v1892 = vmul.f32 %v1885, %v1890
        %v1894 = vlaneseq
        %v1895 = vshrl.u32 %v1894, 7
        %v1896 = vsub.s32 0, %v1895
        %v1897 = vrot.slane %v1872, %v1896
        %v1899 = vadd.f32 %v1892, %v1897
        %v1900 = vpack.c.bf16 %v1899, %v1899
        %v1901 = vld [vmem:[#allocation19] sm:$0xf]
        %v1902 = vld [vmem:[#allocation19 + $0x4] sm:$0xf]
        %v1903 = vld [vmem:[#allocation19 + $0x8] sm:$0xf]
        %v1904 = vld [vmem:[#allocation19 + $0xc] sm:$0xf]
        %v1905 = vld [vmem:[#allocation20] sm:$0x1]
        %v1907 = vlaneseq
        %v1908 = vshrl.u32 %v1907, 7
        %v1909 = vsub.s32 0, %v1908
        %v1910 = vrot.slane %v1905, %v1909
        %v1916 = vunpack.c.l.b16 %v1901
        %v1917 = vunpack.c.l.b16 %v1902
        %v1918 = vunpack.c.l.b16 %v1903
        %v1919 = vunpack.c.l.b16 %v1904
        %v1920 = vpack.c.b16 %v1917, %v1916
        %v1921 = vpack.c.b16 %v1919, %v1918
        %v1925 = vsel %vm681, %v1900, 0
        %1927 = vmatprep.subr.bf16.mxu0 0
        %1928 = vmatpush1.bf16.msra.mxu0 %v1920
        %1929 = vmatprep.subr.bf16.mxu0 0
        %1930 = vmatpush1.bf16.msra.mxu0 %v1921
        %1931 = vmatprep.subr.bf16.mxu0 0
        %1932 = vmatpush1.bf16.msra.mxu0 0
        %1933 = vmatprep.subr.bf16.mxu0 0
        %1934 = vmatpush1.bf16.msra.mxu0 0
        %1935 = vmatprep.subr.bf16.mxu0 0
        %1936 = vmatpush1.bf16.msra.mxu0 0
        %1937 = vmatprep.subr.bf16.mxu0 0
        %1938 = vmatpush1.bf16.msra.mxu0 0
        %1939 = vmatprep.subr.bf16.mxu0 0
        %1940 = vmatpush1.bf16.msra.mxu0 0
        %1941 = vmatprep.subr.bf16.mxu0 0
        %1942 = vmatpush1.bf16.msra.mxu0 0
        %1943 = vmatprep.subr.bf16.mxu0 0
        %1944 = vmatpush1.bf16.msra.mxu0 0
        %1945 = vmatprep.subr.bf16.mxu0 0
        %1946 = vmatpush1.bf16.msra.mxu0 0
        %1947 = vmatprep.subr.bf16.mxu0 0
        %1948 = vmatpush1.bf16.msra.mxu0 0
        %1949 = vmatprep.subr.bf16.mxu0 0
        %1950 = vmatpush1.bf16.msra.mxu0 0
        %1951 = vmatprep.subr.bf16.mxu0 0
        %1952 = vmatpush1.bf16.msra.mxu0 0
        %1953 = vmatprep.subr.bf16.mxu0 0
        %1954 = vmatpush1.bf16.msra.mxu0 0
        %1955 = vmatprep.subr.bf16.mxu0 0
        %1956 = vmatpush1.bf16.msra.mxu0 0
        %1957 = vmatprep.subr.bf16.mxu0 0
        %1958 = vmatpush1.bf16.msra.mxu0 0
        %1959 = vmatprep.mubr.bf16.mxu0 0
        %1960 = vmatmul.mubr.bf16.gmra.mrb[0].mxu0 %v1925
        %v1961 = vpop.f32.mrb[0].mxu0
        %v1962 = vadd.f32 %v1910, %v1961
        %v1963 = vpop.f32.mrb[0].mxu0
        %v1964 = vpop.f32.mrb[0].mxu0
        %v1965 = vpop.f32.mrb[0].mxu0
        %1966 = vdwg.mxu0
        %v1967 = vpack.c.bf16 %v1962, %v1962
        %v1968 = vmul.bf16 %v1967, 1071267802
        %v1969 = vxor.u32 %v1968, 2147516416
        %v1971 = vmul.bf16 %v1969, 1069105081
        %v1972 = vpow.bf16.pop %v1971
        %v1973 = vadd.bf16 %v1972, 1065369472
        %v1974 = vrcp.bf16.pop %v1973
        %v1975 = vmul.bf16 1065369472, %v1974
        %v1976 = vmul.bf16 %v1967, %v1975
        %v1977 = vld [vmem:[#allocation22] sm:$0xf]
        %v1978 = vld [vmem:[#allocation22 + $0x4] sm:$0xf]
        %v1979 = vld [vmem:[#allocation22 + $0x8] sm:$0xf]
        %v1980 = vld [vmem:[#allocation22 + $0xc] sm:$0xf]
        %v1981 = vld [vmem:[#allocation22 + $0x10] sm:$0xf]
        %v1982 = vld [vmem:[#allocation22 + $0x14] sm:$0xf]
        %v1983 = vld [vmem:[#allocation22 + $0x18] sm:$0xf]
        %v1984 = vld [vmem:[#allocation22 + $0x1c] sm:$0xf]
        %v1985 = vld [vmem:[#allocation22 + $0x20] sm:$0xf]
        %v1986 = vld [vmem:[#allocation22 + $0x24] sm:$0xf]
        %v1987 = vld [vmem:[#allocation22 + $0x28] sm:$0xf]
        %v1988 = vld [vmem:[#allocation22 + $0x2c] sm:$0xf]
        %v1989 = vld [vmem:[#allocation22 + $0x30] sm:$0xf]
        %v1990 = vld [vmem:[#allocation22 + $0x34] sm:$0xf]
        %v1991 = vld [vmem:[#allocation22 + $0x38] sm:$0xf]
        %v1992 = vld [vmem:[#allocation22 + $0x3c] sm:$0xf]
        %v1993 = vld [vmem:[#allocation23] sm:$0x1]
        %v1995 = vlaneseq
        %v1996 = vshrl.u32 %v1995, 7
        %v1997 = vsub.s32 0, %v1996
        %v1998 = vrot.slane %v1993, %v1997
        %v2016 = vunpack.c.l.b16 %v1977
        %v2017 = vunpack.c.l.b16 %v1978
        %v2018 = vunpack.c.l.b16 %v1979
        %v2019 = vunpack.c.l.b16 %v1980
        %v2020 = vunpack.c.l.b16 %v1981
        %v2021 = vunpack.c.l.b16 %v1982
        %v2022 = vunpack.c.l.b16 %v1983
        %v2023 = vunpack.c.l.b16 %v1984
        %v2024 = vunpack.c.l.b16 %v1985
        %v2025 = vunpack.c.l.b16 %v1986
        %v2026 = vunpack.c.l.b16 %v1987
        %v2027 = vunpack.c.l.b16 %v1988
        %v2028 = vunpack.c.l.b16 %v1989
        %v2029 = vunpack.c.l.b16 %v1990
        %v2030 = vunpack.c.l.b16 %v1991
        %v2031 = vunpack.c.l.b16 %v1992
        %v2032 = vpack.c.b16 %v2017, %v2016
        %v2033 = vpack.c.b16 %v2019, %v2018
        %v2034 = vpack.c.b16 %v2021, %v2020
        %v2035 = vpack.c.b16 %v2023, %v2022
        %v2036 = vpack.c.b16 %v2025, %v2024
        %v2037 = vpack.c.b16 %v2027, %v2026
        %v2038 = vpack.c.b16 %v2029, %v2028
        %v2039 = vpack.c.b16 %v2031, %v2030
        %2048 = vmatprep.subr.bf16.mxu0 0
        %2049 = vmatpush1.bf16.msra.mxu0 %v2032
        %2050 = vmatprep.subr.bf16.mxu0 0
        %2051 = vmatpush1.bf16.msra.mxu0 %v2033
        %2052 = vmatprep.subr.bf16.mxu0 0
        %2053 = vmatpush1.bf16.msra.mxu0 %v2034
        %2054 = vmatprep.subr.bf16.mxu0 0
        %2055 = vmatpush1.bf16.msra.mxu0 %v2035
        %2056 = vmatprep.subr.bf16.mxu0 0
        %2057 = vmatpush1.bf16.msra.mxu0 %v2036
        %2058 = vmatprep.subr.bf16.mxu0 0
        %2059 = vmatpush1.bf16.msra.mxu0 %v2037
        %2060 = vmatprep.subr.bf16.mxu0 0
        %2061 = vmatpush1.bf16.msra.mxu0 %v2038
        %2062 = vmatprep.subr.bf16.mxu0 0
        %2063 = vmatpush1.bf16.msra.mxu0 %v2039
        %2064 = vmatprep.subr.bf16.mxu0 0
        %2065 = vmatpush1.bf16.msra.mxu0 0
        %2066 = vmatprep.subr.bf16.mxu0 0
        %2067 = vmatpush1.bf16.msra.mxu0 0
        %2068 = vmatprep.subr.bf16.mxu0 0
        %2069 = vmatpush1.bf16.msra.mxu0 0
        %2070 = vmatprep.subr.bf16.mxu0 0
        %2071 = vmatpush1.bf16.msra.mxu0 0
        %2072 = vmatprep.subr.bf16.mxu0 0
        %2073 = vmatpush1.bf16.msra.mxu0 0
        %2074 = vmatprep.subr.bf16.mxu0 0
        %2075 = vmatpush1.bf16.msra.mxu0 0
        %2076 = vmatprep.subr.bf16.mxu0 0
        %2077 = vmatpush1.bf16.msra.mxu0 0
        %2078 = vmatprep.subr.bf16.mxu0 0
        %2079 = vmatpush1.bf16.msra.mxu0 0
        %2080 = vmatprep.mubr.bf16.mxu0 0
        %2081 = vmatmul.mubr.bf16.gmra.mrb[0].mxu0 %v1976
        %v2082 = vpop.f32.mrb[0].mxu0
        %v2083 = vadd.f32 %v1998, %v2082
        %v2084 = vpop.f32.mrb[0].mxu0
        %v2085 = vpop.f32.mrb[0].mxu0
        %v2086 = vpop.f32.mrb[0].mxu0
        %2087 = vdwg.mxu0
        %v2088 = vadd.f32 %v2083, %v1870
        %2089 = vst.msk [vmem:[%s674] sm:$0xff] %vm681, %v2088
        %s2090 = sand.u32 %s364, 1
        %s2091 = scalar_lea.sflag [#allocation4], %s2090
        %s2092 = sand.u32 %s364, 1
        %s2093 = smul.addr %s2092, 8
        %s2094 = scalar_lea.vmem [#allocation25], %s2093
        // Predicated region
        $region133: #{tpu_custom_call.1} parent=75 // pred_check
          %p2095 = pneg %p374
        $region134: #{tpu_custom_call.1} parent=75 // pred_check_branch
          %2097 = sbr.rel (%p2095) target = $region136
        $region135: #{tpu_custom_call.1} parent=75 // pred_region
          %s2099 = ssub.s32 128, 128
          %2100 = vsyncadd %s2091, %s2099
          %s2101 = sadd.s32 %s43, %s42
          %s2102 = smul.addr %s2101, 128
          %s2103 = scalar_lea.hbm %s14, %s2102
          %s2105 = sshll.u32 %s2094, 4
          %s2106 = int_to_ptr.vmem [resolvable:$true] %s2105
          %2108 = dma.vmem_to_hbm [thread:$0]  %s2106, 128, %s2103, %s2091
        $region136: #{tpu_custom_call.1} parent=75 // pred_fallthru
          _
      $region76: #{tpu_custom_call.1} parent=5 // pred_fallthru
        _
      %p2109 = scmp.le.s32.totalorder 2, %s33
      // Predicated region
      $region137: #{tpu_custom_call.1} parent=5 // pred_check
        %p2110 = pneg %p2109
      $region138: #{tpu_custom_call.1} parent=5 // pred_check_branch
        %2112 = sbr.rel (%p2110) target = $region140
      $region139: #{tpu_custom_call.1} parent=5 // pred_region
        %s2113 = ssub.s32 %s33, 2
        // Predicated region
        $region141: #{tpu_custom_call.1} parent=139 // pred_check
          %p2114 = pneg %p380
        $region142: #{tpu_custom_call.1} parent=139 // pred_check_branch
          %2116 = sbr.rel (%p2114) target = $region144
        $region143: #{tpu_custom_call.1} parent=139 // pred_region
          %s2117 = sand.u32 %s365, 1
          %s2118 = scalar_lea.sflag [#allocation4], %s2117
          %s2119 = sand.u32 %s365, 1
          %s2120 = smul.addr %s2119, 8
          %s2121 = scalar_lea.vmem [#allocation25], %s2120
          %2122 = dma.done %s2118, 128
        $region144: #{tpu_custom_call.1} parent=139 // pred_fallthru
          _
      $region140: #{tpu_custom_call.1} parent=5 // pred_fallthru
        _
    $region6: #{tpu_custom_call.1} parent=1 // loop_footer
      %s37 = sadd.s32 1, %s33
    $region7: #{tpu_custom_call.1} parent=1 // loop_footer_branch
      %32 = sbr.rel target = $region3
    $region8: #{tpu_custom_call.1} parent=1 // loop_exit
      _
    %2123 = vsyncpa [#allocation3], 1
    %s2124 = scalar_lea.sflag [#allocation3], 1
    %2125 = vsyncpa %s2124, 1
    %2126 = vsyncpa [#allocation6], 1
    %2127 = vsyncpa [#allocation9], 1
    %2128 = vsyncpa [#allocation12], 1
    %2129 = vsyncpa [#allocation15], 1
    %2130 = vsyncpa [#allocation18], 1
    %2131 = vsyncpa [#allocation21], 1
    %2132 = vsyncpa [#allocation24], 1
    %2133 = vsyncpa [#allocation4], 1
    %s2134 = scalar_lea.sflag [#allocation4], 1
    %2135 = vsyncpa %s2134, 1

// kernel: tpu_custom_call.1
$region0: #{tpu_custom_call.1}
  #allocation0 [shape = 'u32[]', space=smem, size = 0x4, offset = 0x4, fixed_abs, tag = 'smem constant byte address 0x4 - core index']
  #allocation1 [shape = 'u32[144,128]{1,0:T(1,128)}', space=vmem, size = 0x12000, scoped, tag = 'internal scratch']
  %s0 = inlined_call_operand.hbm [shape: f32[2,8,32], index: 0, kind: input, shape index: {}]
  %s1 = inlined_call_operand.hbm [shape: f32[8,8], index: 1, kind: input, shape index: {}]
  %s2 = inlined_call_operand.hbm [shape: f32[1,32], index: 2, kind: input, shape index: {}]
  %s3 = inlined_call_operand.hbm [shape: f32[1,32], index: 3, kind: input, shape index: {}]
  %s4 = inlined_call_operand.hbm [shape: bf16[32,96], index: 4, kind: input, shape index: {}]
  %s5 = inlined_call_operand.hbm [shape: f32[1,96], index: 5, kind: input, shape index: {}]
  %s6 = inlined_call_operand.hbm [shape: bf16[32,32], index: 6, kind: input, shape index: {}]
  %s7 = inlined_call_operand.hbm [shape: f32[1,32], index: 7, kind: input, shape index: {}]
  %s8 = inlined_call_operand.hbm [shape: f32[1,32], index: 8, kind: input, shape index: {}]
  %s9 = inlined_call_operand.hbm [shape: f32[1,32], index: 9, kind: input, shape index: {}]
  %s10 = inlined_call_operand.hbm [shape: bf16[32,128], index: 10, kind: input, shape index: {}]
  %s11 = inlined_call_operand.hbm [shape: f32[1,128], index: 11, kind: input, shape index: {}]
  %s12 = inlined_call_operand.hbm [shape: bf16[128,32], index: 12, kind: input, shape index: {}]
  %s13 = inlined_call_operand.hbm [shape: f32[1,32], index: 13, kind: input, shape index: {}]
  %s14 = inlined_call_operand.hbm [shape: f32[2,8,32], index: 14, kind: output, shape index: {}]
  %s15 = sld [smem:[#allocation0]]
  $region145: #{tpu_custom_call.1} parent=0
    _
  %s17 = ssub.s32 1, %s15
  %s18 = scalar_select 0, %s17, %s15
  $region1: #{tpu_custom_call.1} parent=0
    #allocation2 [shape = 'u8[8192]{0}', space=vmem, size = 0x2000, scoped, tag = 'input window, operand 0']
    #allocation3 [shape = 's32[2]{0}', space=sflag, size = 0x8, scoped, tag = 'scoped memory for tpu_custom_call.1']
    #allocation4 [shape = 's32[2]{0}', space=sflag, size = 0x8, scoped, tag = 'scoped memory for tpu_custom_call.1']
    #allocation5 [shape = 'u8[4096]{0}', space=vmem, size = 0x1000, scoped, tag = 'input window, operand 1, single buffered']
    #allocation6 [shape = 's32[1]{0}', space=sflag, size = 0x4, scoped, tag = 'scoped memory for tpu_custom_call.1']
    #allocation7 [shape = 'u8[512]{0}', space=vmem, size = 0x400, scoped, tag = 'input window, operand 2, single buffered']
    #allocation8 [shape = 'u8[512]{0}', space=vmem, size = 0x400, scoped, tag = 'input window, operand 3, single buffered']
    #allocation9 [shape = 's32[1]{0}', space=sflag, size = 0x4, scoped, tag = 'scoped memory for tpu_custom_call.1']
    #allocation10 [shape = 'u8[8192]{0}', space=vmem, size = 0x2000, scoped, tag = 'input window, operand 4, single buffered']
    #allocation11 [shape = 'u8[512]{0}', space=vmem, size = 0x400, scoped, tag = 'input window, operand 5, single buffered']
    #allocation12 [shape = 's32[1]{0}', space=sflag, size = 0x4, scoped, tag = 'scoped memory for tpu_custom_call.1']
    #allocation13 [shape = 'u8[8192]{0}', space=vmem, size = 0x2000, scoped, tag = 'input window, operand 6, single buffered']
    #allocation14 [shape = 'u8[512]{0}', space=vmem, size = 0x400, scoped, tag = 'input window, operand 7, single buffered']
    #allocation15 [shape = 's32[1]{0}', space=sflag, size = 0x4, scoped, tag = 'scoped memory for tpu_custom_call.1']
    #allocation16 [shape = 'u8[512]{0}', space=vmem, size = 0x400, scoped, tag = 'input window, operand 8, single buffered']
    #allocation17 [shape = 'u8[512]{0}', space=vmem, size = 0x400, scoped, tag = 'input window, operand 9, single buffered']
    #allocation18 [shape = 's32[1]{0}', space=sflag, size = 0x4, scoped, tag = 'scoped memory for tpu_custom_call.1']
    #allocation19 [shape = 'u8[8192]{0}', space=vmem, size = 0x2000, scoped, tag = 'input window, operand 10, single buffered']
    #allocation20 [shape = 'u8[512]{0}', space=vmem, size = 0x400, scoped, tag = 'input window, operand 11, single buffered']
    #allocation21 [shape = 's32[1]{0}', space=sflag, size = 0x4, scoped, tag = 'scoped memory for tpu_custom_call.1']
    #allocation22 [shape = 'u8[32768]{0}', space=vmem, size = 0x8000, scoped, tag = 'input window, operand 12, single buffered']
    #allocation23 [shape = 'u8[512]{0}', space=vmem, size = 0x400, scoped, tag = 'input window, operand 13, single buffered']
    #allocation24 [shape = 's32[1]{0}', space=sflag, size = 0x4, scoped, tag = 'scoped memory for tpu_custom_call.1']
    #allocation25 [shape = 'u8[8192]{0}', space=vmem, size = 0x2000, scoped, tag = 'output window, operand 0']
    %19 = vsyncpa [#allocation3], 0
    %s20 = scalar_lea.sflag [#allocation3], 1
    %21 = vsyncpa %s20, 0
    %22 = vsyncpa [#allocation6], 0
    %23 = vsyncpa [#allocation9], 0
    %24 = vsyncpa [#allocation12], 0
    %25 = vsyncpa [#allocation15], 0
    %26 = vsyncpa [#allocation18], 0
    %27 = vsyncpa [#allocation21], 0
    %28 = vsyncpa [#allocation24], 0
    %29 = vsyncpa [#allocation4], 0
    %s30 = scalar_lea.sflag [#allocation4], 1
    %31 = vsyncpa %s30, 0
    loop: start=0, step=1, limit=4
    $region2: #{tpu_custom_call.1} parent=1 // loop_pre_header
      _
    $region3: #{tpu_custom_call.1} parent=1 // loop_header
      %s33 = sphi 0, %s37
      %p34 = scmp.ge.s32.totalorder %s33, 4
      %s40 = sphi 0, %s52
      %s41 = sphi 0, %s48
      %s42 = sphi 0, %s40
      %s43 = sphi 0, %s41
      %s44 = sphi 0, %s42
      %s45 = sphi 0, %s43
      %s55 = sphi 0, %s57
      %s58 = sphi 0, %s55
      %s59 = sphi 0, %s58
      %s75 = sphi 0, %s59
      %s81 = sphi 0, %s83
      %s84 = sphi 0, %s81
      %s85 = sphi 0, %s84
      %s101 = sphi 0, %s85
      %s105 = sphi 0, %s105
      %s107 = sphi 0, %s105
      %s108 = sphi 0, %s107
      %s122 = sphi 0, %s108
      %s126 = sphi 0, %s126
      %s128 = sphi 0, %s126
      %s129 = sphi 0, %s128
      %s143 = sphi 0, %s129
      %s147 = sphi 0, %s147
      %s149 = sphi 0, %s147
      %s150 = sphi 0, %s149
      %s164 = sphi 0, %s150
      %s168 = sphi 0, %s168
      %s170 = sphi 0, %s168
      %s171 = sphi 0, %s170
      %s185 = sphi 0, %s171
      %s189 = sphi 0, %s189
      %s191 = sphi 0, %s189
      %s192 = sphi 0, %s191
      %s206 = sphi 0, %s192
      %s210 = sphi 0, %s210
      %s212 = sphi 0, %s210
      %s213 = sphi 0, %s212
      %s227 = sphi 0, %s213
      %s231 = sphi 0, %s231
      %s233 = sphi 0, %s231
      %s234 = sphi 0, %s233
      %s248 = sphi 0, %s234
      %s252 = sphi 0, %s252
      %s254 = sphi 0, %s252
      %s255 = sphi 0, %s254
      %s269 = sphi 0, %s255
      %s273 = sphi 0, %s273
      %s275 = sphi 0, %s273
      %s276 = sphi 0, %s275
      %s290 = sphi 0, %s276
      %s294 = sphi 0, %s294
      %s296 = sphi 0, %s294
      %s297 = sphi 0, %s296
      %s311 = sphi 0, %s297
      %s315 = sphi 0, %s315
      %s317 = sphi 0, %s315
      %s318 = sphi 0, %s317
      %s332 = sphi 0, %s318
      %s336 = sphi 0, %s336
      %s338 = sphi 0, %s336
      %s339 = sphi 0, %s338
      %s353 = sphi 0, %s339
      %s361 = sphi 0, %s363
      %s364 = sphi 0, %s361
      %s365 = sphi 0, %s364
      %s381 = sphi 0, %s365
    $region4: #{tpu_custom_call.1} parent=1 // loop_header_branch
      %36 = sbr.rel (%p34) target = $region8
    $region5: #{tpu_custom_call.1} parent=1 // loop_body
      %s38 = ssub.s32 %s33, 1
      %s39 = ssub.s32 %s33, 2
      %s46 = sadd.s32 1, %s41
      %p47 = scmp.ge.s32.totalorder %s46, 1
      %s48 = scalar_select %p47, 0, %s46
      %s49 = sadd.s32 1, %s40
      %s50 = scalar_select %p47, %s49, %s40
      %p51 = scmp.ge.s32.totalorder %s50, 2
      %s52 = scalar_select %p51, 0, %s50
      %s53 = ssub.s32 %s40, %s52
      %p54 = scmp.eq.s32.totalorder %s53, 0
      %s56 = sadd.s32 %s55, 1
      %s57 = scalar_select %p54, %s55, %s56
      %p60 = pneg %p54
      %p61 = scmp.eq.s32.totalorder %s33, 1
      %p62 = por %p60, %p61
      %p63 = scmp.ne.s32.totalorder %s55, %s58
      %p64 = scmp.eq.s32.totalorder %s33, 0
      %p65 = por %p63, %p64
      %p66 = scmp.ne.s32.totalorder %s55, %s58
      %p67 = scmp.eq.s32.totalorder %s38, 1
      %p68 = por %p66, %p67
      %p69 = scmp.ne.s32.totalorder %s58, %s59
      %p70 = scmp.eq.s32.totalorder %s38, 0
      %p71 = por %p69, %p70
      %p72 = scmp.ne.s32.totalorder %s58, %s59
      %p73 = scmp.eq.s32.totalorder %s39, 1
      %p74 = por %p72, %p73
      %p76 = scmp.ne.s32.totalorder %s59, %s75
      %p77 = scmp.eq.s32.totalorder %s39, 0
      %p78 = por %p76, %p77
      %s79 = ssub.s32 %s41, %s48
      %p80 = scmp.eq.s32.totalorder %s79, 0
      %s82 = sadd.s32 %s81, 1
      %s83 = scalar_select %p80, %s81, %s82
      %p86 = pneg %p80
      %p87 = scmp.eq.s32.totalorder %s33, 1
      %p88 = por %p86, %p87
      %p89 = scmp.ne.s32.totalorder %s81, %s84
      %p90 = scmp.eq.s32.totalorder %s33, 0
      %p91 = por %p89, %p90
      %p92 = scmp.ne.s32.totalorder %s81, %s84
      %p93 = scmp.eq.s32.totalorder %s38, 1
      %p94 = por %p92, %p93
      %p95 = scmp.ne.s32.totalorder %s84, %s85
      %p96 = scmp.eq.s32.totalorder %s38, 0
      %p97 = por %p95, %p96
      %p98 = scmp.ne.s32.totalorder %s84, %s85
      %p99 = scmp.eq.s32.totalorder %s39, 1
      %p100 = por %p98, %p99
      %p102 = scmp.ne.s32.totalorder %s85, %s101
      %p103 = scmp.eq.s32.totalorder %s39, 0
      %p104 = por %p102, %p103
      %s106 = sadd.s32 %s105, 1
      %p109 = scmp.eq.s32.totalorder %s33, 1
      %p110 = scmp.ne.s32.totalorder %s105, %s107
      %p111 = scmp.eq.s32.totalorder %s33, 0
      %p112 = por %p110, %p111
      %p113 = scmp.ne.s32.totalorder %s105, %s107
      %p114 = scmp.eq.s32.totalorder %s38, 1
      %p115 = por %p113, %p114
      %p116 = scmp.ne.s32.totalorder %s107, %s108
      %p117 = scmp.eq.s32.totalorder %s38, 0
      %p118 = por %p116, %p117
      %p119 = scmp.ne.s32.totalorder %s107, %s108
      %p120 = scmp.eq.s32.totalorder %s39, 1
      %p121 = por %p119, %p120
      %p123 = scmp.ne.s32.totalorder %s108, %s122
      %p124 = scmp.eq.s32.totalorder %s39, 0
      %p125 = por %p123, %p124
      %s127 = sadd.s32 %s126, 1
      %p130 = scmp.eq.s32.totalorder %s33, 1
      %p131 = scmp.ne.s32.totalorder %s126, %s128
      %p132 = scmp.eq.s32.totalorder %s33, 0
      %p133 = por %p131, %p132
      %p134 = scmp.ne.s32.totalorder %s126, %s128
      %p135 = scmp.eq.s32.totalorder %s38, 1
      %p136 = por %p134, %p135
      %p137 = scmp.ne.s32.totalorder %s128, %s129
      %p138 = scmp.eq.s32.totalorder %s38, 0
      %p139 = por %p137, %p138
      %p140 = scmp.ne.s32.totalorder %s128, %s129
      %p141 = scmp.eq.s32.totalorder %s39, 1
      %p142 = por %p140, %p141
      %p144 = scmp.ne.s32.totalorder %s129, %s143
      %p145 = scmp.eq.s32.totalorder %s39, 0
      %p146 = por %p144, %p145
      %s148 = sadd.s32 %s147, 1
      %p151 = scmp.eq.s32.totalorder %s33, 1
      %p152 = scmp.ne.s32.totalorder %s147, %s149
      %p153 = scmp.eq.s32.totalorder %s33, 0
      %p154 = por %p152, %p153
      %p155 = scmp.ne.s32.totalorder %s147, %s149
      %p156 = scmp.eq.s32.totalorder %s38, 1
      %p157 = por %p155, %p156
      %p158 = scmp.ne.s32.totalorder %s149, %s150
      %p159 = scmp.eq.s32.totalorder %s38, 0
      %p160 = por %p158, %p159
      %p161 = scmp.ne.s32.totalorder %s149, %s150
      %p162 = scmp.eq.s32.totalorder %s39, 1
      %p163 = por %p161, %p162
      %p165 = scmp.ne.s32.totalorder %s150, %s164
      %p166 = scmp.eq.s32.totalorder %s39, 0
      %p167 = por %p165, %p166
      %s169 = sadd.s32 %s168, 1
      %p172 = scmp.eq.s32.totalorder %s33, 1
      %p173 = scmp.ne.s32.totalorder %s168, %s170
      %p174 = scmp.eq.s32.totalorder %s33, 0
      %p175 = por %p173, %p174
      %p176 = scmp.ne.s32.totalorder %s168, %s170
      %p177 = scmp.eq.s32.totalorder %s38, 1
      %p178 = por %p176, %p177
      %p179 = scmp.ne.s32.totalorder %s170, %s171
      %p180 = scmp.eq.s32.totalorder %s38, 0
      %p181 = por %p179, %p180
      %p182 = scmp.ne.s32.totalorder %s170, %s171
      %p183 = scmp.eq.s32.totalorder %s39, 1
      %p184 = por %p182, %p183
      %p186 = scmp.ne.s32.totalorder %s171, %s185
      %p187 = scmp.eq.s32.totalorder %s39, 0
      %p188 = por %p186, %p187
      %s190 = sadd.s32 %s189, 1
      %p193 = scmp.eq.s32.totalorder %s33, 1
      %p194 = scmp.ne.s32.totalorder %s189, %s191
      %p195 = scmp.eq.s32.totalorder %s33, 0
      %p196 = por %p194, %p195
      %p197 = scmp.ne.s32.totalorder %s189, %s191
      %p198 = scmp.eq.s32.totalorder %s38, 1
      %p199 = por %p197, %p198
      %p200 = scmp.ne.s32.totalorder %s191, %s192
      %p201 = scmp.eq.s32.totalorder %s38, 0
      %p202 = por %p200, %p201
      %p203 = scmp.ne.s32.totalorder %s191, %s192
      %p204 = scmp.eq.s32.totalorder %s39, 1
      %p205 = por %p203, %p204
      %p207 = scmp.ne.s32.totalorder %s192, %s206
      %p208 = scmp.eq.s32.totalorder %s39, 0
      %p209 = por %p207, %p208
      %s211 = sadd.s32 %s210, 1
      %p214 = scmp.eq.s32.totalorder %s33, 1
      %p215 = scmp.ne.s32.totalorder %s210, %s212
      %p216 = scmp.eq.s32.totalorder %s33, 0
      %p217 = por %p215, %p216
      %p218 = scmp.ne.s32.totalorder %s210, %s212
      %p219 = scmp.eq.s32.totalorder %s38, 1
      %p220 = por %p218, %p219
      %p221 = scmp.ne.s32.totalorder %s212, %s213
      %p222 = scmp.eq.s32.totalorder %s38, 0
      %p223 = por %p221, %p222
      %p224 = scmp.ne.s32.totalorder %s212, %s213
      %p225 = scmp.eq.s32.totalorder %s39, 1
      %p226 = por %p224, %p225
      %p228 = scmp.ne.s32.totalorder %s213, %s227
      %p229 = scmp.eq.s32.totalorder %s39, 0
      %p230 = por %p228, %p229
      %s232 = sadd.s32 %s231, 1
      %p235 = scmp.eq.s32.totalorder %s33, 1
      %p236 = scmp.ne.s32.totalorder %s231, %s233
      %p237 = scmp.eq.s32.totalorder %s33, 0
      %p238 = por %p236, %p237
      %p239 = scmp.ne.s32.totalorder %s231, %s233
      %p240 = scmp.eq.s32.totalorder %s38, 1
      %p241 = por %p239, %p240
      %p242 = scmp.ne.s32.totalorder %s233, %s234
      %p243 = scmp.eq.s32.totalorder %s38, 0
      %p244 = por %p242, %p243
      %p245 = scmp.ne.s32.totalorder %s233, %s234
      %p246 = scmp.eq.s32.totalorder %s39, 1
      %p247 = por %p245, %p246
      %p249 = scmp.ne.s32.totalorder %s234, %s248
      %p250 = scmp.eq.s32.totalorder %s39, 0
      %p251 = por %p249, %p250
      %s253 = sadd.s32 %s252, 1
      %p256 = scmp.eq.s32.totalorder %s33, 1
      %p257 = scmp.ne.s32.totalorder %s252, %s254
      %p258 = scmp.eq.s32.totalorder %s33, 0
      %p259 = por %p257, %p258
      %p260 = scmp.ne.s32.totalorder %s252, %s254
      %p261 = scmp.eq.s32.totalorder %s38, 1
      %p262 = por %p260, %p261
      %p263 = scmp.ne.s32.totalorder %s254, %s255
      %p264 = scmp.eq.s32.totalorder %s38, 0
      %p265 = por %p263, %p264
      %p266 = scmp.ne.s32.totalorder %s254, %s255
      %p267 = scmp.eq.s32.totalorder %s39, 1
      %p268 = por %p266, %p267
      %p270 = scmp.ne.s32.totalorder %s255, %s269
      %p271 = scmp.eq.s32.totalorder %s39, 0
      %p272 = por %p270, %p271
      %s274 = sadd.s32 %s273, 1
      %p277 = scmp.eq.s32.totalorder %s33, 1
      %p278 = scmp.ne.s32.totalorder %s273, %s275
      %p279 = scmp.eq.s32.totalorder %s33, 0
      %p280 = por %p278, %p279
      %p281 = scmp.ne.s32.totalorder %s273, %s275
      %p282 = scmp.eq.s32.totalorder %s38, 1
      %p283 = por %p281, %p282
      %p284 = scmp.ne.s32.totalorder %s275, %s276
      %p285 = scmp.eq.s32.totalorder %s38, 0
      %p286 = por %p284, %p285
      %p287 = scmp.ne.s32.totalorder %s275, %s276
      %p288 = scmp.eq.s32.totalorder %s39, 1
      %p289 = por %p287, %p288
      %p291 = scmp.ne.s32.totalorder %s276, %s290
      %p292 = scmp.eq.s32.totalorder %s39, 0
      %p293 = por %p291, %p292
      %s295 = sadd.s32 %s294, 1
      %p298 = scmp.eq.s32.totalorder %s33, 1
      %p299 = scmp.ne.s32.totalorder %s294, %s296
      %p300 = scmp.eq.s32.totalorder %s33, 0
      %p301 = por %p299, %p300
      %p302 = scmp.ne.s32.totalorder %s294, %s296
      %p303 = scmp.eq.s32.totalorder %s38, 1
      %p304 = por %p302, %p303
      %p305 = scmp.ne.s32.totalorder %s296, %s297
      %p306 = scmp.eq.s32.totalorder %s38, 0
      %p307 = por %p305, %p306
      %p308 = scmp.ne.s32.totalorder %s296, %s297
      %p309 = scmp.eq.s32.totalorder %s39, 1
      %p310 = por %p308, %p309
      %p312 = scmp.ne.s32.totalorder %s297, %s311
      %p313 = scmp.eq.s32.totalorder %s39, 0
      %p314 = por %p312, %p313
      %s316 = sadd.s32 %s315, 1
      %p319 = scmp.eq.s32.totalorder %s33, 1
      %p320 = scmp.ne.s32.totalorder %s315, %s317
      %p321 = scmp.eq.s32.totalorder %s33, 0
      %p322 = por %p320, %p321
      %p323 = scmp.ne.s32.totalorder %s315, %s317
      %p324 = scmp.eq.s32.totalorder %s38, 1
      %p325 = por %p323, %p324
      %p326 = scmp.ne.s32.totalorder %s317, %s318
      %p327 = scmp.eq.s32.totalorder %s38, 0
      %p328 = por %p326, %p327
      %p329 = scmp.ne.s32.totalorder %s317, %s318
      %p330 = scmp.eq.s32.totalorder %s39, 1
      %p331 = por %p329, %p330
      %p333 = scmp.ne.s32.totalorder %s318, %s332
      %p334 = scmp.eq.s32.totalorder %s39, 0
      %p335 = por %p333, %p334
      %s337 = sadd.s32 %s336, 1
      %p340 = scmp.eq.s32.totalorder %s33, 1
      %p341 = scmp.ne.s32.totalorder %s336, %s338
      %p342 = scmp.eq.s32.totalorder %s33, 0
      %p343 = por %p341, %p342
      %p344 = scmp.ne.s32.totalorder %s336, %s338
      %p345 = scmp.eq.s32.totalorder %s38, 1
      %p346 = por %p344, %p345
      %p347 = scmp.ne.s32.totalorder %s338, %s339
      %p348 = scmp.eq.s32.totalorder %s38, 0
      %p349 = por %p347, %p348
      %p350 = scmp.ne.s32.totalorder %s338, %s339
      %p351 = scmp.eq.s32.totalorder %s39, 1
      %p352 = por %p350, %p351
      %p354 = scmp.ne.s32.totalorder %s339, %s353
      %p355 = scmp.eq.s32.totalorder %s39, 0
      %p356 = por %p354, %p355
      %s357 = ssub.s32 %s40, %s52
      %s358 = ssub.s32 %s41, %s48
      %s359 = sor.u32 %s357, %s358
      %p360 = scmp.eq.s32.totalorder %s359, 0
      %s362 = sadd.s32 %s361, 1
      %s363 = scalar_select %p360, %s361, %s362
      %p366 = pneg %p360
      %p367 = scmp.eq.s32.totalorder %s33, 1
      %p368 = por %p366, %p367
      %p369 = scmp.ne.s32.totalorder %s361, %s364
      %p370 = scmp.eq.s32.totalorder %s33, 0
      %p371 = por %p369, %p370
      %p372 = scmp.ne.s32.totalorder %s361, %s364
      %p373 = scmp.eq.s32.totalorder %s38, 1
      %p374 = por %p372, %p373
      %p375 = scmp.ne.s32.totalorder %s364, %s365
      %p376 = scmp.eq.s32.totalorder %s38, 0
      %p377 = por %p375, %p376
      %p378 = scmp.ne.s32.totalorder %s364, %s365
      %p379 = scmp.eq.s32.totalorder %s39, 1
      %p380 = por %p378, %p379
      %p382 = scmp.ne.s32.totalorder %s365, %s381
      %p383 = scmp.eq.s32.totalorder %s39, 0
      %p384 = por %p382, %p383
      %p385 = scmp.le.s32.totalorder 1, %s33
      %p386 = scmp.lt.s32.totalorder %s33, 3
      %p387 = pnand %p385, %p386
      %p388 = pneg %p387
      // Predicated region
      $region9: #{tpu_custom_call.1} parent=5 // pred_check
        _
      $region10: #{tpu_custom_call.1} parent=5 // pred_check_branch
        %390 = sbr.rel (%p387) target = $region12
      $region11: #{tpu_custom_call.1} parent=5 // pred_region
        %s391 = ssub.s32 %s33, 1
        // Predicated region
        $region13: #{tpu_custom_call.1} parent=11 // pred_check
          %p392 = pneg %p97
        $region14: #{tpu_custom_call.1} parent=11 // pred_check_branch
          %394 = sbr.rel (%p392) target = $region16
        $region15: #{tpu_custom_call.1} parent=11 // pred_region
          %s396 = ssub.s32 128, 128
          %397 = vsyncadd [#allocation6], %s396
          %s398 = smul.addr %s43, 128
          %s399 = scalar_lea.hbm %s1, %s398
          %s401 = sshll.u32 [#allocation5], 4
          %s402 = int_to_ptr.vmem [resolvable:$true] %s401
          %404 = dma.hbm_to_vmem [thread:$0]  %s399, 128, %s402, [#allocation6]
        $region16: #{tpu_custom_call.1} parent=11 // pred_fallthru
          _
        // Predicated region
        $region17: #{tpu_custom_call.1} parent=11 // pred_check
          %p405 = pneg %p118
        $region18: #{tpu_custom_call.1} parent=11 // pred_check_branch
          %407 = sbr.rel (%p405) target = $region20
        $region19: #{tpu_custom_call.1} parent=11 // pred_region
          %s409 = ssub.s32 16, 16
          %410 = vsyncadd [#allocation6], %s409
          %s412 = sshll.u32 [#allocation7], 4
          %s413 = int_to_ptr.vmem [resolvable:$true] %s412
          %415 = dma.hbm_to_vmem [thread:$0]  %s2, 16, %s413, [#allocation6]
        $region20: #{tpu_custom_call.1} parent=11 // pred_fallthru
          _
        // Predicated region
        $region21: #{tpu_custom_call.1} parent=11 // pred_check
          %p416 = pneg %p139
        $region22: #{tpu_custom_call.1} parent=11 // pred_check_branch
          %418 = sbr.rel (%p416) target = $region24
        $region23: #{tpu_custom_call.1} parent=11 // pred_region
          %s420 = ssub.s32 16, 16
          %421 = vsyncadd [#allocation9], %s420
          %s423 = sshll.u32 [#allocation8], 4
          %s424 = int_to_ptr.vmem [resolvable:$true] %s423
          %426 = dma.hbm_to_vmem [thread:$0]  %s3, 16, %s424, [#allocation9]
        $region24: #{tpu_custom_call.1} parent=11 // pred_fallthru
          _
        // Predicated region
        $region25: #{tpu_custom_call.1} parent=11 // pred_check
          %p427 = pneg %p160
        $region26: #{tpu_custom_call.1} parent=11 // pred_check_branch
          %429 = sbr.rel (%p427) target = $region28
        $region27: #{tpu_custom_call.1} parent=11 // pred_region
          %s431 = ssub.s32 256, 256
          %432 = vsyncadd [#allocation9], %s431
          %s433 = sshll.u32 [#allocation10], 4
          %s434 = int_to_ptr.vmem [resolvable:$true] %s433
          %439 = dma.hbm_to_vmem [thread:$0]  %s4, 256, %s434, [#allocation9], 64, 64, 4
        $region28: #{tpu_custom_call.1} parent=11 // pred_fallthru
          _
        // Predicated region
        $region29: #{tpu_custom_call.1} parent=11 // pred_check
          %p440 = pneg %p181
        $region30: #{tpu_custom_call.1} parent=11 // pred_check_branch
          %442 = sbr.rel (%p440) target = $region32
        $region31: #{tpu_custom_call.1} parent=11 // pred_region
          %s444 = ssub.s32 16, 16
          %445 = vsyncadd [#allocation12], %s444
          %s447 = sshll.u32 [#allocation11], 4
          %s448 = int_to_ptr.vmem [resolvable:$true] %s447
          %450 = dma.hbm_to_vmem [thread:$0]  %s5, 16, %s448, [#allocation12]
        $region32: #{tpu_custom_call.1} parent=11 // pred_fallthru
          _
        // Predicated region
        $region33: #{tpu_custom_call.1} parent=11 // pred_check
          %p451 = pneg %p202
        $region34: #{tpu_custom_call.1} parent=11 // pred_check_branch
          %453 = sbr.rel (%p451) target = $region36
        $region35: #{tpu_custom_call.1} parent=11 // pred_region
          %s455 = ssub.s32 256, 256
          %456 = vsyncadd [#allocation12], %s455
          %s457 = sshll.u32 [#allocation13], 4
          %s458 = int_to_ptr.vmem [resolvable:$true] %s457
          %463 = dma.hbm_to_vmem [thread:$0]  %s6, 256, %s458, [#allocation12], 64, 64, 4
        $region36: #{tpu_custom_call.1} parent=11 // pred_fallthru
          _
        // Predicated region
        $region37: #{tpu_custom_call.1} parent=11 // pred_check
          %p464 = pneg %p223
        $region38: #{tpu_custom_call.1} parent=11 // pred_check_branch
          %466 = sbr.rel (%p464) target = $region40
        $region39: #{tpu_custom_call.1} parent=11 // pred_region
          %s468 = ssub.s32 16, 16
          %469 = vsyncadd [#allocation15], %s468
          %s471 = sshll.u32 [#allocation14], 4
          %s472 = int_to_ptr.vmem [resolvable:$true] %s471
          %474 = dma.hbm_to_vmem [thread:$0]  %s7, 16, %s472, [#allocation15]
        $region40: #{tpu_custom_call.1} parent=11 // pred_fallthru
          _
        // Predicated region
        $region41: #{tpu_custom_call.1} parent=11 // pred_check
          %p475 = pneg %p244
        $region42: #{tpu_custom_call.1} parent=11 // pred_check_branch
          %477 = sbr.rel (%p475) target = $region44
        $region43: #{tpu_custom_call.1} parent=11 // pred_region
          %s479 = ssub.s32 16, 16
          %480 = vsyncadd [#allocation15], %s479
          %s482 = sshll.u32 [#allocation16], 4
          %s483 = int_to_ptr.vmem [resolvable:$true] %s482
          %485 = dma.hbm_to_vmem [thread:$0]  %s8, 16, %s483, [#allocation15]
        $region44: #{tpu_custom_call.1} parent=11 // pred_fallthru
          _
        // Predicated region
        $region45: #{tpu_custom_call.1} parent=11 // pred_check
          %p486 = pneg %p265
        $region46: #{tpu_custom_call.1} parent=11 // pred_check_branch
          %488 = sbr.rel (%p486) target = $region48
        $region47: #{tpu_custom_call.1} parent=11 // pred_region
          %s490 = ssub.s32 16, 16
          %491 = vsyncadd [#allocation18], %s490
          %s493 = sshll.u32 [#allocation17], 4
          %s494 = int_to_ptr.vmem [resolvable:$true] %s493
          %496 = dma.hbm_to_vmem [thread:$0]  %s9, 16, %s494, [#allocation18]
        $region48: #{tpu_custom_call.1} parent=11 // pred_fallthru
          _
        // Predicated region
        $region49: #{tpu_custom_call.1} parent=11 // pred_check
          %p497 = pneg %p286
        $region50: #{tpu_custom_call.1} parent=11 // pred_check_branch
          %499 = sbr.rel (%p497) target = $region52
        $region51: #{tpu_custom_call.1} parent=11 // pred_region
          %s501 = ssub.s32 256, 256
          %502 = vsyncadd [#allocation18], %s501
          %s503 = sshll.u32 [#allocation19], 4
          %s504 = int_to_ptr.vmem [resolvable:$true] %s503
          %509 = dma.hbm_to_vmem [thread:$0]  %s10, 256, %s504, [#allocation18], 64, 64, 4
        $region52: #{tpu_custom_call.1} parent=11 // pred_fallthru
          _
        // Predicated region
        $region53: #{tpu_custom_call.1} parent=11 // pred_check
          %p510 = pneg %p307
        $region54: #{tpu_custom_call.1} parent=11 // pred_check_branch
          %512 = sbr.rel (%p510) target = $region56
        $region55: #{tpu_custom_call.1} parent=11 // pred_region
          %s514 = ssub.s32 16, 16
          %515 = vsyncadd [#allocation21], %s514
          %s517 = sshll.u32 [#allocation20], 4
          %s518 = int_to_ptr.vmem [resolvable:$true] %s517
          %520 = dma.hbm_to_vmem [thread:$0]  %s11, 16, %s518, [#allocation21]
        $region56: #{tpu_custom_call.1} parent=11 // pred_fallthru
          _
        // Predicated region
        $region57: #{tpu_custom_call.1} parent=11 // pred_check
          %p521 = pneg %p328
        $region58: #{tpu_custom_call.1} parent=11 // pred_check_branch
          %523 = sbr.rel (%p521) target = $region60
        $region59: #{tpu_custom_call.1} parent=11 // pred_region
          %s525 = ssub.s32 1024, 1024
          %526 = vsyncadd [#allocation21], %s525
          %s527 = sshll.u32 [#allocation22], 4
          %s528 = int_to_ptr.vmem [resolvable:$true] %s527
          %533 = dma.hbm_to_vmem [thread:$0]  %s12, 1024, %s528, [#allocation21], 64, 64, 4
        $region60: #{tpu_custom_call.1} parent=11 // pred_fallthru
          _
        // Predicated region
        $region61: #{tpu_custom_call.1} parent=11 // pred_check
          %p534 = pneg %p349
        $region62: #{tpu_custom_call.1} parent=11 // pred_check_branch
          %536 = sbr.rel (%p534) target = $region64
        $region63: #{tpu_custom_call.1} parent=11 // pred_region
          %s538 = ssub.s32 16, 16
          %539 = vsyncadd [#allocation24], %s538
          %s541 = sshll.u32 [#allocation23], 4
          %s542 = int_to_ptr.vmem [resolvable:$true] %s541
          %544 = dma.hbm_to_vmem [thread:$0]  %s13, 16, %s542, [#allocation24]
        $region64: #{tpu_custom_call.1} parent=11 // pred_fallthru
          _
      $region12: #{tpu_custom_call.1} parent=5 // pred_fallthru
        _
      %p545 = scmp.lt.s32.totalorder %s33, 2
      // Predicated region
      $region65: #{tpu_custom_call.1} parent=5 // pred_check
        %p546 = pneg %p545
      $region66: #{tpu_custom_call.1} parent=5 // pred_check_branch
        %548 = sbr.rel (%p546) target = $region68
      $region67: #{tpu_custom_call.1} parent=5 // pred_region
        // Predicated region
        $region69: #{tpu_custom_call.1} parent=67 // pred_check
          %p549 = pneg %p65
        $region70: #{tpu_custom_call.1} parent=67 // pred_check_branch
          %551 = sbr.rel (%p549) target = $region72
        $region71: #{tpu_custom_call.1} parent=67 // pred_region
          %s552 = sand.u32 %s55, 1
          %s553 = scalar_lea.sflag [#allocation3], %s552
          %s554 = sand.u32 %s55, 1
          %s555 = smul.addr %s554, 8
          %s556 = scalar_lea.vmem [#allocation2], %s555
          %s558 = ssub.s32 128, 128
          %559 = vsyncadd %s553, %s558
          %s560 = smul.addr %s40, 128
          %s561 = scalar_lea.hbm %s0, %s560
          %s563 = sshll.u32 %s556, 4
          %s564 = int_to_ptr.vmem [resolvable:$true] %s563
          %566 = dma.hbm_to_vmem [thread:$0]  %s561, 128, %s564, %s553
        $region72: #{tpu_custom_call.1} parent=67 // pred_fallthru
          _
      $region68: #{tpu_custom_call.1} parent=5 // pred_fallthru
        _
      %p567 = scmp.le.s32.totalorder 1, %s33
      %p568 = scmp.lt.s32.totalorder %s33, 3
      %p569 = pnand %p567, %p568
      %p570 = pneg %p569
      // Predicated region
      $region73: #{tpu_custom_call.1} parent=5 // pred_check
        _
      $region74: #{tpu_custom_call.1} parent=5 // pred_check_branch
        %572 = sbr.rel (%p569) target = $region76
      $region75: #{tpu_custom_call.1} parent=5 // pred_region
        %s573 = ssub.s32 %s33, 1
        %s574 = sand.u32 %s58, 1
        %s575 = scalar_lea.sflag [#allocation3], %s574
        %s576 = sand.u32 %s58, 1
        %s577 = smul.addr %s576, 8
        %s578 = scalar_lea.vmem [#allocation2], %s577
        // Predicated region
        $region77: #{tpu_custom_call.1} parent=75 // pred_check
          %p579 = pneg %p71
        $region78: #{tpu_custom_call.1} parent=75 // pred_check_branch
          %581 = sbr.rel (%p579) target = $region80
        $region79: #{tpu_custom_call.1} parent=75 // pred_region
          %582 = dma.done %s575, 128
        $region80: #{tpu_custom_call.1} parent=75 // pred_fallthru
          _
        // Predicated region
        $region81: #{tpu_custom_call.1} parent=75 // pred_check
          %p583 = pneg %p97
        $region82: #{tpu_custom_call.1} parent=75 // pred_check_branch
          %585 = sbr.rel (%p583) target = $region84
        $region83: #{tpu_custom_call.1} parent=75 // pred_region
          %586 = dma.done [#allocation6], 128
        $region84: #{tpu_custom_call.1} parent=75 // pred_fallthru
          _
        // Predicated region
        $region85: #{tpu_custom_call.1} parent=75 // pred_check
          %p587 = pneg %p118
        $region86: #{tpu_custom_call.1} parent=75 // pred_check_branch
          %589 = sbr.rel (%p587) target = $region88
        $region87: #{tpu_custom_call.1} parent=75 // pred_region
          %590 = dma.done [#allocation6], 16
        $region88: #{tpu_custom_call.1} parent=75 // pred_fallthru
          _
        // Predicated region
        $region89: #{tpu_custom_call.1} parent=75 // pred_check
          %p591 = pneg %p139
        $region90: #{tpu_custom_call.1} parent=75 // pred_check_branch
          %593 = sbr.rel (%p591) target = $region92
        $region91: #{tpu_custom_call.1} parent=75 // pred_region
          %594 = dma.done [#allocation9], 16
        $region92: #{tpu_custom_call.1} parent=75 // pred_fallthru
          _
        // Predicated region
        $region93: #{tpu_custom_call.1} parent=75 // pred_check
          %p595 = pneg %p160
        $region94: #{tpu_custom_call.1} parent=75 // pred_check_branch
          %597 = sbr.rel (%p595) target = $region96
        $region95: #{tpu_custom_call.1} parent=75 // pred_region
          %598 = dma.done [#allocation9], 256
        $region96: #{tpu_custom_call.1} parent=75 // pred_fallthru
          _
        // Predicated region
        $region97: #{tpu_custom_call.1} parent=75 // pred_check
          %p599 = pneg %p181
        $region98: #{tpu_custom_call.1} parent=75 // pred_check_branch
          %601 = sbr.rel (%p599) target = $region100
        $region99: #{tpu_custom_call.1} parent=75 // pred_region
          %602 = dma.done [#allocation12], 16
        $region100: #{tpu_custom_call.1} parent=75 // pred_fallthru
          _
        // Predicated region
        $region101: #{tpu_custom_call.1} parent=75 // pred_check
          %p603 = pneg %p202
        $region102: #{tpu_custom_call.1} parent=75 // pred_check_branch
          %605 = sbr.rel (%p603) target = $region104
        $region103: #{tpu_custom_call.1} parent=75 // pred_region
          %606 = dma.done [#allocation12], 256
        $region104: #{tpu_custom_call.1} parent=75 // pred_fallthru
          _
        // Predicated region
        $region105: #{tpu_custom_call.1} parent=75 // pred_check
          %p607 = pneg %p223
        $region106: #{tpu_custom_call.1} parent=75 // pred_check_branch
          %609 = sbr.rel (%p607) target = $region108
        $region107: #{tpu_custom_call.1} parent=75 // pred_region
          %610 = dma.done [#allocation15], 16
        $region108: #{tpu_custom_call.1} parent=75 // pred_fallthru
          _
        // Predicated region
        $region109: #{tpu_custom_call.1} parent=75 // pred_check
          %p611 = pneg %p244
        $region110: #{tpu_custom_call.1} parent=75 // pred_check_branch
          %613 = sbr.rel (%p611) target = $region112
        $region111: #{tpu_custom_call.1} parent=75 // pred_region
          %614 = dma.done [#allocation15], 16
        $region112: #{tpu_custom_call.1} parent=75 // pred_fallthru
          _
        // Predicated region
        $region113: #{tpu_custom_call.1} parent=75 // pred_check
          %p615 = pneg %p265
        $region114: #{tpu_custom_call.1} parent=75 // pred_check_branch
          %617 = sbr.rel (%p615) target = $region116
        $region115: #{tpu_custom_call.1} parent=75 // pred_region
          %618 = dma.done [#allocation18], 16
        $region116: #{tpu_custom_call.1} parent=75 // pred_fallthru
          _
        // Predicated region
        $region117: #{tpu_custom_call.1} parent=75 // pred_check
          %p619 = pneg %p286
        $region118: #{tpu_custom_call.1} parent=75 // pred_check_branch
          %621 = sbr.rel (%p619) target = $region120
        $region119: #{tpu_custom_call.1} parent=75 // pred_region
          %622 = dma.done [#allocation18], 256
        $region120: #{tpu_custom_call.1} parent=75 // pred_fallthru
          _
        // Predicated region
        $region121: #{tpu_custom_call.1} parent=75 // pred_check
          %p623 = pneg %p307
        $region122: #{tpu_custom_call.1} parent=75 // pred_check_branch
          %625 = sbr.rel (%p623) target = $region124
        $region123: #{tpu_custom_call.1} parent=75 // pred_region
          %626 = dma.done [#allocation21], 16
        $region124: #{tpu_custom_call.1} parent=75 // pred_fallthru
          _
        // Predicated region
        $region125: #{tpu_custom_call.1} parent=75 // pred_check
          %p627 = pneg %p328
        $region126: #{tpu_custom_call.1} parent=75 // pred_check_branch
          %629 = sbr.rel (%p627) target = $region128
        $region127: #{tpu_custom_call.1} parent=75 // pred_region
          %630 = dma.done [#allocation21], 1024
        $region128: #{tpu_custom_call.1} parent=75 // pred_fallthru
          _
        // Predicated region
        $region129: #{tpu_custom_call.1} parent=75 // pred_check
          %p631 = pneg %p349
        $region130: #{tpu_custom_call.1} parent=75 // pred_check_branch
          %633 = sbr.rel (%p631) target = $region132
        $region131: #{tpu_custom_call.1} parent=75 // pred_region
          %634 = dma.done [#allocation24], 16
        $region132: #{tpu_custom_call.1} parent=75 // pred_fallthru
          _
        %s635 = sand.u32 %s58, 1
        %s636 = scalar_lea.sflag [#allocation3], %s635
        %s637 = sand.u32 %s58, 1
        %s638 = smul.addr %s637, 8
        %s639 = scalar_lea.vmem [#allocation2], %s638
        %p640 = pneg %p71
        %p641 = pneg %p68
        %p642 = pneg %p97
        %p643 = pneg %p94
        %p644 = pneg %p118
        %p645 = pneg %p115
        %p646 = pneg %p139
        %p647 = pneg %p136
        %p648 = pneg %p160
        %p649 = pneg %p157
        %p650 = pneg %p181
        %p651 = pneg %p178
        %p652 = pneg %p202
        %p653 = pneg %p199
        %p654 = pneg %p223
        %p655 = pneg %p220
        %p656 = pneg %p244
        %p657 = pneg %p241
        %p658 = pneg %p265
        %p659 = pneg %p262
        %p660 = pneg %p286
        %p661 = pneg %p283
        %p662 = pneg %p307
        %p663 = pneg %p304
        %p664 = pneg %p328
        %p665 = pneg %p325
        %p666 = pneg %p349
        %p667 = pneg %p346
        %p668 = pneg %p377
        %p669 = pneg %p374
        %s670 = sand.u32 %s364, 1
        %s671 = scalar_lea.sflag [#allocation4], %s670
        %s672 = sand.u32 %s364, 1
        %s673 = smul.addr %s672, 8
        %s674 = scalar_lea.vmem [#allocation25], %s673
        %v678 = vld [vmem:[#allocation7] sm:$0x1]
        %v679 = vld [vmem:[#allocation8] sm:$0x1]
        %v680 = vld [vmem:[%s578] sm:$0xff]
        %vm681 = vcmask 261120
        %v682 = vsel %vm681, %v680, 0.0
        %683 = vadd.xlane.f32.xlu0 %v682
        %v684 = vpop.xlane.xlu0 %683
        %v685 = vrcp.pop 32.0
        %v686 = vmul.f32 %v684, %v685
        %v687 = vsub.f32 %v680, %v686
        %v688 = vmul.f32 %v687, %v687
        %v689 = vsel %vm681, %v688, 0.0
        %690 = vadd.xlane.f32.xlu0 %v689
        %v691 = vpop.xlane.xlu0 %690
        %v692 = vmul.f32 %v691, %v685
        %v693 = vadd.f32 %v692, 1e-05
        %v694 = vrsqrt.pop %v693
        %v695 = vmul.f32 %v687, %v694
        %v697 = vlaneseq
        %v698 = vshrl.u32 %v697, 7
        %v699 = vsub.s32 0, %v698
        %v700 = vrot.slane %v678, %v699
        %v702 = vmul.f32 %v695, %v700
        %v704 = vlaneseq
        %v705 = vshrl.u32 %v704, 7
        %v706 = vsub.s32 0, %v705
        %v707 = vrot.slane %v679, %v706
        %v709 = vadd.f32 %v702, %v707
        %v710 = vpack.c.bf16 %v709, %v709
        %v711 = vld [vmem:[#allocation10] sm:$0xf]
        %v712 = vld [vmem:[#allocation10 + $0x4] sm:$0xf]
        %v713 = vld [vmem:[#allocation10 + $0x8] sm:$0xf]
        %v714 = vld [vmem:[#allocation10 + $0xc] sm:$0xf]
        %v715 = vld [vmem:[#allocation11] sm:$0x1]
        %v717 = vlaneseq
        %v718 = vshrl.u32 %v717, 7
        %v719 = vsub.s32 0, %v718
        %v720 = vrot.slane %v715, %v719
        %v726 = vunpack.c.l.b16 %v711
        %v727 = vunpack.c.l.b16 %v712
        %v728 = vunpack.c.l.b16 %v713
        %v729 = vunpack.c.l.b16 %v714
        %v730 = vpack.c.b16 %v727, %v726
        %v731 = vpack.c.b16 %v729, %v728
        %v735 = vsel %vm681, %v710, 0
        %737 = vmatprep.subr.bf16.mxu0 0
        %738 = vmatpush1.bf16.msra.mxu0 %v730
        %739 = vmatprep.subr.bf16.mxu0 0
        %740 = vmatpush1.bf16.msra.mxu0 %v731
        %741 = vmatprep.subr.bf16.mxu0 0
        %742 = vmatpush1.bf16.msra.mxu0 0
        %743 = vmatprep.subr.bf16.mxu0 0
        %744 = vmatpush1.bf16.msra.mxu0 0
        %745 = vmatprep.subr.bf16.mxu0 0
        %746 = vmatpush1.bf16.msra.mxu0 0
        %747 = vmatprep.subr.bf16.mxu0 0
        %748 = vmatpush1.bf16.msra.mxu0 0
        %749 = vmatprep.subr.bf16.mxu0 0
        %750 = vmatpush1.bf16.msra.mxu0 0
        %751 = vmatprep.subr.bf16.mxu0 0
        %752 = vmatpush1.bf16.msra.mxu0 0
        %753 = vmatprep.subr.bf16.mxu0 0
        %754 = vmatpush1.bf16.msra.mxu0 0
        %755 = vmatprep.subr.bf16.mxu0 0
        %756 = vmatpush1.bf16.msra.mxu0 0
        %757 = vmatprep.subr.bf16.mxu0 0
        %758 = vmatpush1.bf16.msra.mxu0 0
        %759 = vmatprep.subr.bf16.mxu0 0
        %760 = vmatpush1.bf16.msra.mxu0 0
        %761 = vmatprep.subr.bf16.mxu0 0
        %762 = vmatpush1.bf16.msra.mxu0 0
        %763 = vmatprep.subr.bf16.mxu0 0
        %764 = vmatpush1.bf16.msra.mxu0 0
        %765 = vmatprep.subr.bf16.mxu0 0
        %766 = vmatpush1.bf16.msra.mxu0 0
        %767 = vmatprep.subr.bf16.mxu0 0
        %768 = vmatpush1.bf16.msra.mxu0 0
        %769 = vmatprep.mubr.bf16.mxu0 0
        %770 = vmatmul.mubr.bf16.gmra.mrb[0].mxu0 %v735
        %v771 = vpop.f32.mrb[0].mxu0
        %v772 = vadd.f32 %v720, %v771
        %v773 = vpop.f32.mrb[0].mxu0
        %v774 = vpop.f32.mrb[0].mxu0
        %v775 = vpop.f32.mrb[0].mxu0
        %776 = vdwg.mxu0
        %v777 = vld [vmem:[#allocation5] sm:$0xff]
        %v778 = vpack.c.bf16 %v772, %v772
        %780 = vrot.lane.b32.xlu0 %v778, 96
        %v781 = vpop.permute.xlu0 %780
        %vm782 = vcmask 64512
        %v784 = vsel %vm782, %v778, 0
        %v787 = vsel %vm782, %v781, 0
        %789 = vmatprep.subr.bf16.mxu0 0
        %790 = vmatpush1.bf16.xpose.msra.mxu0 %v787
        %791 = vmatprep.subr.bf16.mxu0 0
        %792 = vmatpush1.bf16.xpose.msra.mxu0 0
        %793 = vmatprep.subr.bf16.mxu0 0
        %794 = vmatpush1.bf16.xpose.msra.mxu0 0
        %795 = vmatprep.subr.bf16.mxu0 0
        %796 = vmatpush1.bf16.xpose.msra.mxu0 0
        %797 = vmatprep.subr.bf16.mxu0 0
        %798 = vmatpush1.bf16.xpose.msra.mxu0 0
        %799 = vmatprep.subr.bf16.mxu0 0
        %800 = vmatpush1.bf16.xpose.msra.mxu0 0
        %801 = vmatprep.subr.bf16.mxu0 0
        %802 = vmatpush1.bf16.xpose.msra.mxu0 0
        %803 = vmatprep.subr.bf16.mxu0 0
        %804 = vmatpush1.bf16.xpose.msra.mxu0 0
        %805 = vmatprep.subr.bf16.mxu0 0
        %806 = vmatpush1.bf16.xpose.msra.mxu0 0
        %807 = vmatprep.subr.bf16.mxu0 0
        %808 = vmatpush1.bf16.xpose.msra.mxu0 0
        %809 = vmatprep.subr.bf16.mxu0 0
        %810 = vmatpush1.bf16.xpose.msra.mxu0 0
        %811 = vmatprep.subr.bf16.mxu0 0
        %812 = vmatpush1.bf16.xpose.msra.mxu0 0
        %813 = vmatprep.subr.bf16.mxu0 0
        %814 = vmatpush1.bf16.xpose.msra.mxu0 0
        %815 = vmatprep.subr.bf16.mxu0 0
        %816 = vmatpush1.bf16.xpose.msra.mxu0 0
        %817 = vmatprep.subr.bf16.mxu0 0
        %818 = vmatpush1.bf16.xpose.msra.mxu0 0
        %819 = vmatprep.subr.bf16.mxu0 0
        %820 = vmatpush1.bf16.xpose.msra.mxu0 0
        %821 = vmatprep.mubr.bf16.mxu0 0
        %822 = vmatmul.mubr.bf16.gmra.mrb[0].mxu0 %v784
        %v823 = vpop.f32.mrb[0].mxu0
        %v824 = vadd.f32 %v777, %v823
        %v825 = vpop.f32.mrb[0].mxu0
        %v826 = vpop.f32.mrb[0].mxu0
        %v827 = vpop.f32.mrb[0].mxu0
        %828 = vdwg.mxu0
        %v829 = vsel %vm782, %v824, -inf
        %830 = vmax.xlane.f32.xlu0 %v829
        %v831 = vpop.xlane.xlu0 %830
        %v832 = vsub.f32 %v824, %v831
        %v833 = vmul.f32 %v832, 1.442695
        %v834 = vpow.pop %v833
        %v835 = vsel %vm782, %v834, 0.0
        %836 = vadd.xlane.f32.xlu0 %v835
        %v837 = vpop.xlane.xlu0 %836
        %v838 = vrcp.pop %v837
        %v839 = vmul.f32 %v834, %v838
        %v840 = vpack.c.bf16 %v839, %v839
        %841 = vrot.lane.b32.xlu0 %v778, 64
        %v842 = vpop.permute.xlu0 %841
        %v844 = vsel %vm782, %v840, 0
        %vm846 = vcmask 1043456
        %v848 = vsel %vm846, %v842, 0
        %850 = vmatprep.subr.bf16.mxu0 0
        %851 = vmatpush1.bf16.msra.mxu0 %v848
        %852 = vmatprep.subr.bf16.mxu0 0
        %853 = vmatpush1.bf16.msra.mxu0 0
        %854 = vmatprep.subr.bf16.mxu0 0
        %855 = vmatpush1.bf16.msra.mxu0 0
        %856 = vmatprep.subr.bf16.mxu0 0
        %857 = vmatpush1.bf16.msra.mxu0 0
        %858 = vmatprep.subr.bf16.mxu0 0
        %859 = vmatpush1.bf16.msra.mxu0 0
        %860 = vmatprep.subr.bf16.mxu0 0
        %861 = vmatpush1.bf16.msra.mxu0 0
        %862 = vmatprep.subr.bf16.mxu0 0
        %863 = vmatpush1.bf16.msra.mxu0 0
        %864 = vmatprep.subr.bf16.mxu0 0
        %865 = vmatpush1.bf16.msra.mxu0 0
        %866 = vmatprep.subr.bf16.mxu0 0
        %867 = vmatpush1.bf16.msra.mxu0 0
        %868 = vmatprep.subr.bf16.mxu0 0
        %869 = vmatpush1.bf16.msra.mxu0 0
        %870 = vmatprep.subr.bf16.mxu0 0
        %871 = vmatpush1.bf16.msra.mxu0 0
        %872 = vmatprep.subr.bf16.mxu0 0
        %873 = vmatpush1.bf16.msra.mxu0 0
        %874 = vmatprep.subr.bf16.mxu0 0
        %875 = vmatpush1.bf16.msra.mxu0 0
        %876 = vmatprep.subr.bf16.mxu0 0
        %877 = vmatpush1.bf16.msra.mxu0 0
        %878 = vmatprep.subr.bf16.mxu0 0
        %879 = vmatpush1.bf16.msra.mxu0 0
        %880 = vmatprep.subr.bf16.mxu0 0
        %881 = vmatpush1.bf16.msra.mxu0 0
        %882 = vmatprep.mubr.bf16.mxu0 0
        %883 = vmatmul.mubr.bf16.gmra.mrb[0].mxu0 %v844
        %v884 = vpop.f32.mrb[0].mxu0
        %v885 = vadd.f32 0.0, %v884
        %v886 = vpop.f32.mrb[0].mxu0
        %v887 = vpop.f32.mrb[0].mxu0
        %v888 = vpop.f32.mrb[0].mxu0
        %889 = vdwg.mxu0
        %890 = vrot.lane.b32.xlu0 %v778, 120
        %v891 = vpop.permute.xlu0 %890
        %892 = vrot.lane.b32.xlu0 %v778, 88
        %v893 = vpop.permute.xlu0 %892
        %v895 = vsel %vm782, %v891, 0
        %v898 = vsel %vm782, %v893, 0
        %900 = vmatprep.subr.bf16.mxu0 0
        %901 = vmatpush1.bf16.xpose.msra.mxu0 %v898
        %902 = vmatprep.subr.bf16.mxu0 0
        %903 = vmatpush1.bf16.xpose.msra.mxu0 0
        %904 = vmatprep.subr.bf16.mxu0 0
        %905 = vmatpush1.bf16.xpose.msra.mxu0 0
        %906 = vmatprep.subr.bf16.mxu0 0
        %907 = vmatpush1.bf16.xpose.msra.mxu0 0
        %908 = vmatprep.subr.bf16.mxu0 0
        %909 = vmatpush1.bf16.xpose.msra.mxu0 0
        %910 = vmatprep.subr.bf16.mxu0 0
        %911 = vmatpush1.bf16.xpose.msra.mxu0 0
        %912 = vmatprep.subr.bf16.mxu0 0
        %913 = vmatpush1.bf16.xpose.msra.mxu0 0
        %914 = vmatprep.subr.bf16.mxu0 0
        %915 = vmatpush1.bf16.xpose.msra.mxu0 0
        %916 = vmatprep.subr.bf16.mxu0 0
        %917 = vmatpush1.bf16.xpose.msra.mxu0 0
        %918 = vmatprep.subr.bf16.mxu0 0
        %919 = vmatpush1.bf16.xpose.msra.mxu0 0
        %920 = vmatprep.subr.bf16.mxu0 0
        %921 = vmatpush1.bf16.xpose.msra.mxu0 0
        %922 = vmatprep.subr.bf16.mxu0 0
        %923 = vmatpush1.bf16.xpose.msra.mxu0 0
        %924 = vmatprep.subr.bf16.mxu0 0
        %925 = vmatpush1.bf16.xpose.msra.mxu0 0
        %926 = vmatprep.subr.bf16.mxu0 0
        %927 = vmatpush1.bf16.xpose.msra.mxu0 0
        %928 = vmatprep.subr.bf16.mxu0 0
        %929 = vmatpush1.bf16.xpose.msra.mxu0 0
        %930 = vmatprep.subr.bf16.mxu0 0
        %931 = vmatpush1.bf16.xpose.msra.mxu0 0
        %932 = vmatprep.mubr.bf16.mxu0 0
        %933 = vmatmul.mubr.bf16.gmra.mrb[0].mxu0 %v895
        %v934 = vpop.f32.mrb[0].mxu0
        %v935 = vadd.f32 %v777, %v934
        %v936 = vpop.f32.mrb[0].mxu0
        %v937 = vpop.f32.mrb[0].mxu0
        %v938 = vpop.f32.mrb[0].mxu0
        %939 = vdwg.mxu0
        %v940 = vsel %vm782, %v935, -inf
        %941 = vmax.xlane.f32.xlu0 %v940
        %v942 = vpop.xlane.xlu0 %941
        %v943 = vsub.f32 %v935, %v942
        %v944 = vmul.f32 %v943, 1.442695
        %v945 = vpow.pop %v944
        %v946 = vsel %vm782, %v945, 0.0
        %947 = vadd.xlane.f32.xlu0 %v946
        %v948 = vpop.xlane.xlu0 %947
        %v949 = vrcp.pop %v948
        %v950 = vmul.f32 %v945, %v949
        %v951 = vpack.c.bf16 %v950, %v950
        %952 = vrot.lane.b32.xlu0 %v778, 56
        %v953 = vpop.permute.xlu0 %952
        %v955 = vsel %vm782, %v951, 0
        %v958 = vsel %vm846, %v953, 0
        %960 = vmatprep.subr.bf16.mxu0 0
        %961 = vmatpush1.bf16.msra.mxu0 %v958
        %962 = vmatprep.subr.bf16.mxu0 0
        %963 = vmatpush1.bf16.msra.mxu0 0
        %964 = vmatprep.subr.bf16.mxu0 0
        %965 = vmatpush1.bf16.msra.mxu0 0
        %966 = vmatprep.subr.bf16.mxu0 0
        %967 = vmatpush1.bf16.msra.mxu0 0
        %968 = vmatprep.subr.bf16.mxu0 0
        %969 = vmatpush1.bf16.msra.mxu0 0
        %970 = vmatprep.subr.bf16.mxu0 0
        %971 = vmatpush1.bf16.msra.mxu0 0
        %972 = vmatprep.subr.bf16.mxu0 0
        %973 = vmatpush1.bf16.msra.mxu0 0
        %974 = vmatprep.subr.bf16.mxu0 0
        %975 = vmatpush1.bf16.msra.mxu0 0
        %976 = vmatprep.subr.bf16.mxu0 0
        %977 = vmatpush1.bf16.msra.mxu0 0
        %978 = vmatprep.subr.bf16.mxu0 0
        %979 = vmatpush1.bf16.msra.mxu0 0
        %980 = vmatprep.subr.bf16.mxu0 0
        %981 = vmatpush1.bf16.msra.mxu0 0
        %982 = vmatprep.subr.bf16.mxu0 0
        %983 = vmatpush1.bf16.msra.mxu0 0
        %984 = vmatprep.subr.bf16.mxu0 0
        %985 = vmatpush1.bf16.msra.mxu0 0
        %986 = vmatprep.subr.bf16.mxu0 0
        %987 = vmatpush1.bf16.msra.mxu0 0
        %988 = vmatprep.subr.bf16.mxu0 0
        %989 = vmatpush1.bf16.msra.mxu0 0
        %990 = vmatprep.subr.bf16.mxu0 0
        %991 = vmatpush1.bf16.msra.mxu0 0
        %992 = vmatprep.mubr.bf16.mxu0 0
        %993 = vmatmul.mubr.bf16.gmra.mrb[0].mxu0 %v955
        %v994 = vpop.f32.mrb[0].mxu0
        %v995 = vadd.f32 0.0, %v994
        %v996 = vpop.f32.mrb[0].mxu0
        %v997 = vpop.f32.mrb[0].mxu0
        %v998 = vpop.f32.mrb[0].mxu0
        %999 = vdwg.mxu0
        %1000 = vrot.lane.b32.xlu0 %v778, 112
        %v1001 = vpop.permute.xlu0 %1000
        %1002 = vrot.lane.b32.xlu0 %v778, 80
        %v1003 = vpop.permute.xlu0 %1002
        %v1005 = vsel %vm782, %v1001, 0
        %v1008 = vsel %vm782, %v1003, 0
        %1010 = vmatprep.subr.bf16.mxu0 0
        %1011 = vmatpush1.bf16.xpose.msra.mxu0 %v1008
        %1012 = vmatprep.subr.bf16.mxu0 0
        %1013 = vmatpush1.bf16.xpose.msra.mxu0 0
        %1014 = vmatprep.subr.bf16.mxu0 0
        %1015 = vmatpush1.bf16.xpose.msra.mxu0 0
        %1016 = vmatprep.subr.bf16.mxu0 0
        %1017 = vmatpush1.bf16.xpose.msra.mxu0 0
        %1018 = vmatprep.subr.bf16.mxu0 0
        %1019 = vmatpush1.bf16.xpose.msra.mxu0 0
        %1020 = vmatprep.subr.bf16.mxu0 0
        %1021 = vmatpush1.bf16.xpose.msra.mxu0 0
        %1022 = vmatprep.subr.bf16.mxu0 0
        %1023 = vmatpush1.bf16.xpose.msra.mxu0 0
        %1024 = vmatprep.subr.bf16.mxu0 0
        %1025 = vmatpush1.bf16.xpose.msra.mxu0 0
        %1026 = vmatprep.subr.bf16.mxu0 0
        %1027 = vmatpush1.bf16.xpose.msra.mxu0 0
        %1028 = vmatprep.subr.bf16.mxu0 0
        %1029 = vmatpush1.bf16.xpose.msra.mxu0 0
        %1030 = vmatprep.subr.bf16.mxu0 0
        %1031 = vmatpush1.bf16.xpose.msra.mxu0 0
        %1032 = vmatprep.subr.bf16.mxu0 0
        %1033 = vmatpush1.bf16.xpose.msra.mxu0 0
        %1034 = vmatprep.subr.bf16.mxu0 0
        %1035 = vmatpush1.bf16.xpose.msra.mxu0 0
        %1036 = vmatprep.subr.bf16.mxu0 0
        %1037 = vmatpush1.bf16.xpose.msra.mxu0 0
        %1038 = vmatprep.subr.bf16.mxu0 0
        %1039 = vmatpush1.bf16.xpose.msra.mxu0 0
        %1040 = vmatprep.subr.bf16.mxu0 0
        %1041 = vmatpush1.bf16.xpose.msra.mxu0 0
        %1042 = vmatprep.mubr.bf16.mxu0 0
        %1043 = vmatmul.mubr.bf16.gmra.mrb[0].mxu0 %v1005
        %v1044 = vpop.f32.mrb[0].mxu0
        %v1045 = vadd.f32 %v777, %v1044
        %v1046 = vpop.f32.mrb[0].mxu0
        %v1047 = vpop.f32.mrb[0].mxu0
        %v1048 = vpop.f32.mrb[0].mxu0
        %1049 = vdwg.mxu0
        %v1050 = vsel %vm782, %v1045, -inf
        %1051 = vmax.xlane.f32.xlu0 %v1050
        %v1052 = vpop.xlane.xlu0 %1051
        %v1053 = vsub.f32 %v1045, %v1052
        %v1054 = vmul.f32 %v1053, 1.442695
        %v1055 = vpow.pop %v1054
        %v1056 = vsel %vm782, %v1055, 0.0
        %1057 = vadd.xlane.f32.xlu0 %v1056
        %v1058 = vpop.xlane.xlu0 %1057
        %v1059 = vrcp.pop %v1058
        %v1060 = vmul.f32 %v1055, %v1059
        %v1061 = vpack.c.bf16 %v1060, %v1060
        %1062 = vrot.lane.b32.xlu0 %v778, 48
        %v1063 = vpop.permute.xlu0 %1062
        %v1065 = vsel %vm782, %v1061, 0
        %v1068 = vsel %vm846, %v1063, 0
        %1070 = vmatprep.subr.bf16.mxu0 0
        %1071 = vmatpush1.bf16.msra.mxu0 %v1068
        %1072 = vmatprep.subr.bf16.mxu0 0
        %1073 = vmatpush1.bf16.msra.mxu0 0
        %1074 = vmatprep.subr.bf16.mxu0 0
        %1075 = vmatpush1.bf16.msra.mxu0 0
        %1076 = vmatprep.subr.bf16.mxu0 0
        %1077 = vmatpush1.bf16.msra.mxu0 0
        %1078 = vmatprep.subr.bf16.mxu0 0
        %1079 = vmatpush1.bf16.msra.mxu0 0
        %1080 = vmatprep.subr.bf16.mxu0 0
        %1081 = vmatpush1.bf16.msra.mxu0 0
        %1082 = vmatprep.subr.bf16.mxu0 0
        %1083 = vmatpush1.bf16.msra.mxu0 0
        %1084 = vmatprep.subr.bf16.mxu0 0
        %1085 = vmatpush1.bf16.msra.mxu0 0
        %1086 = vmatprep.subr.bf16.mxu0 0
        %1087 = vmatpush1.bf16.msra.mxu0 0
        %1088 = vmatprep.subr.bf16.mxu0 0
        %1089 = vmatpush1.bf16.msra.mxu0 0
        %1090 = vmatprep.subr.bf16.mxu0 0
        %1091 = vmatpush1.bf16.msra.mxu0 0
        %1092 = vmatprep.subr.bf16.mxu0 0
        %1093 = vmatpush1.bf16.msra.mxu0 0
        %1094 = vmatprep.subr.bf16.mxu0 0
        %1095 = vmatpush1.bf16.msra.mxu0 0
        %1096 = vmatprep.subr.bf16.mxu0 0
        %1097 = vmatpush1.bf16.msra.mxu0 0
        %1098 = vmatprep.subr.bf16.mxu0 0
        %1099 = vmatpush1.bf16.msra.mxu0 0
        %1100 = vmatprep.subr.bf16.mxu0 0
        %1101 = vmatpush1.bf16.msra.mxu0 0
        %1102 = vmatprep.mubr.bf16.mxu0 0
        %1103 = vmatmul.mubr.bf16.gmra.mrb[0].mxu0 %v1065
        %v1104 = vpop.f32.mrb[0].mxu0
        %v1105 = vadd.f32 0.0, %v1104
        %v1106 = vpop.f32.mrb[0].mxu0
        %v1107 = vpop.f32.mrb[0].mxu0
        %v1108 = vpop.f32.mrb[0].mxu0
        %1109 = vdwg.mxu0
        %1110 = vrot.lane.b32.xlu0 %v778, 104
        %v1111 = vpop.permute.xlu0 %1110
        %1112 = vrot.lane.b32.xlu0 %v778, 72
        %v1113 = vpop.permute.xlu0 %1112
        %v1115 = vsel %vm782, %v1111, 0
        %v1118 = vsel %vm782, %v1113, 0
        %1120 = vmatprep.subr.bf16.mxu0 0
        %1121 = vmatpush1.bf16.xpose.msra.mxu0 %v1118
        %1122 = vmatprep.subr.bf16.mxu0 0
        %1123 = vmatpush1.bf16.xpose.msra.mxu0 0
        %1124 = vmatprep.subr.bf16.mxu0 0
        %1125 = vmatpush1.bf16.xpose.msra.mxu0 0
        %1126 = vmatprep.subr.bf16.mxu0 0
        %1127 = vmatpush1.bf16.xpose.msra.mxu0 0
        %1128 = vmatprep.subr.bf16.mxu0 0
        %1129 = vmatpush1.bf16.xpose.msra.mxu0 0
        %1130 = vmatprep.subr.bf16.mxu0 0
        %1131 = vmatpush1.bf16.xpose.msra.mxu0 0
        %1132 = vmatprep.subr.bf16.mxu0 0
        %1133 = vmatpush1.bf16.xpose.msra.mxu0 0
        %1134 = vmatprep.subr.bf16.mxu0 0
        %1135 = vmatpush1.bf16.xpose.msra.mxu0 0
        %1136 = vmatprep.subr.bf16.mxu0 0
        %1137 = vmatpush1.bf16.xpose.msra.mxu0 0
        %1138 = vmatprep.subr.bf16.mxu0 0
        %1139 = vmatpush1.bf16.xpose.msra.mxu0 0
        %1140 = vmatprep.subr.bf16.mxu0 0
        %1141 = vmatpush1.bf16.xpose.msra.mxu0 0
        %1142 = vmatprep.subr.bf16.mxu0 0
        %1143 = vmatpush1.bf16.xpose.msra.mxu0 0
        %1144 = vmatprep.subr.bf16.mxu0 0
        %1145 = vmatpush1.bf16.xpose.msra.mxu0 0
        %1146 = vmatprep.subr.bf16.mxu0 0
        %1147 = vmatpush1.bf16.xpose.msra.mxu0 0
        %1148 = vmatprep.subr.bf16.mxu0 0
        %1149 = vmatpush1.bf16.xpose.msra.mxu0 0
        %1150 = vmatprep.subr.bf16.mxu0 0
        %1151 = vmatpush1.bf16.xpose.msra.mxu0 0
        %1152 = vmatprep.mubr.bf16.mxu0 0
        %1153 = vmatmul.mubr.bf16.gmra.mrb[0].mxu0 %v1115
        %v1154 = vpop.f32.mrb[0].mxu0
        %v1155 = vadd.f32 %v777, %v1154
        %v1156 = vpop.f32.mrb[0].mxu0
        %v1157 = vpop.f32.mrb[0].mxu0
        %v1158 = vpop.f32.mrb[0].mxu0
        %1159 = vdwg.mxu0
        %v1160 = vsel %vm782, %v1155, -inf
        %1161 = vmax.xlane.f32.xlu0 %v1160
        %v1162 = vpop.xlane.xlu0 %1161
        %v1163 = vsub.f32 %v1155, %v1162
        %v1164 = vmul.f32 %v1163, 1.442695
        %v1165 = vpow.pop %v1164
        %v1166 = vsel %vm782, %v1165, 0.0
        %1167 = vadd.xlane.f32.xlu0 %v1166
        %v1168 = vpop.xlane.xlu0 %1167
        %v1169 = vrcp.pop %v1168
        %v1170 = vmul.f32 %v1165, %v1169
        %v1171 = vpack.c.bf16 %v1170, %v1170
        %1172 = vrot.lane.b32.xlu0 %v778, 40
        %v1173 = vpop.permute.xlu0 %1172
        %v1175 = vsel %vm782, %v1171, 0
        %v1178 = vsel %vm846, %v1173, 0
        %1180 = vmatprep.subr.bf16.mxu0 0
        %1181 = vmatpush1.bf16.msra.mxu0 %v1178
        %1182 = vmatprep.subr.bf16.mxu0 0
        %1183 = vmatpush1.bf16.msra.mxu0 0
        %1184 = vmatprep.subr.bf16.mxu0 0
        %1185 = vmatpush1.bf16.msra.mxu0 0
        %1186 = vmatprep.subr.bf16.mxu0 0
        %1187 = vmatpush1.bf16.msra.mxu0 0
        %1188 = vmatprep.subr.bf16.mxu0 0
        %1189 = vmatpush1.bf16.msra.mxu0 0
        %1190 = vmatprep.subr.bf16.mxu0 0
        %1191 = vmatpush1.bf16.msra.mxu0 0
        %1192 = vmatprep.subr.bf16.mxu0 0
        %1193 = vmatpush1.bf16.msra.mxu0 0
        %1194 = vmatprep.subr.bf16.mxu0 0
        %1195 = vmatpush1.bf16.msra.mxu0 0
        %1196 = vmatprep.subr.bf16.mxu0 0
        %1197 = vmatpush1.bf16.msra.mxu0 0
        %1198 = vmatprep.subr.bf16.mxu0 0
        %1199 = vmatpush1.bf16.msra.mxu0 0
        %1200 = vmatprep.subr.bf16.mxu0 0
        %1201 = vmatpush1.bf16.msra.mxu0 0
        %1202 = vmatprep.subr.bf16.mxu0 0
        %1203 = vmatpush1.bf16.msra.mxu0 0
        %1204 = vmatprep.subr.bf16.mxu0 0
        %1205 = vmatpush1.bf16.msra.mxu0 0
        %1206 = vmatprep.subr.bf16.mxu0 0
        %1207 = vmatpush1.bf16.msra.mxu0 0
        %1208 = vmatprep.subr.bf16.mxu0 0
        %1209 = vmatpush1.bf16.msra.mxu0 0
        %1210 = vmatprep.subr.bf16.mxu0 0
        %1211 = vmatpush1.bf16.msra.mxu0 0
        %1212 = vmatprep.mubr.bf16.mxu0 0
        %1213 = vmatmul.mubr.bf16.gmra.mrb[0].mxu0 %v1175
        %v1214 = vpop.f32.mrb[0].mxu0
        %v1215 = vadd.f32 0.0, %v1214
        %v1216 = vpop.f32.mrb[0].mxu0
        %v1217 = vpop.f32.mrb[0].mxu0
        %v1218 = vpop.f32.mrb[0].mxu0
        %1219 = vdwg.mxu0
        %1221 = vrot.lane.b32.xlu0 %v995, 8
        %v1222 = vpop.permute.xlu0 %1221
        %1225 = vrot.lane.b32.xlu0 %v1105, 16
        %v1226 = vpop.permute.xlu0 %1225
        %1229 = vrot.lane.b32.xlu0 %v1215, 24
        %v1230 = vpop.permute.xlu0 %1229
        %v1232 = vsel %vm782, %v885, %v1222
        %vm1233 = vcmask 130048
        %v1234 = vsel %vm1233, %v1232, %v1226
        %vm1235 = vcmask 195584
        %v1236 = vsel %vm1235, %v1234, %v1230
        %v1237 = vpack.c.bf16 %v1236, %v1236
        %v1238 = vld [vmem:[#allocation13] sm:$0xf]
        %v1239 = vld [vmem:[#allocation13 + $0x4] sm:$0xf]
        %v1240 = vld [vmem:[#allocation13 + $0x8] sm:$0xf]
        %v1241 = vld [vmem:[#allocation13 + $0xc] sm:$0xf]
        %v1242 = vld [vmem:[#allocation14] sm:$0x1]
        %v1244 = vlaneseq
        %v1245 = vshrl.u32 %v1244, 7
        %v1246 = vsub.s32 0, %v1245
        %v1247 = vrot.slane %v1242, %v1246
        %v1253 = vunpack.c.l.b16 %v1238
        %v1254 = vunpack.c.l.b16 %v1239
        %v1255 = vunpack.c.l.b16 %v1240
        %v1256 = vunpack.c.l.b16 %v1241
        %v1257 = vpack.c.b16 %v1254, %v1253
        %v1258 = vpack.c.b16 %v1256, %v1255
        %v1262 = vsel %vm681, %v1237, 0
        %1264 = vmatprep.subr.bf16.mxu0 0
        %1265 = vmatpush1.bf16.msra.mxu0 %v1257
        %1266 = vmatprep.subr.bf16.mxu0 0
        %1267 = vmatpush1.bf16.msra.mxu0 %v1258
        %1268 = vmatprep.subr.bf16.mxu0 0
        %1269 = vmatpush1.bf16.msra.mxu0 0
        %1270 = vmatprep.subr.bf16.mxu0 0
        %1271 = vmatpush1.bf16.msra.mxu0 0
        %1272 = vmatprep.subr.bf16.mxu0 0
        %1273 = vmatpush1.bf16.msra.mxu0 0
        %1274 = vmatprep.subr.bf16.mxu0 0
        %1275 = vmatpush1.bf16.msra.mxu0 0
        %1276 = vmatprep.subr.bf16.mxu0 0
        %1277 = vmatpush1.bf16.msra.mxu0 0
        %1278 = vmatprep.subr.bf16.mxu0 0
        %1279 = vmatpush1.bf16.msra.mxu0 0
        %1280 = vmatprep.subr.bf16.mxu0 0
        %1281 = vmatpush1.bf16.msra.mxu0 0
        %1282 = vmatprep.subr.bf16.mxu0 0
        %1283 = vmatpush1.bf16.msra.mxu0 0
        %1284 = vmatprep.subr.bf16.mxu0 0
        %1285 = vmatpush1.bf16.msra.mxu0 0
        %1286 = vmatprep.subr.bf16.mxu0 0
        %1287 = vmatpush1.bf16.msra.mxu0 0
        %1288 = vmatprep.subr.bf16.mxu0 0
        %1289 = vmatpush1.bf16.msra.mxu0 0
        %1290 = vmatprep.subr.bf16.mxu0 0
        %1291 = vmatpush1.bf16.msra.mxu0 0
        %1292 = vmatprep.subr.bf16.mxu0 0
        %1293 = vmatpush1.bf16.msra.mxu0 0
        %1294 = vmatprep.subr.bf16.mxu0 0
        %1295 = vmatpush1.bf16.msra.mxu0 0
        %1296 = vmatprep.mubr.bf16.mxu0 0
        %1297 = vmatmul.mubr.bf16.gmra.mrb[0].mxu0 %v1262
        %v1298 = vpop.f32.mrb[0].mxu0
        %v1299 = vadd.f32 %v1247, %v1298
        %v1300 = vpop.f32.mrb[0].mxu0
        %v1301 = vpop.f32.mrb[0].mxu0
        %v1302 = vpop.f32.mrb[0].mxu0
        %1303 = vdwg.mxu0
        %v1304 = vadd.f32 %v1299, %v680
        %v1305 = vld [vmem:[#allocation16] sm:$0x1]
        %v1306 = vld [vmem:[#allocation17] sm:$0x1]
        %v1307 = vsel %vm681, %v1304, 0.0
        %1308 = vadd.xlane.f32.xlu0 %v1307
        %v1309 = vpop.xlane.xlu0 %1308
        %v1310 = vmul.f32 %v1309, %v685
        %v1311 = vsub.f32 %v1304, %v1310
        %v1312 = vmul.f32 %v1311, %v1311
        %v1313 = vsel %vm681, %v1312, 0.0
        %1314 = vadd.xlane.f32.xlu0 %v1313
        %v1315 = vpop.xlane.xlu0 %1314
        %v1316 = vmul.f32 %v1315, %v685
        %v1317 = vadd.f32 %v1316, 1e-05
        %v1318 = vrsqrt.pop %v1317
        %v1319 = vmul.f32 %v1311, %v1318
        %v1321 = vlaneseq
        %v1322 = vshrl.u32 %v1321, 7
        %v1323 = vsub.s32 0, %v1322
        %v1324 = vrot.slane %v1305, %v1323
        %v1326 = vmul.f32 %v1319, %v1324
        %v1328 = vlaneseq
        %v1329 = vshrl.u32 %v1328, 7
        %v1330 = vsub.s32 0, %v1329
        %v1331 = vrot.slane %v1306, %v1330
        %v1333 = vadd.f32 %v1326, %v1331
        %v1334 = vpack.c.bf16 %v1333, %v1333
        %v1335 = vld [vmem:[#allocation19] sm:$0xf]
        %v1336 = vld [vmem:[#allocation19 + $0x4] sm:$0xf]
        %v1337 = vld [vmem:[#allocation19 + $0x8] sm:$0xf]
        %v1338 = vld [vmem:[#allocation19 + $0xc] sm:$0xf]
        %v1339 = vld [vmem:[#allocation20] sm:$0x1]
        %v1341 = vlaneseq
        %v1342 = vshrl.u32 %v1341, 7
        %v1343 = vsub.s32 0, %v1342
        %v1344 = vrot.slane %v1339, %v1343
        %v1350 = vunpack.c.l.b16 %v1335
        %v1351 = vunpack.c.l.b16 %v1336
        %v1352 = vunpack.c.l.b16 %v1337
        %v1353 = vunpack.c.l.b16 %v1338
        %v1354 = vpack.c.b16 %v1351, %v1350
        %v1355 = vpack.c.b16 %v1353, %v1352
        %v1359 = vsel %vm681, %v1334, 0
        %1361 = vmatprep.subr.bf16.mxu0 0
        %1362 = vmatpush1.bf16.msra.mxu0 %v1354
        %1363 = vmatprep.subr.bf16.mxu0 0
        %1364 = vmatpush1.bf16.msra.mxu0 %v1355
        %1365 = vmatprep.subr.bf16.mxu0 0
        %1366 = vmatpush1.bf16.msra.mxu0 0
        %1367 = vmatprep.subr.bf16.mxu0 0
        %1368 = vmatpush1.bf16.msra.mxu0 0
        %1369 = vmatprep.subr.bf16.mxu0 0
        %1370 = vmatpush1.bf16.msra.mxu0 0
        %1371 = vmatprep.subr.bf16.mxu0 0
        %1372 = vmatpush1.bf16.msra.mxu0 0
        %1373 = vmatprep.subr.bf16.mxu0 0
        %1374 = vmatpush1.bf16.msra.mxu0 0
        %1375 = vmatprep.subr.bf16.mxu0 0
        %1376 = vmatpush1.bf16.msra.mxu0 0
        %1377 = vmatprep.subr.bf16.mxu0 0
        %1378 = vmatpush1.bf16.msra.mxu0 0
        %1379 = vmatprep.subr.bf16.mxu0 0
        %1380 = vmatpush1.bf16.msra.mxu0 0
        %1381 = vmatprep.subr.bf16.mxu0 0
        %1382 = vmatpush1.bf16.msra.mxu0 0
        %1383 = vmatprep.subr.bf16.mxu0 0
        %1384 = vmatpush1.bf16.msra.mxu0 0
        %1385 = vmatprep.subr.bf16.mxu0 0
        %1386 = vmatpush1.bf16.msra.mxu0 0
        %1387 = vmatprep.subr.bf16.mxu0 0
        %1388 = vmatpush1.bf16.msra.mxu0 0
        %1389 = vmatprep.subr.bf16.mxu0 0
        %1390 = vmatpush1.bf16.msra.mxu0 0
        %1391 = vmatprep.subr.bf16.mxu0 0
        %1392 = vmatpush1.bf16.msra.mxu0 0
        %1393 = vmatprep.mubr.bf16.mxu0 0
        %1394 = vmatmul.mubr.bf16.gmra.mrb[0].mxu0 %v1359
        %v1395 = vpop.f32.mrb[0].mxu0
        %v1396 = vadd.f32 %v1344, %v1395
        %v1397 = vpop.f32.mrb[0].mxu0
        %v1398 = vpop.f32.mrb[0].mxu0
        %v1399 = vpop.f32.mrb[0].mxu0
        %1400 = vdwg.mxu0
        %v1401 = vpack.c.bf16 %v1396, %v1396
        %v1402 = vmul.bf16 %v1401, 1071267802
        %v1403 = vxor.u32 %v1402, 2147516416
        %v1405 = vmul.bf16 %v1403, 1069105081
        %v1406 = vpow.bf16.pop %v1405
        %v1407 = vadd.bf16 %v1406, 1065369472
        %v1408 = vrcp.bf16.pop %v1407
        %v1409 = vmul.bf16 1065369472, %v1408
        %v1410 = vmul.bf16 %v1401, %v1409
        %v1411 = vld [vmem:[#allocation22] sm:$0xf]
        %v1412 = vld [vmem:[#allocation22 + $0x4] sm:$0xf]
        %v1413 = vld [vmem:[#allocation22 + $0x8] sm:$0xf]
        %v1414 = vld [vmem:[#allocation22 + $0xc] sm:$0xf]
        %v1415 = vld [vmem:[#allocation22 + $0x10] sm:$0xf]
        %v1416 = vld [vmem:[#allocation22 + $0x14] sm:$0xf]
        %v1417 = vld [vmem:[#allocation22 + $0x18] sm:$0xf]
        %v1418 = vld [vmem:[#allocation22 + $0x1c] sm:$0xf]
        %v1419 = vld [vmem:[#allocation22 + $0x20] sm:$0xf]
        %v1420 = vld [vmem:[#allocation22 + $0x24] sm:$0xf]
        %v1421 = vld [vmem:[#allocation22 + $0x28] sm:$0xf]
        %v1422 = vld [vmem:[#allocation22 + $0x2c] sm:$0xf]
        %v1423 = vld [vmem:[#allocation22 + $0x30] sm:$0xf]
        %v1424 = vld [vmem:[#allocation22 + $0x34] sm:$0xf]
        %v1425 = vld [vmem:[#allocation22 + $0x38] sm:$0xf]
        %v1426 = vld [vmem:[#allocation22 + $0x3c] sm:$0xf]
        %v1427 = vld [vmem:[#allocation23] sm:$0x1]
        %v1429 = vlaneseq
        %v1430 = vshrl.u32 %v1429, 7
        %v1431 = vsub.s32 0, %v1430
        %v1432 = vrot.slane %v1427, %v1431
        %v1450 = vunpack.c.l.b16 %v1411
        %v1451 = vunpack.c.l.b16 %v1412
        %v1452 = vunpack.c.l.b16 %v1413
        %v1453 = vunpack.c.l.b16 %v1414
        %v1454 = vunpack.c.l.b16 %v1415
        %v1455 = vunpack.c.l.b16 %v1416
        %v1456 = vunpack.c.l.b16 %v1417
        %v1457 = vunpack.c.l.b16 %v1418
        %v1458 = vunpack.c.l.b16 %v1419
        %v1459 = vunpack.c.l.b16 %v1420
        %v1460 = vunpack.c.l.b16 %v1421
        %v1461 = vunpack.c.l.b16 %v1422
        %v1462 = vunpack.c.l.b16 %v1423
        %v1463 = vunpack.c.l.b16 %v1424
        %v1464 = vunpack.c.l.b16 %v1425
        %v1465 = vunpack.c.l.b16 %v1426
        %v1466 = vpack.c.b16 %v1451, %v1450
        %v1467 = vpack.c.b16 %v1453, %v1452
        %v1468 = vpack.c.b16 %v1455, %v1454
        %v1469 = vpack.c.b16 %v1457, %v1456
        %v1470 = vpack.c.b16 %v1459, %v1458
        %v1471 = vpack.c.b16 %v1461, %v1460
        %v1472 = vpack.c.b16 %v1463, %v1462
        %v1473 = vpack.c.b16 %v1465, %v1464
        %1482 = vmatprep.subr.bf16.mxu0 0
        %1483 = vmatpush1.bf16.msra.mxu0 %v1466
        %1484 = vmatprep.subr.bf16.mxu0 0
        %1485 = vmatpush1.bf16.msra.mxu0 %v1467
        %1486 = vmatprep.subr.bf16.mxu0 0
        %1487 = vmatpush1.bf16.msra.mxu0 %v1468
        %1488 = vmatprep.subr.bf16.mxu0 0
        %1489 = vmatpush1.bf16.msra.mxu0 %v1469
        %1490 = vmatprep.subr.bf16.mxu0 0
        %1491 = vmatpush1.bf16.msra.mxu0 %v1470
        %1492 = vmatprep.subr.bf16.mxu0 0
        %1493 = vmatpush1.bf16.msra.mxu0 %v1471
        %1494 = vmatprep.subr.bf16.mxu0 0
        %1495 = vmatpush1.bf16.msra.mxu0 %v1472
        %1496 = vmatprep.subr.bf16.mxu0 0
        %1497 = vmatpush1.bf16.msra.mxu0 %v1473
        %1498 = vmatprep.subr.bf16.mxu0 0
        %1499 = vmatpush1.bf16.msra.mxu0 0
        %1500 = vmatprep.subr.bf16.mxu0 0
        %1501 = vmatpush1.bf16.msra.mxu0 0
        %1502 = vmatprep.subr.bf16.mxu0 0
        %1503 = vmatpush1.bf16.msra.mxu0 0
        %1504 = vmatprep.subr.bf16.mxu0 0
        %1505 = vmatpush1.bf16.msra.mxu0 0
        %1506 = vmatprep.subr.bf16.mxu0 0
        %1507 = vmatpush1.bf16.msra.mxu0 0
        %1508 = vmatprep.subr.bf16.mxu0 0
        %1509 = vmatpush1.bf16.msra.mxu0 0
        %1510 = vmatprep.subr.bf16.mxu0 0
        %1511 = vmatpush1.bf16.msra.mxu0 0
        %1512 = vmatprep.subr.bf16.mxu0 0
        %1513 = vmatpush1.bf16.msra.mxu0 0
        %1514 = vmatprep.mubr.bf16.mxu0 0
        %1515 = vmatmul.mubr.bf16.gmra.mrb[0].mxu0 %v1410
        %v1516 = vpop.f32.mrb[0].mxu0
        %v1517 = vadd.f32 %v1432, %v1516
        %v1518 = vpop.f32.mrb[0].mxu0
        %v1519 = vpop.f32.mrb[0].mxu0
        %v1520 = vpop.f32.mrb[0].mxu0
        %1521 = vdwg.mxu0
        %v1522 = vadd.f32 %v1517, %v1304
        %1523 = vst.msk [vmem:[%s674] sm:$0xff] %vm681, %v1522
        %s1524 = sand.u32 %s364, 1
        %s1525 = scalar_lea.sflag [#allocation4], %s1524
        %s1526 = sand.u32 %s364, 1
        %s1527 = smul.addr %s1526, 8
        %s1528 = scalar_lea.vmem [#allocation25], %s1527
        // Predicated region
        $region133: #{tpu_custom_call.1} parent=75 // pred_check
          %p1529 = pneg %p374
        $region134: #{tpu_custom_call.1} parent=75 // pred_check_branch
          %1531 = sbr.rel (%p1529) target = $region136
        $region135: #{tpu_custom_call.1} parent=75 // pred_region
          %s1533 = ssub.s32 128, 128
          %1534 = vsyncadd %s1525, %s1533
          %s1535 = sadd.s32 %s43, %s42
          %s1536 = smul.addr %s1535, 128
          %s1537 = scalar_lea.hbm %s14, %s1536
          %s1539 = sshll.u32 %s1528, 4
          %s1540 = int_to_ptr.vmem [resolvable:$true] %s1539
          %1542 = dma.vmem_to_hbm [thread:$0]  %s1540, 128, %s1537, %s1525
        $region136: #{tpu_custom_call.1} parent=75 // pred_fallthru
          _
      $region76: #{tpu_custom_call.1} parent=5 // pred_fallthru
        _
      %p1543 = scmp.le.s32.totalorder 2, %s33
      // Predicated region
      $region137: #{tpu_custom_call.1} parent=5 // pred_check
        %p1544 = pneg %p1543
      $region138: #{tpu_custom_call.1} parent=5 // pred_check_branch
        %1546 = sbr.rel (%p1544) target = $region140
      $region139: #{tpu_custom_call.1} parent=5 // pred_region
        %s1547 = ssub.s32 %s33, 2
        // Predicated region
        $region141: #{tpu_custom_call.1} parent=139 // pred_check
          %p1548 = pneg %p380
        $region142: #{tpu_custom_call.1} parent=139 // pred_check_branch
          %1550 = sbr.rel (%p1548) target = $region144
        $region143: #{tpu_custom_call.1} parent=139 // pred_region
          %s1551 = sand.u32 %s365, 1
          %s1552 = scalar_lea.sflag [#allocation4], %s1551
          %s1553 = sand.u32 %s365, 1
          %s1554 = smul.addr %s1553, 8
          %s1555 = scalar_lea.vmem [#allocation25], %s1554
          %1556 = dma.done %s1552, 128
        $region144: #{tpu_custom_call.1} parent=139 // pred_fallthru
          _
      $region140: #{tpu_custom_call.1} parent=5 // pred_fallthru
        _
    $region6: #{tpu_custom_call.1} parent=1 // loop_footer
      %s37 = sadd.s32 1, %s33
    $region7: #{tpu_custom_call.1} parent=1 // loop_footer_branch
      %32 = sbr.rel target = $region3
    $region8: #{tpu_custom_call.1} parent=1 // loop_exit
      _
    %1557 = vsyncpa [#allocation3], 1
    %s1558 = scalar_lea.sflag [#allocation3], 1
    %1559 = vsyncpa %s1558, 1
    %1560 = vsyncpa [#allocation6], 1
    %1561 = vsyncpa [#allocation9], 1
    %1562 = vsyncpa [#allocation12], 1
    %1563 = vsyncpa [#allocation15], 1
    %1564 = vsyncpa [#allocation18], 1
    %1565 = vsyncpa [#allocation21], 1
    %1566 = vsyncpa [#allocation24], 1
    %1567 = vsyncpa [#allocation4], 1
    %s1568 = scalar_lea.sflag [#allocation4], 1
    %1569 = vsyncpa %s1568, 1

</llo_original>
